<compile_context>
chip_gen: v6e
topology: v6e:2x2x1
jax: 0.10.0
libtpu: 0.0.40
codegen_flags: <defaults>
</compile_context>

<pallas_src>
import jax
import jax.numpy as jnp
from jax.experimental import pallas as pl
from jax.experimental.pallas import tpu as pltpu


_EPS = 1e-5
_N_BLOCKS = 4  # Linear -> BN -> ReLU blocks before the final Linear -> Sigmoid.


def _generator_kernel(*refs):
    """Fully fused generator forward.

    refs = (x,
            w1, gamma1, beta1, ..., w4, gamma4, beta4,   # 4 hidden blocks
            w5, b5,                                      # output layer
            out)
    """
    x_ref = refs[0]
    o_ref = refs[-1]
    param_refs = refs[1:-1]

    x = x_ref[...]  # (B, z_dim) f32

    # Four Linear -> BatchNorm1d -> ReLU blocks (unrolled at trace time).
    for i in range(_N_BLOCKS):
        w_ref = param_refs[3 * i]
        gamma_ref = param_refs[3 * i + 1]
        beta_ref = param_refs[3 * i + 2]
        # bf16 x bf16 matmul on the MXU, f32 accumulation.
        y = jnp.dot(x.astype(jnp.bfloat16), w_ref[...],
                    preferred_element_type=jnp.float32)
        # (Linear bias omitted: it cancels exactly in training-mode BN.)
        mean = jnp.mean(y, axis=0, keepdims=True)
        var = jnp.mean(jnp.square(y - mean), axis=0, keepdims=True)
        y = (y - mean) * jax.lax.rsqrt(var + _EPS)
        y = y * gamma_ref[...] + beta_ref[...]
        x = jnp.maximum(y, 0.0)

    # Final Linear (with bias) -> Sigmoid.
    w_ref = param_refs[3 * _N_BLOCKS]
    b_ref = param_refs[3 * _N_BLOCKS + 1]
    y = jnp.dot(x.astype(jnp.bfloat16), w_ref[...],
                preferred_element_type=jnp.float32) + b_ref[...]
    # sigmoid(y) = 1 / (1 + exp(-y)); exp and the approximate reciprocal both
    # run on the EUP, keeping the VALU free.
    o_ref[...] = pl.reciprocal(1.0 + jnp.exp(-y), approx=True).astype(o_ref.dtype)


def _vmem_spec():
    return pl.BlockSpec(memory_space=pltpu.MemorySpace.VMEM)


def generator_forward_pallas(noise, params):
    batch = noise.shape[0]
    im_dim = params[-1]["w"].shape[1]
    args = [noise]
    for layer in params[:-1]:
        args += [layer["w"], layer["gamma"], layer["beta"]]
    args += [params[-1]["w"], params[-1]["b"]]
    return pl.pallas_call(
        _generator_kernel,
        out_shape=jax.ShapeDtypeStruct((batch, im_dim), jnp.float32),
        in_specs=[_vmem_spec()] * len(args),
        out_specs=_vmem_spec(),
    )(*args)


generator_forward = jax.jit(generator_forward_pallas)


def init_generator_params(key, z_dim=10, im_dim=784, hidden_dim=128):
    """PyTorch-style init (U(-1/sqrt(fan_in), +1/sqrt(fan_in))), bf16 weights."""
    dims = [z_dim, hidden_dim, hidden_dim * 2, hidden_dim * 4, hidden_dim * 8, im_dim]
    params = []
    for i in range(len(dims) - 1):
        d_in, d_out = dims[i], dims[i + 1]
        key, kw, kb = jax.random.split(key, 3)
        bound = 1.0 / float(d_in) ** 0.5
        w = jax.random.uniform(kw, (d_in, d_out), jnp.float32, -bound, bound)
        layer = {"w": w.astype(jnp.bfloat16)}
        if i < len(dims) - 2:
            # Hidden block: BN affine params. The Linear bias is not created:
            # it cancels exactly under training-mode BatchNorm, so the forward
            # output is identical to the PyTorch module's.
            layer["gamma"] = jnp.ones((1, d_out), jnp.float32)
            layer["beta"] = jnp.zeros((1, d_out), jnp.float32)
        else:
            layer["b"] = jax.random.uniform(kb, (1, d_out), jnp.float32, -bound, bound)
        params.append(layer)
    return params


def _reference_forward(noise, params):
    """Pure-JAX reference (same bf16-weight / f32-accumulate math)."""
    x = noise
    for layer in params[:-1]:
        y = jnp.dot(x.astype(jnp.bfloat16), layer["w"],
                    preferred_element_type=jnp.float32)
        mean = jnp.mean(y, axis=0, keepdims=True)
        var = jnp.mean(jnp.square(y - mean), axis=0, keepdims=True)
        y = (y - mean) * jax.lax.rsqrt(var + _EPS) * layer["gamma"] + layer["beta"]
        x = jnp.maximum(y, 0.0)
    last = params[-1]
    y = jnp.dot(x.astype(jnp.bfloat16), last["w"],
                preferred_element_type=jnp.float32) + last["b"]
    return jax.nn.sigmoid(y)


if __name__ == "__main__":
    key = jax.random.PRNGKey(0)
    k_params, k_noise = jax.random.split(key)

    Z_DIM, IM_DIM, HIDDEN = 10, 784, 128
    BATCH = 8

    params = init_generator_params(k_params, z_dim=Z_DIM, im_dim=IM_DIM,
                                   hidden_dim=HIDDEN)
    noise = jax.random.normal(k_noise, (BATCH, Z_DIM), jnp.float32)

    out = jax.block_until_ready(generator_forward(noise, params))
    ref = _reference_forward(noise, params)

    assert out.shape == (BATCH, IM_DIM), out.shape
    assert bool(jnp.all(jnp.isfinite(out)))
    # Tolerance covers the approximate (EUP) reciprocal in the fused sigmoid.
    max_err = float(jnp.max(jnp.abs(out - ref)))
    assert max_err < 5e-3, max_err

    print("KERNEL_OK")
</pallas_src>

<mosaic_0001>
module attributes {stable_mosaic.version = 11 : i64} {
  func.func @_generator_kernel(%arg0: memref<8x10xf32, #tpu.memory_space<vmem>>, %arg1: memref<10x128xbf16, #tpu.memory_space<vmem>>, %arg2: memref<1x128xf32, #tpu.memory_space<vmem>>, %arg3: memref<1x128xf32, #tpu.memory_space<vmem>>, %arg4: memref<128x256xbf16, #tpu.memory_space<vmem>>, %arg5: memref<1x256xf32, #tpu.memory_space<vmem>>, %arg6: memref<1x256xf32, #tpu.memory_space<vmem>>, %arg7: memref<256x512xbf16, #tpu.memory_space<vmem>>, %arg8: memref<1x512xf32, #tpu.memory_space<vmem>>, %arg9: memref<1x512xf32, #tpu.memory_space<vmem>>, %arg10: memref<512x1024xbf16, #tpu.memory_space<vmem>>, %arg11: memref<1x1024xf32, #tpu.memory_space<vmem>>, %arg12: memref<1x1024xf32, #tpu.memory_space<vmem>>, %arg13: memref<1024x784xbf16, #tpu.memory_space<vmem>>, %arg14: memref<1x784xf32, #tpu.memory_space<vmem>>, %arg15: memref<8x784xf32, #tpu.memory_space<vmem>>) attributes {dimension_semantics = [], scalar_prefetch = 0 : i64, scratch_operands = 0 : i64, tpu.core_type = #tpu.core_type<tc>} {
    %c0 = arith.constant 0 : index
    %c0_0 = arith.constant 0 : index
    %0 = vector.load %arg0[%c0, %c0_0] : memref<8x10xf32, #tpu.memory_space<vmem>>, vector<8x10xf32>
    %1 = arith.truncf %0 : vector<8x10xf32> to vector<8x10xbf16>
    %c0_1 = arith.constant 0 : index
    %c0_2 = arith.constant 0 : index
    %2 = vector.load %arg1[%c0_1, %c0_2] : memref<10x128xbf16, #tpu.memory_space<vmem>>, vector<10x128xbf16>
    %cst = arith.constant dense<0.000000e+00> : vector<8x128xf32>
    %3 = tpu.matmul %1, %2, %cst {dimension_numbers = #tpu.dot_dimension_numbers<[1], [0], [0], [1], [0, 0, 1, 1], [], []>} : vector<8x10xbf16>, vector<10x128xbf16>, vector<8x128xf32> -> vector<8x128xf32>
    %cst_3 = arith.constant dense<0.000000e+00> : vector<128xf32>
    %4 = vector.multi_reduction <add>, %3, %cst_3 [0] : vector<8x128xf32> to vector<128xf32>
    %5 = vector.shape_cast %4 : vector<128xf32> to vector<1x128xf32>
    %cst_4 = arith.constant 8.000000e+00 : f32
    %6 = vector.broadcast %cst_4 : f32 to vector<1x128xf32>
    %7 = arith.divf %5, %6 : vector<1x128xf32>
    %8 = vector.broadcast %7 : vector<1x128xf32> to vector<8x128xf32>
    %9 = arith.subf %3, %8 : vector<8x128xf32>
    %10 = arith.mulf %9, %9 : vector<8x128xf32>
    %cst_5 = arith.constant dense<0.000000e+00> : vector<128xf32>
    %11 = vector.multi_reduction <add>, %10, %cst_5 [0] : vector<8x128xf32> to vector<128xf32>
    %12 = vector.shape_cast %11 : vector<128xf32> to vector<1x128xf32>
    %cst_6 = arith.constant 8.000000e+00 : f32
    %13 = vector.broadcast %cst_6 : f32 to vector<1x128xf32>
    %14 = arith.divf %12, %13 : vector<1x128xf32>
    %15 = vector.broadcast %7 : vector<1x128xf32> to vector<8x128xf32>
    %16 = arith.subf %3, %15 : vector<8x128xf32>
    %cst_7 = arith.constant 9.99999974E-6 : f32
    %17 = vector.broadcast %cst_7 : f32 to vector<1x128xf32>
    %18 = arith.addf %14, %17 : vector<1x128xf32>
    %19 = math.rsqrt %18 : vector<1x128xf32>
    %20 = vector.broadcast %19 : vector<1x128xf32> to vector<8x128xf32>
    %21 = arith.mulf %16, %20 : vector<8x128xf32>
    %c0_8 = arith.constant 0 : index
    %c0_9 = arith.constant 0 : index
    %22 = vector.load %arg2[%c0_8, %c0_9] : memref<1x128xf32, #tpu.memory_space<vmem>>, vector<1x128xf32>
    %23 = vector.broadcast %22 : vector<1x128xf32> to vector<8x128xf32>
    %24 = arith.mulf %21, %23 : vector<8x128xf32>
    %c0_10 = arith.constant 0 : index
    %c0_11 = arith.constant 0 : index
    %25 = vector.load %arg3[%c0_10, %c0_11] : memref<1x128xf32, #tpu.memory_space<vmem>>, vector<1x128xf32>
    %26 = vector.broadcast %25 : vector<1x128xf32> to vector<8x128xf32>
    %27 = arith.addf %24, %26 : vector<8x128xf32>
    %cst_12 = arith.constant 0.000000e+00 : f32
    %28 = vector.broadcast %cst_12 : f32 to vector<8x128xf32>
    %29 = arith.maximumf %27, %28 : vector<8x128xf32>
    %30 = arith.truncf %29 : vector<8x128xf32> to vector<8x128xbf16>
    %c0_13 = arith.constant 0 : index
    %c0_14 = arith.constant 0 : index
    %31 = vector.load %arg4[%c0_13, %c0_14] : memref<128x256xbf16, #tpu.memory_space<vmem>>, vector<128x256xbf16>
    %cst_15 = arith.constant dense<0.000000e+00> : vector<8x256xf32>
    %32 = tpu.matmul %30, %31, %cst_15 {dimension_numbers = #tpu.dot_dimension_numbers<[1], [0], [0], [1], [0, 0, 1, 1], [], []>} : vector<8x128xbf16>, vector<128x256xbf16>, vector<8x256xf32> -> vector<8x256xf32>
    %cst_16 = arith.constant dense<0.000000e+00> : vector<256xf32>
    %33 = vector.multi_reduction <add>, %32, %cst_16 [0] : vector<8x256xf32> to vector<256xf32>
    %34 = vector.shape_cast %33 : vector<256xf32> to vector<1x256xf32>
    %cst_17 = arith.constant 8.000000e+00 : f32
    %35 = vector.broadcast %cst_17 : f32 to vector<1x256xf32>
    %36 = arith.divf %34, %35 : vector<1x256xf32>
    %37 = vector.broadcast %36 : vector<1x256xf32> to vector<8x256xf32>
    %38 = arith.subf %32, %37 : vector<8x256xf32>
    %39 = arith.mulf %38, %38 : vector<8x256xf32>
    %cst_18 = arith.constant dense<0.000000e+00> : vector<256xf32>
    %40 = vector.multi_reduction <add>, %39, %cst_18 [0] : vector<8x256xf32> to vector<256xf32>
    %41 = vector.shape_cast %40 : vector<256xf32> to vector<1x256xf32>
    %cst_19 = arith.constant 8.000000e+00 : f32
    %42 = vector.broadcast %cst_19 : f32 to vector<1x256xf32>
    %43 = arith.divf %41, %42 : vector<1x256xf32>
    %44 = vector.broadcast %36 : vector<1x256xf32> to vector<8x256xf32>
    %45 = arith.subf %32, %44 : vector<8x256xf32>
    %cst_20 = arith.constant 9.99999974E-6 : f32
    %46 = vector.broadcast %cst_20 : f32 to vector<1x256xf32>
    %47 = arith.addf %43, %46 : vector<1x256xf32>
    %48 = math.rsqrt %47 : vector<1x256xf32>
    %49 = vector.broadcast %48 : vector<1x256xf32> to vector<8x256xf32>
    %50 = arith.mulf %45, %49 : vector<8x256xf32>
    %c0_21 = arith.constant 0 : index
    %c0_22 = arith.constant 0 : index
    %51 = vector.load %arg5[%c0_21, %c0_22] : memref<1x256xf32, #tpu.memory_space<vmem>>, vector<1x256xf32>
    %52 = vector.broadcast %51 : vector<1x256xf32> to vector<8x256xf32>
    %53 = arith.mulf %50, %52 : vector<8x256xf32>
    %c0_23 = arith.constant 0 : index
    %c0_24 = arith.constant 0 : index
    %54 = vector.load %arg6[%c0_23, %c0_24] : memref<1x256xf32, #tpu.memory_space<vmem>>, vector<1x256xf32>
    %55 = vector.broadcast %54 : vector<1x256xf32> to vector<8x256xf32>
    %56 = arith.addf %53, %55 : vector<8x256xf32>
    %cst_25 = arith.constant 0.000000e+00 : f32
    %57 = vector.broadcast %cst_25 : f32 to vector<8x256xf32>
    %58 = arith.maximumf %56, %57 : vector<8x256xf32>
    %59 = arith.truncf %58 : vector<8x256xf32> to vector<8x256xbf16>
    %c0_26 = arith.constant 0 : index
    %c0_27 = arith.constant 0 : index
    %60 = vector.load %arg7[%c0_26, %c0_27] : memref<256x512xbf16, #tpu.memory_space<vmem>>, vector<256x512xbf16>
    %cst_28 = arith.constant dense<0.000000e+00> : vector<8x512xf32>
    %61 = tpu.matmul %59, %60, %cst_28 {dimension_numbers = #tpu.dot_dimension_numbers<[1], [0], [0], [1], [0, 0, 1, 1], [], []>} : vector<8x256xbf16>, vector<256x512xbf16>, vector<8x512xf32> -> vector<8x512xf32>
    %cst_29 = arith.constant dense<0.000000e+00> : vector<512xf32>
    %62 = vector.multi_reduction <add>, %61, %cst_29 [0] : vector<8x512xf32> to vector<512xf32>
    %63 = vector.shape_cast %62 : vector<512xf32> to vector<1x512xf32>
    %cst_30 = arith.constant 8.000000e+00 : f32
    %64 = vector.broadcast %cst_30 : f32 to vector<1x512xf32>
    %65 = arith.divf %63, %64 : vector<1x512xf32>
    %66 = vector.broadcast %65 : vector<1x512xf32> to vector<8x512xf32>
    %67 = arith.subf %61, %66 : vector<8x512xf32>
    %68 = arith.mulf %67, %67 : vector<8x512xf32>
    %cst_31 = arith.constant dense<0.000000e+00> : vector<512xf32>
    %69 = vector.multi_reduction <add>, %68, %cst_31 [0] : vector<8x512xf32> to vector<512xf32>
    %70 = vector.shape_cast %69 : vector<512xf32> to vector<1x512xf32>
    %cst_32 = arith.constant 8.000000e+00 : f32
    %71 = vector.broadcast %cst_32 : f32 to vector<1x512xf32>
    %72 = arith.divf %70, %71 : vector<1x512xf32>
    %73 = vector.broadcast %65 : vector<1x512xf32> to vector<8x512xf32>
    %74 = arith.subf %61, %73 : vector<8x512xf32>
    %cst_33 = arith.constant 9.99999974E-6 : f32
    %75 = vector.broadcast %cst_33 : f32 to vector<1x512xf32>
    %76 = arith.addf %72, %75 : vector<1x512xf32>
    %77 = math.rsqrt %76 : vector<1x512xf32>
    %78 = vector.broadcast %77 : vector<1x512xf32> to vector<8x512xf32>
    %79 = arith.mulf %74, %78 : vector<8x512xf32>
    %c0_34 = arith.constant 0 : index
    %c0_35 = arith.constant 0 : index
    %80 = vector.load %arg8[%c0_34, %c0_35] : memref<1x512xf32, #tpu.memory_space<vmem>>, vector<1x512xf32>
    %81 = vector.broadcast %80 : vector<1x512xf32> to vector<8x512xf32>
    %82 = arith.mulf %79, %81 : vector<8x512xf32>
    %c0_36 = arith.constant 0 : index
    %c0_37 = arith.constant 0 : index
    %83 = vector.load %arg9[%c0_36, %c0_37] : memref<1x512xf32, #tpu.memory_space<vmem>>, vector<1x512xf32>
    %84 = vector.broadcast %83 : vector<1x512xf32> to vector<8x512xf32>
    %85 = arith.addf %82, %84 : vector<8x512xf32>
    %cst_38 = arith.constant 0.000000e+00 : f32
    %86 = vector.broadcast %cst_38 : f32 to vector<8x512xf32>
    %87 = arith.maximumf %85, %86 : vector<8x512xf32>
    %88 = arith.truncf %87 : vector<8x512xf32> to vector<8x512xbf16>
    %c0_39 = arith.constant 0 : index
    %c0_40 = arith.constant 0 : index
    %89 = vector.load %arg10[%c0_39, %c0_40] : memref<512x1024xbf16, #tpu.memory_space<vmem>>, vector<512x1024xbf16>
    %cst_41 = arith.constant dense<0.000000e+00> : vector<8x1024xf32>
    %90 = tpu.matmul %88, %89, %cst_41 {dimension_numbers = #tpu.dot_dimension_numbers<[1], [0], [0], [1], [0, 0, 1, 1], [], []>} : vector<8x512xbf16>, vector<512x1024xbf16>, vector<8x1024xf32> -> vector<8x1024xf32>
    %cst_42 = arith.constant dense<0.000000e+00> : vector<1024xf32>
    %91 = vector.multi_reduction <add>, %90, %cst_42 [0] : vector<8x1024xf32> to vector<1024xf32>
    %92 = vector.shape_cast %91 : vector<1024xf32> to vector<1x1024xf32>
    %cst_43 = arith.constant 8.000000e+00 : f32
    %93 = vector.broadcast %cst_43 : f32 to vector<1x1024xf32>
    %94 = arith.divf %92, %93 : vector<1x1024xf32>
    %95 = vector.broadcast %94 : vector<1x1024xf32> to vector<8x1024xf32>
    %96 = arith.subf %90, %95 : vector<8x1024xf32>
    %97 = arith.mulf %96, %96 : vector<8x1024xf32>
    %cst_44 = arith.constant dense<0.000000e+00> : vector<1024xf32>
    %98 = vector.multi_reduction <add>, %97, %cst_44 [0] : vector<8x1024xf32> to vector<1024xf32>
    %99 = vector.shape_cast %98 : vector<1024xf32> to vector<1x1024xf32>
    %cst_45 = arith.constant 8.000000e+00 : f32
    %100 = vector.broadcast %cst_45 : f32 to vector<1x1024xf32>
    %101 = arith.divf %99, %100 : vector<1x1024xf32>
    %102 = vector.broadcast %94 : vector<1x1024xf32> to vector<8x1024xf32>
    %103 = arith.subf %90, %102 : vector<8x1024xf32>
    %cst_46 = arith.constant 9.99999974E-6 : f32
    %104 = vector.broadcast %cst_46 : f32 to vector<1x1024xf32>
    %105 = arith.addf %101, %104 : vector<1x1024xf32>
    %106 = math.rsqrt %105 : vector<1x1024xf32>
    %107 = vector.broadcast %106 : vector<1x1024xf32> to vector<8x1024xf32>
    %108 = arith.mulf %103, %107 : vector<8x1024xf32>
    %c0_47 = arith.constant 0 : index
    %c0_48 = arith.constant 0 : index
    %109 = vector.load %arg11[%c0_47, %c0_48] : memref<1x1024xf32, #tpu.memory_space<vmem>>, vector<1x1024xf32>
    %110 = vector.broadcast %109 : vector<1x1024xf32> to vector<8x1024xf32>
    %111 = arith.mulf %108, %110 : vector<8x1024xf32>
    %c0_49 = arith.constant 0 : index
    %c0_50 = arith.constant 0 : index
    %112 = vector.load %arg12[%c0_49, %c0_50] : memref<1x1024xf32, #tpu.memory_space<vmem>>, vector<1x1024xf32>
    %113 = vector.broadcast %112 : vector<1x1024xf32> to vector<8x1024xf32>
    %114 = arith.addf %111, %113 : vector<8x1024xf32>
    %cst_51 = arith.constant 0.000000e+00 : f32
    %115 = vector.broadcast %cst_51 : f32 to vector<8x1024xf32>
    %116 = arith.maximumf %114, %115 : vector<8x1024xf32>
    %117 = arith.truncf %116 : vector<8x1024xf32> to vector<8x1024xbf16>
    %c0_52 = arith.constant 0 : index
    %c0_53 = arith.constant 0 : index
    %118 = vector.load %arg13[%c0_52, %c0_53] : memref<1024x784xbf16, #tpu.memory_space<vmem>>, vector<1024x784xbf16>
    %cst_54 = arith.constant dense<0.000000e+00> : vector<8x784xf32>
    %119 = tpu.matmul %117, %118, %cst_54 {dimension_numbers = #tpu.dot_dimension_numbers<[1], [0], [0], [1], [0, 0, 1, 1], [], []>} : vector<8x1024xbf16>, vector<1024x784xbf16>, vector<8x784xf32> -> vector<8x784xf32>
    %c0_55 = arith.constant 0 : index
    %c0_56 = arith.constant 0 : index
    %120 = vector.load %arg14[%c0_55, %c0_56] : memref<1x784xf32, #tpu.memory_space<vmem>>, vector<1x784xf32>
    %121 = vector.broadcast %120 : vector<1x784xf32> to vector<8x784xf32>
    %122 = arith.addf %119, %121 : vector<8x784xf32>
    %cst_57 = arith.constant 0.000000e+00 : f32
    %123 = vector.broadcast %cst_57 : f32 to vector<8x784xf32>
    %124 = arith.subf %123, %122 : vector<8x784xf32>
    %125 = math.exp %124 : vector<8x784xf32>
    %cst_58 = arith.constant 1.000000e+00 : f32
    %126 = vector.broadcast %cst_58 : f32 to vector<8x784xf32>
    %127 = arith.addf %126, %125 : vector<8x784xf32>
    %128 = tpu.reciprocal %127 {approx = true} : vector<8x784xf32> -> vector<8x784xf32>
    %c0_59 = arith.constant 0 : index
    %c0_60 = arith.constant 0 : index
    %129 = vector.load %arg15[%c0_59, %c0_60] : memref<8x784xf32, #tpu.memory_space<vmem>>, vector<8x784xf32>
    tpu.vector_store %arg15[%c0_59, %c0_60], %128 {strides = array<i32>} : memref<8x784xf32, #tpu.memory_space<vmem>>, vector<8x784xf32>,
    return
  }
}

</mosaic_0001>

<llo_original>
// kernel: generator_forward_pallas.1
$region0: #{generator_forward_pallas.1}
  #allocation0 [shape = 'u32[]', space=smem, size = 0x4, offset = 0x4, fixed_abs, tag = 'smem constant byte address 0x4 - core index']
  #allocation1 [shape = 'u32[144,128]{1,0:T(1,128)}', space=vmem, size = 0x12000, scoped, tag = 'internal scratch']
  %s0 = inlined_call_operand.vmem [shape: f32[8,10], index: 0, kind: input, shape index: {}]
  %s1 = inlined_call_operand.vmem [shape: bf16[10,128], index: 1, kind: input, shape index: {}]
  %s2 = inlined_call_operand.vmem [shape: f32[1,128], index: 2, kind: input, shape index: {}]
  %s3 = inlined_call_operand.vmem [shape: f32[1,128], index: 3, kind: input, shape index: {}]
  %s4 = inlined_call_operand.vmem [shape: bf16[128,256], index: 4, kind: input, shape index: {}]
  %s5 = inlined_call_operand.vmem [shape: f32[1,256], index: 5, kind: input, shape index: {}]
  %s6 = inlined_call_operand.vmem [shape: f32[1,256], index: 6, kind: input, shape index: {}]
  %s7 = inlined_call_operand.vmem [shape: bf16[256,512], index: 7, kind: input, shape index: {}]
  %s8 = inlined_call_operand.vmem [shape: f32[1,512], index: 8, kind: input, shape index: {}]
  %s9 = inlined_call_operand.vmem [shape: f32[1,512], index: 9, kind: input, shape index: {}]
  %s10 = inlined_call_operand.vmem [shape: bf16[512,1024], index: 10, kind: input, shape index: {}]
  %s11 = inlined_call_operand.vmem [shape: f32[1,1024], index: 11, kind: input, shape index: {}]
  %s12 = inlined_call_operand.vmem [shape: f32[1,1024], index: 12, kind: input, shape index: {}]
  %s13 = inlined_call_operand.vmem [shape: bf16[1024,784], index: 13, kind: input, shape index: {}]
  %s14 = inlined_call_operand.vmem [shape: f32[1,784], index: 14, kind: input, shape index: {}]
  %s15 = inlined_call_operand.hbm [shape: f32[8,784], index: 15, kind: output, shape index: {}]
  %s16 = sld [smem:[#allocation0]]
  $region70: #{generator_forward_pallas.1} parent=0
    _
  %s18 = ssub.s32 1, %s16
  %s19 = scalar_select 0, %s18, %s16
  $region1: #{generator_forward_pallas.1} parent=0
    #allocation2 [shape = 'u8[28672]{0}', space=vmem, size = 0x7000, scoped, tag = 'output window, operand 0, single buffered']
    #allocation3 [shape = 's32[1]{0}', space=sflag, size = 0x4, scoped, tag = 'scoped memory for generator_forward_pallas.1']
    %20 = vsyncpa [#allocation3], 0
    // Predicated region
    $region2: #{generator_forward_pallas.1} parent=1 // pred_check
      _
    $region3: #{generator_forward_pallas.1} parent=1 // pred_check_branch
      %22 = sbr.rel (0) target = $region5
    $region4: #{generator_forward_pallas.1} parent=1 // pred_region
      _
    $region5: #{generator_forward_pallas.1} parent=1 // pred_fallthru
      _
    // Predicated region
    $region6: #{generator_forward_pallas.1} parent=1 // pred_check
      _
    $region7: #{generator_forward_pallas.1} parent=1 // pred_check_branch
      %24 = sbr.rel (0) target = $region9
    $region8: #{generator_forward_pallas.1} parent=1 // pred_region
      _
    $region9: #{generator_forward_pallas.1} parent=1 // pred_fallthru
      _
    // Predicated region
    $region10: #{generator_forward_pallas.1} parent=1 // pred_check
      _
    $region11: #{generator_forward_pallas.1} parent=1 // pred_check_branch
      %26 = sbr.rel (0) target = $region13
    $region12: #{generator_forward_pallas.1} parent=1 // pred_region
      _
    $region13: #{generator_forward_pallas.1} parent=1 // pred_fallthru
      _
    // Predicated region
    $region14: #{generator_forward_pallas.1} parent=1 // pred_check
      _
    $region15: #{generator_forward_pallas.1} parent=1 // pred_check_branch
      %28 = sbr.rel (0) target = $region17
    $region16: #{generator_forward_pallas.1} parent=1 // pred_region
      _
    $region17: #{generator_forward_pallas.1} parent=1 // pred_fallthru
      _
    // Predicated region
    $region18: #{generator_forward_pallas.1} parent=1 // pred_check
      _
    $region19: #{generator_forward_pallas.1} parent=1 // pred_check_branch
      %30 = sbr.rel (0) target = $region21
    $region20: #{generator_forward_pallas.1} parent=1 // pred_region
      _
    $region21: #{generator_forward_pallas.1} parent=1 // pred_fallthru
      _
    // Predicated region
    $region22: #{generator_forward_pallas.1} parent=1 // pred_check
      _
    $region23: #{generator_forward_pallas.1} parent=1 // pred_check_branch
      %32 = sbr.rel (0) target = $region25
    $region24: #{generator_forward_pallas.1} parent=1 // pred_region
      _
    $region25: #{generator_forward_pallas.1} parent=1 // pred_fallthru
      _
    // Predicated region
    $region26: #{generator_forward_pallas.1} parent=1 // pred_check
      _
    $region27: #{generator_forward_pallas.1} parent=1 // pred_check_branch
      %34 = sbr.rel (0) target = $region29
    $region28: #{generator_forward_pallas.1} parent=1 // pred_region
      _
    $region29: #{generator_forward_pallas.1} parent=1 // pred_fallthru
      _
    // Predicated region
    $region30: #{generator_forward_pallas.1} parent=1 // pred_check
      _
    $region31: #{generator_forward_pallas.1} parent=1 // pred_check_branch
      %36 = sbr.rel (0) target = $region33
    $region32: #{generator_forward_pallas.1} parent=1 // pred_region
      _
    $region33: #{generator_forward_pallas.1} parent=1 // pred_fallthru
      _
    // Predicated region
    $region34: #{generator_forward_pallas.1} parent=1 // pred_check
      _
    $region35: #{generator_forward_pallas.1} parent=1 // pred_check_branch
      %38 = sbr.rel (0) target = $region37
    $region36: #{generator_forward_pallas.1} parent=1 // pred_region
      _
    $region37: #{generator_forward_pallas.1} parent=1 // pred_fallthru
      _
    // Predicated region
    $region38: #{generator_forward_pallas.1} parent=1 // pred_check
      _
    $region39: #{generator_forward_pallas.1} parent=1 // pred_check_branch
      %40 = sbr.rel (0) target = $region41
    $region40: #{generator_forward_pallas.1} parent=1 // pred_region
      _
    $region41: #{generator_forward_pallas.1} parent=1 // pred_fallthru
      _
    // Predicated region
    $region42: #{generator_forward_pallas.1} parent=1 // pred_check
      _
    $region43: #{generator_forward_pallas.1} parent=1 // pred_check_branch
      %42 = sbr.rel (0) target = $region45
    $region44: #{generator_forward_pallas.1} parent=1 // pred_region
      _
    $region45: #{generator_forward_pallas.1} parent=1 // pred_fallthru
      _
    // Predicated region
    $region46: #{generator_forward_pallas.1} parent=1 // pred_check
      _
    $region47: #{generator_forward_pallas.1} parent=1 // pred_check_branch
      %44 = sbr.rel (0) target = $region49
    $region48: #{generator_forward_pallas.1} parent=1 // pred_region
      _
    $region49: #{generator_forward_pallas.1} parent=1 // pred_fallthru
      _
    // Predicated region
    $region50: #{generator_forward_pallas.1} parent=1 // pred_check
      _
    $region51: #{generator_forward_pallas.1} parent=1 // pred_check_branch
      %46 = sbr.rel (0) target = $region53
    $region52: #{generator_forward_pallas.1} parent=1 // pred_region
      _
    $region53: #{generator_forward_pallas.1} parent=1 // pred_fallthru
      _
    // Predicated region
    $region54: #{generator_forward_pallas.1} parent=1 // pred_check
      _
    $region55: #{generator_forward_pallas.1} parent=1 // pred_check_branch
      %48 = sbr.rel (0) target = $region57
    $region56: #{generator_forward_pallas.1} parent=1 // pred_region
      _
    $region57: #{generator_forward_pallas.1} parent=1 // pred_fallthru
      _
    // Predicated region
    $region58: #{generator_forward_pallas.1} parent=1 // pred_check
      _
    $region59: #{generator_forward_pallas.1} parent=1 // pred_check_branch
      %50 = sbr.rel (0) target = $region61
    $region60: #{generator_forward_pallas.1} parent=1 // pred_region
      _
    $region61: #{generator_forward_pallas.1} parent=1 // pred_fallthru
      _
    %v52 = vld [vmem:[%s0] sm:$0xff]
    %v53 = vpack.c.bf16 %v52, %v52
    %v54 = vld [vmem:[%s1] sm:$0xf]
    %v55 = vld [vmem:[%s1 + $0x4] sm:$0x1]
    %v58 = vunpack.c.l.b16 %v54
    %v59 = vunpack.c.l.b16 %v55
    %v60 = vpack.c.b16 %v59, %v58
    %vm61 = vcmask 80896
    %v63 = vsel %vm61, %v53, 0
    %vm65 = vcmask 1044480
    %v67 = vsel %vm65, %v60, 0
    %69 = vmatprep.subr.bf16.mxu0 0
    %70 = vmatpush1.bf16.msra.mxu0 0
    %71 = vmatprep.subr.bf16.mxu0 0
    %72 = vmatpush1.bf16.msra.mxu0 0
    %73 = vmatprep.subr.bf16.mxu0 0
    %74 = vmatpush1.bf16.msra.mxu0 0
    %75 = vmatprep.subr.bf16.mxu0 0
    %76 = vmatpush1.bf16.msra.mxu0 0
    %77 = vmatprep.subr.bf16.mxu0 0
    %78 = vmatpush1.bf16.msra.mxu0 0
    %79 = vmatprep.subr.bf16.mxu0 0
    %80 = vmatpush1.bf16.msra.mxu0 0
    %81 = vmatprep.subr.bf16.mxu0 0
    %82 = vmatpush1.bf16.msra.mxu0 0
    %83 = vmatprep.subr.bf16.mxu0 0
    %84 = vmatpush1.bf16.msra.mxu0 %v67
    %85 = vmatprep.subr.bf16.mxu0 0
    %86 = vmatpush2.bf16.msra.mxu0 0
    %87 = vmatprep.subr.bf16.mxu0 0
    %88 = vmatpush2.bf16.msra.mxu0 0
    %89 = vmatprep.subr.bf16.mxu0 0
    %90 = vmatpush2.bf16.msra.mxu0 0
    %91 = vmatprep.subr.bf16.mxu0 0
    %92 = vmatpush2.bf16.msra.mxu0 0
    %93 = vmatprep.subr.bf16.mxu0 0
    %94 = vmatpush2.bf16.msra.mxu0 0
    %95 = vmatprep.subr.bf16.mxu0 0
    %96 = vmatpush2.bf16.msra.mxu0 0
    %97 = vmatprep.subr.bf16.mxu0 0
    %98 = vmatpush2.bf16.msra.mxu0 0
    %99 = vmatprep.subr.bf16.mxu0 0
    %100 = vmatpush2.bf16.msra.mxu0 0
    %101 = vmatprep.mubr.bf16.mxu0 0
    %102 = vmatmul.mubr.bf16.gmra.mxu0 %v63
    %v103 = vpop.f32.mrf.mxu0
    %v104 = vadd.f32 0.0, %v103
    %v105 = vpop.f32.mrf.mxu0
    %v106 = vpop.f32.mrf.mxu0
    %v107 = vpop.f32.mrf.mxu0
    %108 = vdwg.mxu0
    %v109 = vrot.slane %v104, 4
    %v110 = vadd.f32 %v104, %v109
    %v111 = vrot.slane %v110, 2
    %v112 = vadd.f32 %v110, %v111
    %v113 = vrot.slane %v112, 1
    %v114 = vadd.f32 %v112, %v113
    %v115 = vrcp.pop 8.0
    %v116 = vmul.f32 %v114, %v115
    %v117 = vsub.f32 %v104, %v116
    %v118 = vmul.f32 %v117, %v117
    %v119 = vrot.slane %v118, 4
    %v120 = vadd.f32 %v118, %v119
    %v121 = vrot.slane %v120, 2
    %v122 = vadd.f32 %v120, %v121
    %v123 = vrot.slane %v122, 1
    %v124 = vadd.f32 %v122, %v123
    %v125 = vmul.f32 %v124, %v115
    %v126 = vadd.f32 %v125, 1e-05
    %v127 = vrsqrt.pop %v126
    %v128 = vmul.f32 %v117, %v127
    %v129 = vld [vmem:[%s2] sm:$0x1]
    %v131 = vlaneseq
    %v132 = vshrl.u32 %v131, 7
    %v133 = vsub.s32 0, %v132
    %v134 = vrot.slane %v129, %v133
    %v136 = vmul.f32 %v128, %v134
    %v137 = vld [vmem:[%s3] sm:$0x1]
    %v139 = vlaneseq
    %v140 = vshrl.u32 %v139, 7
    %v141 = vsub.s32 0, %v140
    %v142 = vrot.slane %v137, %v141
    %v144 = vadd.f32 %v136, %v142
    %v145 = vmax.f32 %v144, 0.0
    %v146 = vpack.c.bf16 %v145, %v145
    %v147 = vld [vmem:[%s4] sm:$0xff]
    %v148 = vld [vmem:[%s4 + $0x8] sm:$0xff]
    %v149 = vld [vmem:[%s4 + $0x10] sm:$0xff]
    %v150 = vld [vmem:[%s4 + $0x18] sm:$0xff]
    %v151 = vld [vmem:[%s4 + $0x20] sm:$0xff]
    %v152 = vld [vmem:[%s4 + $0x28] sm:$0xff]
    %v153 = vld [vmem:[%s4 + $0x30] sm:$0xff]
    %v154 = vld [vmem:[%s4 + $0x38] sm:$0xff]
    %v155 = vld [vmem:[%s4 + $0x40] sm:$0xff]
    %v156 = vld [vmem:[%s4 + $0x48] sm:$0xff]
    %v157 = vld [vmem:[%s4 + $0x50] sm:$0xff]
    %v158 = vld [vmem:[%s4 + $0x58] sm:$0xff]
    %v159 = vld [vmem:[%s4 + $0x60] sm:$0xff]
    %v160 = vld [vmem:[%s4 + $0x68] sm:$0xff]
    %v161 = vld [vmem:[%s4 + $0x70] sm:$0xff]
    %v162 = vld [vmem:[%s4 + $0x78] sm:$0xff]
    %v179 = vunpack.c.l.b16 %v147
    %v180 = vunpack.c.h.b16 %v147
    %v181 = vunpack.c.l.b16 %v148
    %v182 = vunpack.c.h.b16 %v148
    %v183 = vunpack.c.l.b16 %v149
    %v184 = vunpack.c.h.b16 %v149
    %v185 = vunpack.c.l.b16 %v150
    %v186 = vunpack.c.h.b16 %v150
    %v187 = vunpack.c.l.b16 %v151
    %v188 = vunpack.c.h.b16 %v151
    %v189 = vunpack.c.l.b16 %v152
    %v190 = vunpack.c.h.b16 %v152
    %v191 = vunpack.c.l.b16 %v153
    %v192 = vunpack.c.h.b16 %v153
    %v193 = vunpack.c.l.b16 %v154
    %v194 = vunpack.c.h.b16 %v154
    %v195 = vunpack.c.l.b16 %v155
    %v196 = vunpack.c.h.b16 %v155
    %v197 = vunpack.c.l.b16 %v156
    %v198 = vunpack.c.h.b16 %v156
    %v199 = vunpack.c.l.b16 %v157
    %v200 = vunpack.c.h.b16 %v157
    %v201 = vunpack.c.l.b16 %v158
    %v202 = vunpack.c.h.b16 %v158
    %v203 = vunpack.c.l.b16 %v159
    %v204 = vunpack.c.h.b16 %v159
    %v205 = vunpack.c.l.b16 %v160
    %v206 = vunpack.c.h.b16 %v160
    %v207 = vunpack.c.l.b16 %v161
    %v208 = vunpack.c.h.b16 %v161
    %v209 = vunpack.c.l.b16 %v162
    %v210 = vunpack.c.h.b16 %v162
    %v211 = vpack.c.b16 %v181, %v179
    %v212 = vpack.c.b16 %v182, %v180
    %v213 = vpack.c.b16 %v185, %v183
    %v214 = vpack.c.b16 %v186, %v184
    %v215 = vpack.c.b16 %v189, %v187
    %v216 = vpack.c.b16 %v190, %v188
    %v217 = vpack.c.b16 %v193, %v191
    %v218 = vpack.c.b16 %v194, %v192
    %v219 = vpack.c.b16 %v197, %v195
    %v220 = vpack.c.b16 %v198, %v196
    %v221 = vpack.c.b16 %v201, %v199
    %v222 = vpack.c.b16 %v202, %v200
    %v223 = vpack.c.b16 %v205, %v203
    %v224 = vpack.c.b16 %v206, %v204
    %v225 = vpack.c.b16 %v209, %v207
    %v226 = vpack.c.b16 %v210, %v208
    %243 = vmatprep.subr.bf16.mxu0 %v226
    %244 = vmatpush1.bf16.msra.mxu0 %v225
    %245 = vmatprep.subr.bf16.mxu0 %v224
    %246 = vmatpush1.bf16.msra.mxu0 %v223
    %247 = vmatprep.subr.bf16.mxu0 %v222
    %248 = vmatpush1.bf16.msra.mxu0 %v221
    %249 = vmatprep.subr.bf16.mxu0 %v220
    %250 = vmatpush1.bf16.msra.mxu0 %v219
    %251 = vmatprep.subr.bf16.mxu0 %v218
    %252 = vmatpush1.bf16.msra.mxu0 %v217
    %253 = vmatprep.subr.bf16.mxu0 %v216
    %254 = vmatpush1.bf16.msra.mxu0 %v215
    %255 = vmatprep.subr.bf16.mxu0 %v214
    %256 = vmatpush1.bf16.msra.mxu0 %v213
    %257 = vmatprep.subr.bf16.mxu0 %v212
    %258 = vmatpush1.bf16.msra.mxu0 %v211
    %259 = vmatprep.subr.bf16.mxu0 0
    %260 = vmatpush2.bf16.msra.mxu0 0
    %261 = vmatprep.subr.bf16.mxu0 0
    %262 = vmatpush2.bf16.msra.mxu0 0
    %263 = vmatprep.subr.bf16.mxu0 0
    %264 = vmatpush2.bf16.msra.mxu0 0
    %265 = vmatprep.subr.bf16.mxu0 0
    %266 = vmatpush2.bf16.msra.mxu0 0
    %267 = vmatprep.subr.bf16.mxu0 0
    %268 = vmatpush2.bf16.msra.mxu0 0
    %269 = vmatprep.subr.bf16.mxu0 0
    %270 = vmatpush2.bf16.msra.mxu0 0
    %271 = vmatprep.subr.bf16.mxu0 0
    %272 = vmatpush2.bf16.msra.mxu0 0
    %273 = vmatprep.subr.bf16.mxu0 0
    %274 = vmatpush2.bf16.msra.mxu0 0
    %275 = vmatprep.mubr.bf16.mxu0 0
    %276 = vmatmul.mubr.bf16.gmra.mxu0 %v146
    %v277 = vpop.f32.mrf.mxu0
    %v278 = vadd.f32 0.0, %v277
    %v279 = vpop.f32.mrf.mxu0
    %v280 = vadd.f32 0.0, %v279
    %v281 = vpop.f32.mrf.mxu0
    %v282 = vpop.f32.mrf.mxu0
    %283 = vdwg.mxu0
    %v284 = vrot.slane %v278, 4
    %v285 = vadd.f32 %v278, %v284
    %v286 = vrot.slane %v285, 2
    %v287 = vadd.f32 %v285, %v286
    %v288 = vrot.slane %v287, 1
    %v289 = vadd.f32 %v287, %v288
    %v290 = vrot.slane %v280, 4
    %v291 = vadd.f32 %v280, %v290
    %v292 = vrot.slane %v291, 2
    %v293 = vadd.f32 %v291, %v292
    %v294 = vrot.slane %v293, 1
    %v295 = vadd.f32 %v293, %v294
    %v296 = vmul.f32 %v289, %v115
    %v297 = vmul.f32 %v295, %v115
    %v298 = vsub.f32 %v278, %v296
    %v299 = vsub.f32 %v280, %v297
    %v300 = vmul.f32 %v298, %v298
    %v301 = vmul.f32 %v299, %v299
    %v302 = vrot.slane %v300, 4
    %v303 = vadd.f32 %v300, %v302
    %v304 = vrot.slane %v303, 2
    %v305 = vadd.f32 %v303, %v304
    %v306 = vrot.slane %v305, 1
    %v307 = vadd.f32 %v305, %v306
    %v308 = vrot.slane %v301, 4
    %v309 = vadd.f32 %v301, %v308
    %v310 = vrot.slane %v309, 2
    %v311 = vadd.f32 %v309, %v310
    %v312 = vrot.slane %v311, 1
    %v313 = vadd.f32 %v311, %v312
    %v314 = vmul.f32 %v307, %v115
    %v315 = vmul.f32 %v313, %v115
    %v316 = vadd.f32 %v314, 1e-05
    %v317 = vadd.f32 %v315, 1e-05
    %v318 = vrsqrt.pop %v316
    %v319 = vrsqrt.pop %v317
    %v320 = vmul.f32 %v298, %v318
    %v321 = vmul.f32 %v299, %v319
    %v322 = vld [vmem:[%s5] sm:$0x3]
    %v324 = vlaneseq
    %v325 = vshrl.u32 %v324, 7
    %v326 = vsub.s32 0, %v325
    %v327 = vrot.slane %v322, %v326
    %v328 = vlaneseq
    %v329 = vshrl.u32 %v328, 7
    %v330 = vsub.s32 1, %v329
    %v331 = vrot.slane %v322, %v330
    %v334 = vmul.f32 %v320, %v327
    %v335 = vmul.f32 %v321, %v331
    %v336 = vld [vmem:[%s6] sm:$0x3]
    %v338 = vlaneseq
    %v339 = vshrl.u32 %v338, 7
    %v340 = vsub.s32 0, %v339
    %v341 = vrot.slane %v336, %v340
    %v342 = vlaneseq
    %v343 = vshrl.u32 %v342, 7
    %v344 = vsub.s32 1, %v343
    %v345 = vrot.slane %v336, %v344
    %v348 = vadd.f32 %v334, %v341
    %v349 = vadd.f32 %v335, %v345
    %v350 = vmax.f32 %v348, 0.0
    %v351 = vmax.f32 %v349, 0.0
    %v352 = vpack.c.bf16 %v350, %v350
    %v353 = vpack.c.bf16 %v351, %v351
    %v354 = vld [vmem:[%s7] sm:$0xff]
    %v355 = vld [vmem:[%s7 + $0x8] sm:$0xff]
    %v356 = vld [vmem:[%s7 + $0x10] sm:$0xff]
    %v357 = vld [vmem:[%s7 + $0x18] sm:$0xff]
    %v358 = vld [vmem:[%s7 + $0x20] sm:$0xff]
    %v359 = vld [vmem:[%s7 + $0x28] sm:$0xff]
    %v360 = vld [vmem:[%s7 + $0x30] sm:$0xff]
    %v361 = vld [vmem:[%s7 + $0x38] sm:$0xff]
    %v362 = vld [vmem:[%s7 + $0x40] sm:$0xff]
    %v363 = vld [vmem:[%s7 + $0x48] sm:$0xff]
    %v364 = vld [vmem:[%s7 + $0x50] sm:$0xff]
    %v365 = vld [vmem:[%s7 + $0x58] sm:$0xff]
    %v366 = vld [vmem:[%s7 + $0x60] sm:$0xff]
    %v367 = vld [vmem:[%s7 + $0x68] sm:$0xff]
    %v368 = vld [vmem:[%s7 + $0x70] sm:$0xff]
    %v369 = vld [vmem:[%s7 + $0x78] sm:$0xff]
    %v370 = vld [vmem:[%s7 + $0x80] sm:$0xff]
    %v371 = vld [vmem:[%s7 + $0x88] sm:$0xff]
    %v372 = vld [vmem:[%s7 + $0x90] sm:$0xff]
    %v373 = vld [vmem:[%s7 + $0x98] sm:$0xff]
    %v374 = vld [vmem:[%s7 + $0xa0] sm:$0xff]
    %v375 = vld [vmem:[%s7 + $0xa8] sm:$0xff]
    %v376 = vld [vmem:[%s7 + $0xb0] sm:$0xff]
    %v377 = vld [vmem:[%s7 + $0xb8] sm:$0xff]
    %v378 = vld [vmem:[%s7 + $0xc0] sm:$0xff]
    %v379 = vld [vmem:[%s7 + $0xc8] sm:$0xff]
    %v380 = vld [vmem:[%s7 + $0xd0] sm:$0xff]
    %v381 = vld [vmem:[%s7 + $0xd8] sm:$0xff]
    %v382 = vld [vmem:[%s7 + $0xe0] sm:$0xff]
    %v383 = vld [vmem:[%s7 + $0xe8] sm:$0xff]
    %v384 = vld [vmem:[%s7 + $0xf0] sm:$0xff]
    %v385 = vld [vmem:[%s7 + $0xf8] sm:$0xff]
    %v386 = vld [vmem:[%s7 + $0x100] sm:$0xff]
    %v387 = vld [vmem:[%s7 + $0x108] sm:$0xff]
    %v388 = vld [vmem:[%s7 + $0x110] sm:$0xff]
    %v389 = vld [vmem:[%s7 + $0x118] sm:$0xff]
    %v390 = vld [vmem:[%s7 + $0x120] sm:$0xff]
    %v391 = vld [vmem:[%s7 + $0x128] sm:$0xff]
    %v392 = vld [vmem:[%s7 + $0x130] sm:$0xff]
    %v393 = vld [vmem:[%s7 + $0x138] sm:$0xff]
    %v394 = vld [vmem:[%s7 + $0x140] sm:$0xff]
    %v395 = vld [vmem:[%s7 + $0x148] sm:$0xff]
    %v396 = vld [vmem:[%s7 + $0x150] sm:$0xff]
    %v397 = vld [vmem:[%s7 + $0x158] sm:$0xff]
    %v398 = vld [vmem:[%s7 + $0x160] sm:$0xff]
    %v399 = vld [vmem:[%s7 + $0x168] sm:$0xff]
    %v400 = vld [vmem:[%s7 + $0x170] sm:$0xff]
    %v401 = vld [vmem:[%s7 + $0x178] sm:$0xff]
    %v402 = vld [vmem:[%s7 + $0x180] sm:$0xff]
    %v403 = vld [vmem:[%s7 + $0x188] sm:$0xff]
    %v404 = vld [vmem:[%s7 + $0x190] sm:$0xff]
    %v405 = vld [vmem:[%s7 + $0x198] sm:$0xff]
    %v406 = vld [vmem:[%s7 + $0x1a0] sm:$0xff]
    %v407 = vld [vmem:[%s7 + $0x1a8] sm:$0xff]
    %v408 = vld [vmem:[%s7 + $0x1b0] sm:$0xff]
    %v409 = vld [vmem:[%s7 + $0x1b8] sm:$0xff]
    %v410 = vld [vmem:[%s7 + $0x1c0] sm:$0xff]
    %v411 = vld [vmem:[%s7 + $0x1c8] sm:$0xff]
    %v412 = vld [vmem:[%s7 + $0x1d0] sm:$0xff]
    %v413 = vld [vmem:[%s7 + $0x1d8] sm:$0xff]
    %v414 = vld [vmem:[%s7 + $0x1e0] sm:$0xff]
    %v415 = vld [vmem:[%s7 + $0x1e8] sm:$0xff]
    %v416 = vld [vmem:[%s7 + $0x1f0] sm:$0xff]
    %v417 = vld [vmem:[%s7 + $0x1f8] sm:$0xff]
    %v482 = vunpack.c.l.b16 %v354
    %v483 = vunpack.c.h.b16 %v354
    %v484 = vunpack.c.l.b16 %v355
    %v485 = vunpack.c.h.b16 %v355
    %v486 = vunpack.c.l.b16 %v356
    %v487 = vunpack.c.h.b16 %v356
    %v488 = vunpack.c.l.b16 %v357
    %v489 = vunpack.c.h.b16 %v357
    %v490 = vunpack.c.l.b16 %v358
    %v491 = vunpack.c.h.b16 %v358
    %v492 = vunpack.c.l.b16 %v359
    %v493 = vunpack.c.h.b16 %v359
    %v494 = vunpack.c.l.b16 %v360
    %v495 = vunpack.c.h.b16 %v360
    %v496 = vunpack.c.l.b16 %v361
    %v497 = vunpack.c.h.b16 %v361
    %v498 = vunpack.c.l.b16 %v362
    %v499 = vunpack.c.h.b16 %v362
    %v500 = vunpack.c.l.b16 %v363
    %v501 = vunpack.c.h.b16 %v363
    %v502 = vunpack.c.l.b16 %v364
    %v503 = vunpack.c.h.b16 %v364
    %v504 = vunpack.c.l.b16 %v365
    %v505 = vunpack.c.h.b16 %v365
    %v506 = vunpack.c.l.b16 %v366
    %v507 = vunpack.c.h.b16 %v366
    %v508 = vunpack.c.l.b16 %v367
    %v509 = vunpack.c.h.b16 %v367
    %v510 = vunpack.c.l.b16 %v368
    %v511 = vunpack.c.h.b16 %v368
    %v512 = vunpack.c.l.b16 %v369
    %v513 = vunpack.c.h.b16 %v369
    %v514 = vunpack.c.l.b16 %v370
    %v515 = vunpack.c.h.b16 %v370
    %v516 = vunpack.c.l.b16 %v371
    %v517 = vunpack.c.h.b16 %v371
    %v518 = vunpack.c.l.b16 %v372
    %v519 = vunpack.c.h.b16 %v372
    %v520 = vunpack.c.l.b16 %v373
    %v521 = vunpack.c.h.b16 %v373
    %v522 = vunpack.c.l.b16 %v374
    %v523 = vunpack.c.h.b16 %v374
    %v524 = vunpack.c.l.b16 %v375
    %v525 = vunpack.c.h.b16 %v375
    %v526 = vunpack.c.l.b16 %v376
    %v527 = vunpack.c.h.b16 %v376
    %v528 = vunpack.c.l.b16 %v377
    %v529 = vunpack.c.h.b16 %v377
    %v530 = vunpack.c.l.b16 %v378
    %v531 = vunpack.c.h.b16 %v378
    %v532 = vunpack.c.l.b16 %v379
    %v533 = vunpack.c.h.b16 %v379
    %v534 = vunpack.c.l.b16 %v380
    %v535 = vunpack.c.h.b16 %v380
    %v536 = vunpack.c.l.b16 %v381
    %v537 = vunpack.c.h.b16 %v381
    %v538 = vunpack.c.l.b16 %v382
    %v539 = vunpack.c.h.b16 %v382
    %v540 = vunpack.c.l.b16 %v383
    %v541 = vunpack.c.h.b16 %v383
    %v542 = vunpack.c.l.b16 %v384
    %v543 = vunpack.c.h.b16 %v384
    %v544 = vunpack.c.l.b16 %v385
    %v545 = vunpack.c.h.b16 %v385
    %v546 = vunpack.c.l.b16 %v386
    %v547 = vunpack.c.h.b16 %v386
    %v548 = vunpack.c.l.b16 %v387
    %v549 = vunpack.c.h.b16 %v387
    %v550 = vunpack.c.l.b16 %v388
    %v551 = vunpack.c.h.b16 %v388
    %v552 = vunpack.c.l.b16 %v389
    %v553 = vunpack.c.h.b16 %v389
    %v554 = vunpack.c.l.b16 %v390
    %v555 = vunpack.c.h.b16 %v390
    %v556 = vunpack.c.l.b16 %v391
    %v557 = vunpack.c.h.b16 %v391
    %v558 = vunpack.c.l.b16 %v392
    %v559 = vunpack.c.h.b16 %v392
    %v560 = vunpack.c.l.b16 %v393
    %v561 = vunpack.c.h.b16 %v393
    %v562 = vunpack.c.l.b16 %v394
    %v563 = vunpack.c.h.b16 %v394
    %v564 = vunpack.c.l.b16 %v395
    %v565 = vunpack.c.h.b16 %v395
    %v566 = vunpack.c.l.b16 %v396
    %v567 = vunpack.c.h.b16 %v396
    %v568 = vunpack.c.l.b16 %v397
    %v569 = vunpack.c.h.b16 %v397
    %v570 = vunpack.c.l.b16 %v398
    %v571 = vunpack.c.h.b16 %v398
    %v572 = vunpack.c.l.b16 %v399
    %v573 = vunpack.c.h.b16 %v399
    %v574 = vunpack.c.l.b16 %v400
    %v575 = vunpack.c.h.b16 %v400
    %v576 = vunpack.c.l.b16 %v401
    %v577 = vunpack.c.h.b16 %v401
    %v578 = vunpack.c.l.b16 %v402
    %v579 = vunpack.c.h.b16 %v402
    %v580 = vunpack.c.l.b16 %v403
    %v581 = vunpack.c.h.b16 %v403
    %v582 = vunpack.c.l.b16 %v404
    %v583 = vunpack.c.h.b16 %v404
    %v584 = vunpack.c.l.b16 %v405
    %v585 = vunpack.c.h.b16 %v405
    %v586 = vunpack.c.l.b16 %v406
    %v587 = vunpack.c.h.b16 %v406
    %v588 = vunpack.c.l.b16 %v407
    %v589 = vunpack.c.h.b16 %v407
    %v590 = vunpack.c.l.b16 %v408
    %v591 = vunpack.c.h.b16 %v408
    %v592 = vunpack.c.l.b16 %v409
    %v593 = vunpack.c.h.b16 %v409
    %v594 = vunpack.c.l.b16 %v410
    %v595 = vunpack.c.h.b16 %v410
    %v596 = vunpack.c.l.b16 %v411
    %v597 = vunpack.c.h.b16 %v411
    %v598 = vunpack.c.l.b16 %v412
    %v599 = vunpack.c.h.b16 %v412
    %v600 = vunpack.c.l.b16 %v413
    %v601 = vunpack.c.h.b16 %v413
    %v602 = vunpack.c.l.b16 %v414
    %v603 = vunpack.c.h.b16 %v414
    %v604 = vunpack.c.l.b16 %v415
    %v605 = vunpack.c.h.b16 %v415
    %v606 = vunpack.c.l.b16 %v416
    %v607 = vunpack.c.h.b16 %v416
    %v608 = vunpack.c.l.b16 %v417
    %v609 = vunpack.c.h.b16 %v417
    %v610 = vpack.c.b16 %v486, %v482
    %v611 = vpack.c.b16 %v487, %v483
    %v612 = vpack.c.b16 %v488, %v484
    %v613 = vpack.c.b16 %v489, %v485
    %v614 = vpack.c.b16 %v494, %v490
    %v615 = vpack.c.b16 %v495, %v491
    %v616 = vpack.c.b16 %v496, %v492
    %v617 = vpack.c.b16 %v497, %v493
    %v618 = vpack.c.b16 %v502, %v498
    %v619 = vpack.c.b16 %v503, %v499
    %v620 = vpack.c.b16 %v504, %v500
    %v621 = vpack.c.b16 %v505, %v501
    %v622 = vpack.c.b16 %v510, %v506
    %v623 = vpack.c.b16 %v511, %v507
    %v624 = vpack.c.b16 %v512, %v508
    %v625 = vpack.c.b16 %v513, %v509
    %v626 = vpack.c.b16 %v518, %v514
    %v627 = vpack.c.b16 %v519, %v515
    %v628 = vpack.c.b16 %v520, %v516
    %v629 = vpack.c.b16 %v521, %v517
    %v630 = vpack.c.b16 %v526, %v522
    %v631 = vpack.c.b16 %v527, %v523
    %v632 = vpack.c.b16 %v528, %v524
    %v633 = vpack.c.b16 %v529, %v525
    %v634 = vpack.c.b16 %v534, %v530
    %v635 = vpack.c.b16 %v535, %v531
    %v636 = vpack.c.b16 %v536, %v532
    %v637 = vpack.c.b16 %v537, %v533
    %v638 = vpack.c.b16 %v542, %v538
    %v639 = vpack.c.b16 %v543, %v539
    %v640 = vpack.c.b16 %v544, %v540
    %v641 = vpack.c.b16 %v545, %v541
    %v642 = vpack.c.b16 %v550, %v546
    %v643 = vpack.c.b16 %v551, %v547
    %v644 = vpack.c.b16 %v552, %v548
    %v645 = vpack.c.b16 %v553, %v549
    %v646 = vpack.c.b16 %v558, %v554
    %v647 = vpack.c.b16 %v559, %v555
    %v648 = vpack.c.b16 %v560, %v556
    %v649 = vpack.c.b16 %v561, %v557
    %v650 = vpack.c.b16 %v566, %v562
    %v651 = vpack.c.b16 %v567, %v563
    %v652 = vpack.c.b16 %v568, %v564
    %v653 = vpack.c.b16 %v569, %v565
    %v654 = vpack.c.b16 %v574, %v570
    %v655 = vpack.c.b16 %v575, %v571
    %v656 = vpack.c.b16 %v576, %v572
    %v657 = vpack.c.b16 %v577, %v573
    %v658 = vpack.c.b16 %v582, %v578
    %v659 = vpack.c.b16 %v583, %v579
    %v660 = vpack.c.b16 %v584, %v580
    %v661 = vpack.c.b16 %v585, %v581
    %v662 = vpack.c.b16 %v590, %v586
    %v663 = vpack.c.b16 %v591, %v587
    %v664 = vpack.c.b16 %v592, %v588
    %v665 = vpack.c.b16 %v593, %v589
    %v666 = vpack.c.b16 %v598, %v594
    %v667 = vpack.c.b16 %v599, %v595
    %v668 = vpack.c.b16 %v600, %v596
    %v669 = vpack.c.b16 %v601, %v597
    %v670 = vpack.c.b16 %v606, %v602
    %v671 = vpack.c.b16 %v607, %v603
    %v672 = vpack.c.b16 %v608, %v604
    %v673 = vpack.c.b16 %v609, %v605
    %738 = vmatprep.subr.bf16.mxu0 %v639
    %739 = vmatpush1.bf16.msra.mxu0 %v638
    %740 = vmatprep.subr.bf16.mxu0 %v635
    %741 = vmatpush1.bf16.msra.mxu0 %v634
    %742 = vmatprep.subr.bf16.mxu0 %v631
    %743 = vmatpush1.bf16.msra.mxu0 %v630
    %744 = vmatprep.subr.bf16.mxu0 %v627
    %745 = vmatpush1.bf16.msra.mxu0 %v626
    %746 = vmatprep.subr.bf16.mxu0 %v623
    %747 = vmatpush1.bf16.msra.mxu0 %v622
    %748 = vmatprep.subr.bf16.mxu0 %v619
    %749 = vmatpush1.bf16.msra.mxu0 %v618
    %750 = vmatprep.subr.bf16.mxu0 %v615
    %751 = vmatpush1.bf16.msra.mxu0 %v614
    %752 = vmatprep.subr.bf16.mxu0 %v611
    %753 = vmatpush1.bf16.msra.mxu0 %v610
    %754 = vmatprep.subr.bf16.mxu0 %v671
    %755 = vmatpush2.bf16.msra.mxu0 %v670
    %756 = vmatprep.subr.bf16.mxu0 %v667
    %757 = vmatpush2.bf16.msra.mxu0 %v666
    %758 = vmatprep.subr.bf16.mxu0 %v663
    %759 = vmatpush2.bf16.msra.mxu0 %v662
    %760 = vmatprep.subr.bf16.mxu0 %v659
    %761 = vmatpush2.bf16.msra.mxu0 %v658
    %762 = vmatprep.subr.bf16.mxu0 %v655
    %763 = vmatpush2.bf16.msra.mxu0 %v654
    %764 = vmatprep.subr.bf16.mxu0 %v651
    %765 = vmatpush2.bf16.msra.mxu0 %v650
    %766 = vmatprep.subr.bf16.mxu0 %v647
    %767 = vmatpush2.bf16.msra.mxu0 %v646
    %768 = vmatprep.subr.bf16.mxu0 %v643
    %769 = vmatpush2.bf16.msra.mxu0 %v642
    %770 = vmatprep.mubr.bf16.mxu0 %v353
    %771 = vmatmul.mubr.bf16.gmra.mxu0 %v352
    %v772 = vpop.f32.mrf.mxu0
    %v773 = vadd.f32 0.0, %v772
    %v774 = vpop.f32.mrf.mxu0
    %v775 = vadd.f32 0.0, %v774
    %v776 = vpop.f32.mrf.mxu0
    %v777 = vpop.f32.mrf.mxu0
    %778 = vdwg.mxu0
    %779 = vmatprep.subr.bf16.mxu0 %v641
    %780 = vmatpush1.bf16.msra.mxu0 %v640
    %781 = vmatprep.subr.bf16.mxu0 %v637
    %782 = vmatpush1.bf16.msra.mxu0 %v636
    %783 = vmatprep.subr.bf16.mxu0 %v633
    %784 = vmatpush1.bf16.msra.mxu0 %v632
    %785 = vmatprep.subr.bf16.mxu0 %v629
    %786 = vmatpush1.bf16.msra.mxu0 %v628
    %787 = vmatprep.subr.bf16.mxu0 %v625
    %788 = vmatpush1.bf16.msra.mxu0 %v624
    %789 = vmatprep.subr.bf16.mxu0 %v621
    %790 = vmatpush1.bf16.msra.mxu0 %v620
    %791 = vmatprep.subr.bf16.mxu0 %v617
    %792 = vmatpush1.bf16.msra.mxu0 %v616
    %793 = vmatprep.subr.bf16.mxu0 %v613
    %794 = vmatpush1.bf16.msra.mxu0 %v612
    %795 = vmatprep.subr.bf16.mxu0 %v673
    %796 = vmatpush2.bf16.msra.mxu0 %v672
    %797 = vmatprep.subr.bf16.mxu0 %v669
    %798 = vmatpush2.bf16.msra.mxu0 %v668
    %799 = vmatprep.subr.bf16.mxu0 %v665
    %800 = vmatpush2.bf16.msra.mxu0 %v664
    %801 = vmatprep.subr.bf16.mxu0 %v661
    %802 = vmatpush2.bf16.msra.mxu0 %v660
    %803 = vmatprep.subr.bf16.mxu0 %v657
    %804 = vmatpush2.bf16.msra.mxu0 %v656
    %805 = vmatprep.subr.bf16.mxu0 %v653
    %806 = vmatpush2.bf16.msra.mxu0 %v652
    %807 = vmatprep.subr.bf16.mxu0 %v649
    %808 = vmatpush2.bf16.msra.mxu0 %v648
    %809 = vmatprep.subr.bf16.mxu0 %v645
    %810 = vmatpush2.bf16.msra.mxu0 %v644
    %811 = vmatprep.mubr.bf16.mxu0 %v353
    %812 = vmatmul.mubr.bf16.gmra.mxu0 %v352
    %v813 = vpop.f32.mrf.mxu0
    %v814 = vadd.f32 0.0, %v813
    %v815 = vpop.f32.mrf.mxu0
    %v816 = vadd.f32 0.0, %v815
    %v817 = vpop.f32.mrf.mxu0
    %v818 = vpop.f32.mrf.mxu0
    %819 = vdwg.mxu0
    %v820 = vrot.slane %v773, 4
    %v821 = vadd.f32 %v773, %v820
    %v822 = vrot.slane %v821, 2
    %v823 = vadd.f32 %v821, %v822
    %v824 = vrot.slane %v823, 1
    %v825 = vadd.f32 %v823, %v824
    %v826 = vrot.slane %v775, 4
    %v827 = vadd.f32 %v775, %v826
    %v828 = vrot.slane %v827, 2
    %v829 = vadd.f32 %v827, %v828
    %v830 = vrot.slane %v829, 1
    %v831 = vadd.f32 %v829, %v830
    %v832 = vrot.slane %v814, 4
    %v833 = vadd.f32 %v814, %v832
    %v834 = vrot.slane %v833, 2
    %v835 = vadd.f32 %v833, %v834
    %v836 = vrot.slane %v835, 1
    %v837 = vadd.f32 %v835, %v836
    %v838 = vrot.slane %v816, 4
    %v839 = vadd.f32 %v816, %v838
    %v840 = vrot.slane %v839, 2
    %v841 = vadd.f32 %v839, %v840
    %v842 = vrot.slane %v841, 1
    %v843 = vadd.f32 %v841, %v842
    %v844 = vmul.f32 %v825, %v115
    %v845 = vmul.f32 %v831, %v115
    %v846 = vmul.f32 %v837, %v115
    %v847 = vmul.f32 %v843, %v115
    %v848 = vsub.f32 %v773, %v844
    %v849 = vsub.f32 %v775, %v845
    %v850 = vsub.f32 %v814, %v846
    %v851 = vsub.f32 %v816, %v847
    %v852 = vmul.f32 %v848, %v848
    %v853 = vmul.f32 %v849, %v849
    %v854 = vmul.f32 %v850, %v850
    %v855 = vmul.f32 %v851, %v851
    %v856 = vrot.slane %v852, 4
    %v857 = vadd.f32 %v852, %v856
    %v858 = vrot.slane %v857, 2
    %v859 = vadd.f32 %v857, %v858
    %v860 = vrot.slane %v859, 1
    %v861 = vadd.f32 %v859, %v860
    %v862 = vrot.slane %v853, 4
    %v863 = vadd.f32 %v853, %v862
    %v864 = vrot.slane %v863, 2
    %v865 = vadd.f32 %v863, %v864
    %v866 = vrot.slane %v865, 1
    %v867 = vadd.f32 %v865, %v866
    %v868 = vrot.slane %v854, 4
    %v869 = vadd.f32 %v854, %v868
    %v870 = vrot.slane %v869, 2
    %v871 = vadd.f32 %v869, %v870
    %v872 = vrot.slane %v871, 1
    %v873 = vadd.f32 %v871, %v872
    %v874 = vrot.slane %v855, 4
    %v875 = vadd.f32 %v855, %v874
    %v876 = vrot.slane %v875, 2
    %v877 = vadd.f32 %v875, %v876
    %v878 = vrot.slane %v877, 1
    %v879 = vadd.f32 %v877, %v878
    %v880 = vmul.f32 %v861, %v115
    %v881 = vmul.f32 %v867, %v115
    %v882 = vmul.f32 %v873, %v115
    %v883 = vmul.f32 %v879, %v115
    %v884 = vadd.f32 %v880, 1e-05
    %v885 = vadd.f32 %v881, 1e-05
    %v886 = vadd.f32 %v882, 1e-05
    %v887 = vadd.f32 %v883, 1e-05
    %v888 = vrsqrt.pop %v884
    %v889 = vrsqrt.pop %v885
    %v890 = vrsqrt.pop %v886
    %v891 = vrsqrt.pop %v887
    %v892 = vmul.f32 %v848, %v888
    %v893 = vmul.f32 %v849, %v889
    %v894 = vmul.f32 %v850, %v890
    %v895 = vmul.f32 %v851, %v891
    %v896 = vld [vmem:[%s8] sm:$0xf]
    %v898 = vlaneseq
    %v899 = vshrl.u32 %v898, 7
    %v900 = vsub.s32 0, %v899
    %v901 = vrot.slane %v896, %v900
    %v902 = vlaneseq
    %v903 = vshrl.u32 %v902, 7
    %v904 = vsub.s32 1, %v903
    %v905 = vrot.slane %v896, %v904
    %v906 = vlaneseq
    %v907 = vshrl.u32 %v906, 7
    %v908 = vsub.s32 2, %v907
    %v909 = vrot.slane %v896, %v908
    %v910 = vlaneseq
    %v911 = vshrl.u32 %v910, 7
    %v912 = vsub.s32 3, %v911
    %v913 = vrot.slane %v896, %v912
    %v918 = vmul.f32 %v892, %v901
    %v919 = vmul.f32 %v893, %v905
    %v920 = vmul.f32 %v894, %v909
    %v921 = vmul.f32 %v895, %v913
    %v922 = vld [vmem:[%s9] sm:$0xf]
    %v924 = vlaneseq
    %v925 = vshrl.u32 %v924, 7
    %v926 = vsub.s32 0, %v925
    %v927 = vrot.slane %v922, %v926
    %v928 = vlaneseq
    %v929 = vshrl.u32 %v928, 7
    %v930 = vsub.s32 1, %v929
    %v931 = vrot.slane %v922, %v930
    %v932 = vlaneseq
    %v933 = vshrl.u32 %v932, 7
    %v934 = vsub.s32 2, %v933
    %v935 = vrot.slane %v922, %v934
    %v936 = vlaneseq
    %v937 = vshrl.u32 %v936, 7
    %v938 = vsub.s32 3, %v937
    %v939 = vrot.slane %v922, %v938
    %v944 = vadd.f32 %v918, %v927
    %v945 = vadd.f32 %v919, %v931
    %v946 = vadd.f32 %v920, %v935
    %v947 = vadd.f32 %v921, %v939
    %v948 = vmax.f32 %v944, 0.0
    %v949 = vmax.f32 %v945, 0.0
    %v950 = vmax.f32 %v946, 0.0
    %v951 = vmax.f32 %v947, 0.0
    %v952 = vpack.c.bf16 %v948, %v948
    %v953 = vpack.c.bf16 %v949, %v949
    %v954 = vpack.c.bf16 %v950, %v950
    %v955 = vpack.c.bf16 %v951, %v951
    %v956 = vld [vmem:[%s10] sm:$0xff]
    %v957 = vld [vmem:[%s10 + $0x8] sm:$0xff]
    %v958 = vld [vmem:[%s10 + $0x10] sm:$0xff]
    %v959 = vld [vmem:[%s10 + $0x18] sm:$0xff]
    %v960 = vld [vmem:[%s10 + $0x20] sm:$0xff]
    %v961 = vld [vmem:[%s10 + $0x28] sm:$0xff]
    %v962 = vld [vmem:[%s10 + $0x30] sm:$0xff]
    %v963 = vld [vmem:[%s10 + $0x38] sm:$0xff]
    %v964 = vld [vmem:[%s10 + $0x40] sm:$0xff]
    %v965 = vld [vmem:[%s10 + $0x48] sm:$0xff]
    %v966 = vld [vmem:[%s10 + $0x50] sm:$0xff]
    %v967 = vld [vmem:[%s10 + $0x58] sm:$0xff]
    %v968 = vld [vmem:[%s10 + $0x60] sm:$0xff]
    %v969 = vld [vmem:[%s10 + $0x68] sm:$0xff]
    %v970 = vld [vmem:[%s10 + $0x70] sm:$0xff]
    %v971 = vld [vmem:[%s10 + $0x78] sm:$0xff]
    %v972 = vld [vmem:[%s10 + $0x80] sm:$0xff]
    %v973 = vld [vmem:[%s10 + $0x88] sm:$0xff]
    %v974 = vld [vmem:[%s10 + $0x90] sm:$0xff]
    %v975 = vld [vmem:[%s10 + $0x98] sm:$0xff]
    %v976 = vld [vmem:[%s10 + $0xa0] sm:$0xff]
    %v977 = vld [vmem:[%s10 + $0xa8] sm:$0xff]
    %v978 = vld [vmem:[%s10 + $0xb0] sm:$0xff]
    %v979 = vld [vmem:[%s10 + $0xb8] sm:$0xff]
    %v980 = vld [vmem:[%s10 + $0xc0] sm:$0xff]
    %v981 = vld [vmem:[%s10 + $0xc8] sm:$0xff]
    %v982 = vld [vmem:[%s10 + $0xd0] sm:$0xff]
    %v983 = vld [vmem:[%s10 + $0xd8] sm:$0xff]
    %v984 = vld [vmem:[%s10 + $0xe0] sm:$0xff]
    %v985 = vld [vmem:[%s10 + $0xe8] sm:$0xff]
    %v986 = vld [vmem:[%s10 + $0xf0] sm:$0xff]
    %v987 = vld [vmem:[%s10 + $0xf8] sm:$0xff]
    %v988 = vld [vmem:[%s10 + $0x100] sm:$0xff]
    %v989 = vld [vmem:[%s10 + $0x108] sm:$0xff]
    %v990 = vld [vmem:[%s10 + $0x110] sm:$0xff]
    %v991 = vld [vmem:[%s10 + $0x118] sm:$0xff]
    %v992 = vld [vmem:[%s10 + $0x120] sm:$0xff]
    %v993 = vld [vmem:[%s10 + $0x128] sm:$0xff]
    %v994 = vld [vmem:[%s10 + $0x130] sm:$0xff]
    %v995 = vld [vmem:[%s10 + $0x138] sm:$0xff]
    %v996 = vld [vmem:[%s10 + $0x140] sm:$0xff]
    %v997 = vld [vmem:[%s10 + $0x148] sm:$0xff]
    %v998 = vld [vmem:[%s10 + $0x150] sm:$0xff]
    %v999 = vld [vmem:[%s10 + $0x158] sm:$0xff]
    %v1000 = vld [vmem:[%s10 + $0x160] sm:$0xff]
    %v1001 = vld [vmem:[%s10 + $0x168] sm:$0xff]
    %v1002 = vld [vmem:[%s10 + $0x170] sm:$0xff]
    %v1003 = vld [vmem:[%s10 + $0x178] sm:$0xff]
    %v1004 = vld [vmem:[%s10 + $0x180] sm:$0xff]
    %v1005 = vld [vmem:[%s10 + $0x188] sm:$0xff]
    %v1006 = vld [vmem:[%s10 + $0x190] sm:$0xff]
    %v1007 = vld [vmem:[%s10 + $0x198] sm:$0xff]
    %v1008 = vld [vmem:[%s10 + $0x1a0] sm:$0xff]
    %v1009 = vld [vmem:[%s10 + $0x1a8] sm:$0xff]
    %v1010 = vld [vmem:[%s10 + $0x1b0] sm:$0xff]
    %v1011 = vld [vmem:[%s10 + $0x1b8] sm:$0xff]
    %v1012 = vld [vmem:[%s10 + $0x1c0] sm:$0xff]
    %v1013 = vld [vmem:[%s10 + $0x1c8] sm:$0xff]
    %v1014 = vld [vmem:[%s10 + $0x1d0] sm:$0xff]
    %v1015 = vld [vmem:[%s10 + $0x1d8] sm:$0xff]
    %v1016 = vld [vmem:[%s10 + $0x1e0] sm:$0xff]
    %v1017 = vld [vmem:[%s10 + $0x1e8] sm:$0xff]
    %v1018 = vld [vmem:[%s10 + $0x1f0] sm:$0xff]
    %v1019 = vld [vmem:[%s10 + $0x1f8] sm:$0xff]
    %v1020 = vld [vmem:[%s10 + $0x200] sm:$0xff]
    %v1021 = vld [vmem:[%s10 + $0x208] sm:$0xff]
    %v1022 = vld [vmem:[%s10 + $0x210] sm:$0xff]
    %v1023 = vld [vmem:[%s10 + $0x218] sm:$0xff]
    %v1024 = vld [vmem:[%s10 + $0x220] sm:$0xff]
    %v1025 = vld [vmem:[%s10 + $0x228] sm:$0xff]
    %v1026 = vld [vmem:[%s10 + $0x230] sm:$0xff]
    %v1027 = vld [vmem:[%s10 + $0x238] sm:$0xff]
    %v1028 = vld [vmem:[%s10 + $0x240] sm:$0xff]
    %v1029 = vld [vmem:[%s10 + $0x248] sm:$0xff]
    %v1030 = vld [vmem:[%s10 + $0x250] sm:$0xff]
    %v1031 = vld [vmem:[%s10 + $0x258] sm:$0xff]
    %v1032 = vld [vmem:[%s10 + $0x260] sm:$0xff]
    %v1033 = vld [vmem:[%s10 + $0x268] sm:$0xff]
    %v1034 = vld [vmem:[%s10 + $0x270] sm:$0xff]
    %v1035 = vld [vmem:[%s10 + $0x278] sm:$0xff]
    %v1036 = vld [vmem:[%s10 + $0x280] sm:$0xff]
    %v1037 = vld [vmem:[%s10 + $0x288] sm:$0xff]
    %v1038 = vld [vmem:[%s10 + $0x290] sm:$0xff]
    %v1039 = vld [vmem:[%s10 + $0x298] sm:$0xff]
    %v1040 = vld [vmem:[%s10 + $0x2a0] sm:$0xff]
    %v1041 = vld [vmem:[%s10 + $0x2a8] sm:$0xff]
    %v1042 = vld [vmem:[%s10 + $0x2b0] sm:$0xff]
    %v1043 = vld [vmem:[%s10 + $0x2b8] sm:$0xff]
    %v1044 = vld [vmem:[%s10 + $0x2c0] sm:$0xff]
    %v1045 = vld [vmem:[%s10 + $0x2c8] sm:$0xff]
    %v1046 = vld [vmem:[%s10 + $0x2d0] sm:$0xff]
    %v1047 = vld [vmem:[%s10 + $0x2d8] sm:$0xff]
    %v1048 = vld [vmem:[%s10 + $0x2e0] sm:$0xff]
    %v1049 = vld [vmem:[%s10 + $0x2e8] sm:$0xff]
    %v1050 = vld [vmem:[%s10 + $0x2f0] sm:$0xff]
    %v1051 = vld [vmem:[%s10 + $0x2f8] sm:$0xff]
    %v1052 = vld [vmem:[%s10 + $0x300] sm:$0xff]
    %v1053 = vld [vmem:[%s10 + $0x308] sm:$0xff]
    %v1054 = vld [vmem:[%s10 + $0x310] sm:$0xff]
    %v1055 = vld [vmem:[%s10 + $0x318] sm:$0xff]
    %v1056 = vld [vmem:[%s10 + $0x320] sm:$0xff]
    %v1057 = vld [vmem:[%s10 + $0x328] sm:$0xff]
    %v1058 = vld [vmem:[%s10 + $0x330] sm:$0xff]
    %v1059 = vld [vmem:[%s10 + $0x338] sm:$0xff]
    %v1060 = vld [vmem:[%s10 + $0x340] sm:$0xff]
    %v1061 = vld [vmem:[%s10 + $0x348] sm:$0xff]
    %v1062 = vld [vmem:[%s10 + $0x350] sm:$0xff]
    %v1063 = vld [vmem:[%s10 + $0x358] sm:$0xff]
    %v1064 = vld [vmem:[%s10 + $0x360] sm:$0xff]
    %v1065 = vld [vmem:[%s10 + $0x368] sm:$0xff]
    %v1066 = vld [vmem:[%s10 + $0x370] sm:$0xff]
    %v1067 = vld [vmem:[%s10 + $0x378] sm:$0xff]
    %v1068 = vld [vmem:[%s10 + $0x380] sm:$0xff]
    %v1069 = vld [vmem:[%s10 + $0x388] sm:$0xff]
    %v1070 = vld [vmem:[%s10 + $0x390] sm:$0xff]
    %v1071 = vld [vmem:[%s10 + $0x398] sm:$0xff]
    %v1072 = vld [vmem:[%s10 + $0x3a0] sm:$0xff]
    %v1073 = vld [vmem:[%s10 + $0x3a8] sm:$0xff]
    %v1074 = vld [vmem:[%s10 + $0x3b0] sm:$0xff]
    %v1075 = vld [vmem:[%s10 + $0x3b8] sm:$0xff]
    %v1076 = vld [vmem:[%s10 + $0x3c0] sm:$0xff]
    %v1077 = vld [vmem:[%s10 + $0x3c8] sm:$0xff]
    %v1078 = vld [vmem:[%s10 + $0x3d0] sm:$0xff]
    %v1079 = vld [vmem:[%s10 + $0x3d8] sm:$0xff]
    %v1080 = vld [vmem:[%s10 + $0x3e0] sm:$0xff]
    %v1081 = vld [vmem:[%s10 + $0x3e8] sm:$0xff]
    %v1082 = vld [vmem:[%s10 + $0x3f0] sm:$0xff]
    %v1083 = vld [vmem:[%s10 + $0x3f8] sm:$0xff]
    %v1084 = vld [vmem:[%s10 + $0x400] sm:$0xff]
    %v1085 = vld [vmem:[%s10 + $0x408] sm:$0xff]
    %v1086 = vld [vmem:[%s10 + $0x410] sm:$0xff]
    %v1087 = vld [vmem:[%s10 + $0x418] sm:$0xff]
    %v1088 = vld [vmem:[%s10 + $0x420] sm:$0xff]
    %v1089 = vld [vmem:[%s10 + $0x428] sm:$0xff]
    %v1090 = vld [vmem:[%s10 + $0x430] sm:$0xff]
    %v1091 = vld [vmem:[%s10 + $0x438] sm:$0xff]
    %v1092 = vld [vmem:[%s10 + $0x440] sm:$0xff]
    %v1093 = vld [vmem:[%s10 + $0x448] sm:$0xff]
    %v1094 = vld [vmem:[%s10 + $0x450] sm:$0xff]
    %v1095 = vld [vmem:[%s10 + $0x458] sm:$0xff]
    %v1096 = vld [vmem:[%s10 + $0x460] sm:$0xff]
    %v1097 = vld [vmem:[%s10 + $0x468] sm:$0xff]
    %v1098 = vld [vmem:[%s10 + $0x470] sm:$0xff]
    %v1099 = vld [vmem:[%s10 + $0x478] sm:$0xff]
    %v1100 = vld [vmem:[%s10 + $0x480] sm:$0xff]
    %v1101 = vld [vmem:[%s10 + $0x488] sm:$0xff]
    %v1102 = vld [vmem:[%s10 + $0x490] sm:$0xff]
    %v1103 = vld [vmem:[%s10 + $0x498] sm:$0xff]
    %v1104 = vld [vmem:[%s10 + $0x4a0] sm:$0xff]
    %v1105 = vld [vmem:[%s10 + $0x4a8] sm:$0xff]
    %v1106 = vld [vmem:[%s10 + $0x4b0] sm:$0xff]
    %v1107 = vld [vmem:[%s10 + $0x4b8] sm:$0xff]
    %v1108 = vld [vmem:[%s10 + $0x4c0] sm:$0xff]
    %v1109 = vld [vmem:[%s10 + $0x4c8] sm:$0xff]
    %v1110 = vld [vmem:[%s10 + $0x4d0] sm:$0xff]
    %v1111 = vld [vmem:[%s10 + $0x4d8] sm:$0xff]
    %v1112 = vld [vmem:[%s10 + $0x4e0] sm:$0xff]
    %v1113 = vld [vmem:[%s10 + $0x4e8] sm:$0xff]
    %v1114 = vld [vmem:[%s10 + $0x4f0] sm:$0xff]
    %v1115 = vld [vmem:[%s10 + $0x4f8] sm:$0xff]
    %v1116 = vld [vmem:[%s10 + $0x500] sm:$0xff]
    %v1117 = vld [vmem:[%s10 + $0x508] sm:$0xff]
    %v1118 = vld [vmem:[%s10 + $0x510] sm:$0xff]
    %v1119 = vld [vmem:[%s10 + $0x518] sm:$0xff]
    %v1120 = vld [vmem:[%s10 + $0x520] sm:$0xff]
    %v1121 = vld [vmem:[%s10 + $0x528] sm:$0xff]
    %v1122 = vld [vmem:[%s10 + $0x530] sm:$0xff]
    %v1123 = vld [vmem:[%s10 + $0x538] sm:$0xff]
    %v1124 = vld [vmem:[%s10 + $0x540] sm:$0xff]
    %v1125 = vld [vmem:[%s10 + $0x548] sm:$0xff]
    %v1126 = vld [vmem:[%s10 + $0x550] sm:$0xff]
    %v1127 = vld [vmem:[%s10 + $0x558] sm:$0xff]
    %v1128 = vld [vmem:[%s10 + $0x560] sm:$0xff]
    %v1129 = vld [vmem:[%s10 + $0x568] sm:$0xff]
    %v1130 = vld [vmem:[%s10 + $0x570] sm:$0xff]
    %v1131 = vld [vmem:[%s10 + $0x578] sm:$0xff]
    %v1132 = vld [vmem:[%s10 + $0x580] sm:$0xff]
    %v1133 = vld [vmem:[%s10 + $0x588] sm:$0xff]
    %v1134 = vld [vmem:[%s10 + $0x590] sm:$0xff]
    %v1135 = vld [vmem:[%s10 + $0x598] sm:$0xff]
    %v1136 = vld [vmem:[%s10 + $0x5a0] sm:$0xff]
    %v1137 = vld [vmem:[%s10 + $0x5a8] sm:$0xff]
    %v1138 = vld [vmem:[%s10 + $0x5b0] sm:$0xff]
    %v1139 = vld [vmem:[%s10 + $0x5b8] sm:$0xff]
    %v1140 = vld [vmem:[%s10 + $0x5c0] sm:$0xff]
    %v1141 = vld [vmem:[%s10 + $0x5c8] sm:$0xff]
    %v1142 = vld [vmem:[%s10 + $0x5d0] sm:$0xff]
    %v1143 = vld [vmem:[%s10 + $0x5d8] sm:$0xff]
    %v1144 = vld [vmem:[%s10 + $0x5e0] sm:$0xff]
    %v1145 = vld [vmem:[%s10 + $0x5e8] sm:$0xff]
    %v1146 = vld [vmem:[%s10 + $0x5f0] sm:$0xff]
    %v1147 = vld [vmem:[%s10 + $0x5f8] sm:$0xff]
    %v1148 = vld [vmem:[%s10 + $0x600] sm:$0xff]
    %v1149 = vld [vmem:[%s10 + $0x608] sm:$0xff]
    %v1150 = vld [vmem:[%s10 + $0x610] sm:$0xff]
    %v1151 = vld [vmem:[%s10 + $0x618] sm:$0xff]
    %v1152 = vld [vmem:[%s10 + $0x620] sm:$0xff]
    %v1153 = vld [vmem:[%s10 + $0x628] sm:$0xff]
    %v1154 = vld [vmem:[%s10 + $0x630] sm:$0xff]
    %v1155 = vld [vmem:[%s10 + $0x638] sm:$0xff]
    %v1156 = vld [vmem:[%s10 + $0x640] sm:$0xff]
    %v1157 = vld [vmem:[%s10 + $0x648] sm:$0xff]
    %v1158 = vld [vmem:[%s10 + $0x650] sm:$0xff]
    %v1159 = vld [vmem:[%s10 + $0x658] sm:$0xff]
    %v1160 = vld [vmem:[%s10 + $0x660] sm:$0xff]
    %v1161 = vld [vmem:[%s10 + $0x668] sm:$0xff]
    %v1162 = vld [vmem:[%s10 + $0x670] sm:$0xff]
    %v1163 = vld [vmem:[%s10 + $0x678] sm:$0xff]
    %v1164 = vld [vmem:[%s10 + $0x680] sm:$0xff]
    %v1165 = vld [vmem:[%s10 + $0x688] sm:$0xff]
    %v1166 = vld [vmem:[%s10 + $0x690] sm:$0xff]
    %v1167 = vld [vmem:[%s10 + $0x698] sm:$0xff]
    %v1168 = vld [vmem:[%s10 + $0x6a0] sm:$0xff]
    %v1169 = vld [vmem:[%s10 + $0x6a8] sm:$0xff]
    %v1170 = vld [vmem:[%s10 + $0x6b0] sm:$0xff]
    %v1171 = vld [vmem:[%s10 + $0x6b8] sm:$0xff]
    %v1172 = vld [vmem:[%s10 + $0x6c0] sm:$0xff]
    %v1173 = vld [vmem:[%s10 + $0x6c8] sm:$0xff]
    %v1174 = vld [vmem:[%s10 + $0x6d0] sm:$0xff]
    %v1175 = vld [vmem:[%s10 + $0x6d8] sm:$0xff]
    %v1176 = vld [vmem:[%s10 + $0x6e0] sm:$0xff]
    %v1177 = vld [vmem:[%s10 + $0x6e8] sm:$0xff]
    %v1178 = vld [vmem:[%s10 + $0x6f0] sm:$0xff]
    %v1179 = vld [vmem:[%s10 + $0x6f8] sm:$0xff]
    %v1180 = vld [vmem:[%s10 + $0x700] sm:$0xff]
    %v1181 = vld [vmem:[%s10 + $0x708] sm:$0xff]
    %v1182 = vld [vmem:[%s10 + $0x710] sm:$0xff]
    %v1183 = vld [vmem:[%s10 + $0x718] sm:$0xff]
    %v1184 = vld [vmem:[%s10 + $0x720] sm:$0xff]
    %v1185 = vld [vmem:[%s10 + $0x728] sm:$0xff]
    %v1186 = vld [vmem:[%s10 + $0x730] sm:$0xff]
    %v1187 = vld [vmem:[%s10 + $0x738] sm:$0xff]
    %v1188 = vld [vmem:[%s10 + $0x740] sm:$0xff]
    %v1189 = vld [vmem:[%s10 + $0x748] sm:$0xff]
    %v1190 = vld [vmem:[%s10 + $0x750] sm:$0xff]
    %v1191 = vld [vmem:[%s10 + $0x758] sm:$0xff]
    %v1192 = vld [vmem:[%s10 + $0x760] sm:$0xff]
    %v1193 = vld [vmem:[%s10 + $0x768] sm:$0xff]
    %v1194 = vld [vmem:[%s10 + $0x770] sm:$0xff]
    %v1195 = vld [vmem:[%s10 + $0x778] sm:$0xff]
    %v1196 = vld [vmem:[%s10 + $0x780] sm:$0xff]
    %v1197 = vld [vmem:[%s10 + $0x788] sm:$0xff]
    %v1198 = vld [vmem:[%s10 + $0x790] sm:$0xff]
    %v1199 = vld [vmem:[%s10 + $0x798] sm:$0xff]
    %v1200 = vld [vmem:[%s10 + $0x7a0] sm:$0xff]
    %v1201 = vld [vmem:[%s10 + $0x7a8] sm:$0xff]
    %v1202 = vld [vmem:[%s10 + $0x7b0] sm:$0xff]
    %v1203 = vld [vmem:[%s10 + $0x7b8] sm:$0xff]
    %v1204 = vld [vmem:[%s10 + $0x7c0] sm:$0xff]
    %v1205 = vld [vmem:[%s10 + $0x7c8] sm:$0xff]
    %v1206 = vld [vmem:[%s10 + $0x7d0] sm:$0xff]
    %v1207 = vld [vmem:[%s10 + $0x7d8] sm:$0xff]
    %v1208 = vld [vmem:[%s10 + $0x7e0] sm:$0xff]
    %v1209 = vld [vmem:[%s10 + $0x7e8] sm:$0xff]
    %v1210 = vld [vmem:[%s10 + $0x7f0] sm:$0xff]
    %v1211 = vld [vmem:[%s10 + $0x7f8] sm:$0xff]
    %v1468 = vunpack.c.l.b16 %v956
    %v1469 = vunpack.c.h.b16 %v956
    %v1470 = vunpack.c.l.b16 %v957
    %v1471 = vunpack.c.h.b16 %v957
    %v1472 = vunpack.c.l.b16 %v958
    %v1473 = vunpack.c.h.b16 %v958
    %v1474 = vunpack.c.l.b16 %v959
    %v1475 = vunpack.c.h.b16 %v959
    %v1476 = vunpack.c.l.b16 %v960
    %v1477 = vunpack.c.h.b16 %v960
    %v1478 = vunpack.c.l.b16 %v961
    %v1479 = vunpack.c.h.b16 %v961
    %v1480 = vunpack.c.l.b16 %v962
    %v1481 = vunpack.c.h.b16 %v962
    %v1482 = vunpack.c.l.b16 %v963
    %v1483 = vunpack.c.h.b16 %v963
    %v1484 = vunpack.c.l.b16 %v964
    %v1485 = vunpack.c.h.b16 %v964
    %v1486 = vunpack.c.l.b16 %v965
    %v1487 = vunpack.c.h.b16 %v965
    %v1488 = vunpack.c.l.b16 %v966
    %v1489 = vunpack.c.h.b16 %v966
    %v1490 = vunpack.c.l.b16 %v967
    %v1491 = vunpack.c.h.b16 %v967
    %v1492 = vunpack.c.l.b16 %v968
    %v1493 = vunpack.c.h.b16 %v968
    %v1494 = vunpack.c.l.b16 %v969
    %v1495 = vunpack.c.h.b16 %v969
    %v1496 = vunpack.c.l.b16 %v970
    %v1497 = vunpack.c.h.b16 %v970
    %v1498 = vunpack.c.l.b16 %v971
    %v1499 = vunpack.c.h.b16 %v971
    %v1500 = vunpack.c.l.b16 %v972
    %v1501 = vunpack.c.h.b16 %v972
    %v1502 = vunpack.c.l.b16 %v973
    %v1503 = vunpack.c.h.b16 %v973
    %v1504 = vunpack.c.l.b16 %v974
    %v1505 = vunpack.c.h.b16 %v974
    %v1506 = vunpack.c.l.b16 %v975
    %v1507 = vunpack.c.h.b16 %v975
    %v1508 = vunpack.c.l.b16 %v976
    %v1509 = vunpack.c.h.b16 %v976
    %v1510 = vunpack.c.l.b16 %v977
    %v1511 = vunpack.c.h.b16 %v977
    %v1512 = vunpack.c.l.b16 %v978
    %v1513 = vunpack.c.h.b16 %v978
    %v1514 = vunpack.c.l.b16 %v979
    %v1515 = vunpack.c.h.b16 %v979
    %v1516 = vunpack.c.l.b16 %v980
    %v1517 = vunpack.c.h.b16 %v980
    %v1518 = vunpack.c.l.b16 %v981
    %v1519 = vunpack.c.h.b16 %v981
    %v1520 = vunpack.c.l.b16 %v982
    %v1521 = vunpack.c.h.b16 %v982
    %v1522 = vunpack.c.l.b16 %v983
    %v1523 = vunpack.c.h.b16 %v983
    %v1524 = vunpack.c.l.b16 %v984
    %v1525 = vunpack.c.h.b16 %v984
    %v1526 = vunpack.c.l.b16 %v985
    %v1527 = vunpack.c.h.b16 %v985
    %v1528 = vunpack.c.l.b16 %v986
    %v1529 = vunpack.c.h.b16 %v986
    %v1530 = vunpack.c.l.b16 %v987
    %v1531 = vunpack.c.h.b16 %v987
    %v1532 = vunpack.c.l.b16 %v988
    %v1533 = vunpack.c.h.b16 %v988
    %v1534 = vunpack.c.l.b16 %v989
    %v1535 = vunpack.c.h.b16 %v989
    %v1536 = vunpack.c.l.b16 %v990
    %v1537 = vunpack.c.h.b16 %v990
    %v1538 = vunpack.c.l.b16 %v991
    %v1539 = vunpack.c.h.b16 %v991
    %v1540 = vunpack.c.l.b16 %v992
    %v1541 = vunpack.c.h.b16 %v992
    %v1542 = vunpack.c.l.b16 %v993
    %v1543 = vunpack.c.h.b16 %v993
    %v1544 = vunpack.c.l.b16 %v994
    %v1545 = vunpack.c.h.b16 %v994
    %v1546 = vunpack.c.l.b16 %v995
    %v1547 = vunpack.c.h.b16 %v995
    %v1548 = vunpack.c.l.b16 %v996
    %v1549 = vunpack.c.h.b16 %v996
    %v1550 = vunpack.c.l.b16 %v997
    %v1551 = vunpack.c.h.b16 %v997
    %v1552 = vunpack.c.l.b16 %v998
    %v1553 = vunpack.c.h.b16 %v998
    %v1554 = vunpack.c.l.b16 %v999
    %v1555 = vunpack.c.h.b16 %v999
    %v1556 = vunpack.c.l.b16 %v1000
    %v1557 = vunpack.c.h.b16 %v1000
    %v1558 = vunpack.c.l.b16 %v1001
    %v1559 = vunpack.c.h.b16 %v1001
    %v1560 = vunpack.c.l.b16 %v1002
    %v1561 = vunpack.c.h.b16 %v1002
    %v1562 = vunpack.c.l.b16 %v1003
    %v1563 = vunpack.c.h.b16 %v1003
    %v1564 = vunpack.c.l.b16 %v1004
    %v1565 = vunpack.c.h.b16 %v1004
    %v1566 = vunpack.c.l.b16 %v1005
    %v1567 = vunpack.c.h.b16 %v1005
    %v1568 = vunpack.c.l.b16 %v1006
    %v1569 = vunpack.c.h.b16 %v1006
    %v1570 = vunpack.c.l.b16 %v1007
    %v1571 = vunpack.c.h.b16 %v1007
    %v1572 = vunpack.c.l.b16 %v1008
    %v1573 = vunpack.c.h.b16 %v1008
    %v1574 = vunpack.c.l.b16 %v1009
    %v1575 = vunpack.c.h.b16 %v1009
    %v1576 = vunpack.c.l.b16 %v1010
    %v1577 = vunpack.c.h.b16 %v1010
    %v1578 = vunpack.c.l.b16 %v1011
    %v1579 = vunpack.c.h.b16 %v1011
    %v1580 = vunpack.c.l.b16 %v1012
    %v1581 = vunpack.c.h.b16 %v1012
    %v1582 = vunpack.c.l.b16 %v1013
    %v1583 = vunpack.c.h.b16 %v1013
    %v1584 = vunpack.c.l.b16 %v1014
    %v1585 = vunpack.c.h.b16 %v1014
    %v1586 = vunpack.c.l.b16 %v1015
    %v1587 = vunpack.c.h.b16 %v1015
    %v1588 = vunpack.c.l.b16 %v1016
    %v1589 = vunpack.c.h.b16 %v1016
    %v1590 = vunpack.c.l.b16 %v1017
    %v1591 = vunpack.c.h.b16 %v1017
    %v1592 = vunpack.c.l.b16 %v1018
    %v1593 = vunpack.c.h.b16 %v1018
    %v1594 = vunpack.c.l.b16 %v1019
    %v1595 = vunpack.c.h.b16 %v1019
    %v1596 = vunpack.c.l.b16 %v1020
    %v1597 = vunpack.c.h.b16 %v1020
    %v1598 = vunpack.c.l.b16 %v1021
    %v1599 = vunpack.c.h.b16 %v1021
    %v1600 = vunpack.c.l.b16 %v1022
    %v1601 = vunpack.c.h.b16 %v1022
    %v1602 = vunpack.c.l.b16 %v1023
    %v1603 = vunpack.c.h.b16 %v1023
    %v1604 = vunpack.c.l.b16 %v1024
    %v1605 = vunpack.c.h.b16 %v1024
    %v1606 = vunpack.c.l.b16 %v1025
    %v1607 = vunpack.c.h.b16 %v1025
    %v1608 = vunpack.c.l.b16 %v1026
    %v1609 = vunpack.c.h.b16 %v1026
    %v1610 = vunpack.c.l.b16 %v1027
    %v1611 = vunpack.c.h.b16 %v1027
    %v1612 = vunpack.c.l.b16 %v1028
    %v1613 = vunpack.c.h.b16 %v1028
    %v1614 = vunpack.c.l.b16 %v1029
    %v1615 = vunpack.c.h.b16 %v1029
    %v1616 = vunpack.c.l.b16 %v1030
    %v1617 = vunpack.c.h.b16 %v1030
    %v1618 = vunpack.c.l.b16 %v1031
    %v1619 = vunpack.c.h.b16 %v1031
    %v1620 = vunpack.c.l.b16 %v1032
    %v1621 = vunpack.c.h.b16 %v1032
    %v1622 = vunpack.c.l.b16 %v1033
    %v1623 = vunpack.c.h.b16 %v1033
    %v1624 = vunpack.c.l.b16 %v1034
    %v1625 = vunpack.c.h.b16 %v1034
    %v1626 = vunpack.c.l.b16 %v1035
    %v1627 = vunpack.c.h.b16 %v1035
    %v1628 = vunpack.c.l.b16 %v1036
    %v1629 = vunpack.c.h.b16 %v1036
    %v1630 = vunpack.c.l.b16 %v1037
    %v1631 = vunpack.c.h.b16 %v1037
    %v1632 = vunpack.c.l.b16 %v1038
    %v1633 = vunpack.c.h.b16 %v1038
    %v1634 = vunpack.c.l.b16 %v1039
    %v1635 = vunpack.c.h.b16 %v1039
    %v1636 = vunpack.c.l.b16 %v1040
    %v1637 = vunpack.c.h.b16 %v1040
    %v1638 = vunpack.c.l.b16 %v1041
    %v1639 = vunpack.c.h.b16 %v1041
    %v1640 = vunpack.c.l.b16 %v1042
    %v1641 = vunpack.c.h.b16 %v1042
    %v1642 = vunpack.c.l.b16 %v1043
    %v1643 = vunpack.c.h.b16 %v1043
    %v1644 = vunpack.c.l.b16 %v1044
    %v1645 = vunpack.c.h.b16 %v1044
    %v1646 = vunpack.c.l.b16 %v1045
    %v1647 = vunpack.c.h.b16 %v1045
    %v1648 = vunpack.c.l.b16 %v1046
    %v1649 = vunpack.c.h.b16 %v1046
    %v1650 = vunpack.c.l.b16 %v1047
    %v1651 = vunpack.c.h.b16 %v1047
    %v1652 = vunpack.c.l.b16 %v1048
    %v1653 = vunpack.c.h.b16 %v1048
    %v1654 = vunpack.c.l.b16 %v1049
    %v1655 = vunpack.c.h.b16 %v1049
    %v1656 = vunpack.c.l.b16 %v1050
    %v1657 = vunpack.c.h.b16 %v1050
    %v1658 = vunpack.c.l.b16 %v1051
    %v1659 = vunpack.c.h.b16 %v1051
    %v1660 = vunpack.c.l.b16 %v1052
    %v1661 = vunpack.c.h.b16 %v1052
    %v1662 = vunpack.c.l.b16 %v1053
    %v1663 = vunpack.c.h.b16 %v1053
    %v1664 = vunpack.c.l.b16 %v1054
    %v1665 = vunpack.c.h.b16 %v1054
    %v1666 = vunpack.c.l.b16 %v1055
    %v1667 = vunpack.c.h.b16 %v1055
    %v1668 = vunpack.c.l.b16 %v1056
    %v1669 = vunpack.c.h.b16 %v1056
    %v1670 = vunpack.c.l.b16 %v1057
    %v1671 = vunpack.c.h.b16 %v1057
    %v1672 = vunpack.c.l.b16 %v1058
    %v1673 = vunpack.c.h.b16 %v1058
    %v1674 = vunpack.c.l.b16 %v1059
    %v1675 = vunpack.c.h.b16 %v1059
    %v1676 = vunpack.c.l.b16 %v1060
    %v1677 = vunpack.c.h.b16 %v1060
    %v1678 = vunpack.c.l.b16 %v1061
    %v1679 = vunpack.c.h.b16 %v1061
    %v1680 = vunpack.c.l.b16 %v1062
    %v1681 = vunpack.c.h.b16 %v1062
    %v1682 = vunpack.c.l.b16 %v1063
    %v1683 = vunpack.c.h.b16 %v1063
    %v1684 = vunpack.c.l.b16 %v1064
    %v1685 = vunpack.c.h.b16 %v1064
    %v1686 = vunpack.c.l.b16 %v1065
    %v1687 = vunpack.c.h.b16 %v1065
    %v1688 = vunpack.c.l.b16 %v1066
    %v1689 = vunpack.c.h.b16 %v1066
    %v1690 = vunpack.c.l.b16 %v1067
    %v1691 = vunpack.c.h.b16 %v1067
    %v1692 = vunpack.c.l.b16 %v1068
    %v1693 = vunpack.c.h.b16 %v1068
    %v1694 = vunpack.c.l.b16 %v1069
    %v1695 = vunpack.c.h.b16 %v1069
    %v1696 = vunpack.c.l.b16 %v1070
    %v1697 = vunpack.c.h.b16 %v1070
    %v1698 = vunpack.c.l.b16 %v1071
    %v1699 = vunpack.c.h.b16 %v1071
    %v1700 = vunpack.c.l.b16 %v1072
    %v1701 = vunpack.c.h.b16 %v1072
    %v1702 = vunpack.c.l.b16 %v1073
    %v1703 = vunpack.c.h.b16 %v1073
    %v1704 = vunpack.c.l.b16 %v1074
    %v1705 = vunpack.c.h.b16 %v1074
    %v1706 = vunpack.c.l.b16 %v1075
    %v1707 = vunpack.c.h.b16 %v1075
    %v1708 = vunpack.c.l.b16 %v1076
    %v1709 = vunpack.c.h.b16 %v1076
    %v1710 = vunpack.c.l.b16 %v1077
    %v1711 = vunpack.c.h.b16 %v1077
    %v1712 = vunpack.c.l.b16 %v1078
    %v1713 = vunpack.c.h.b16 %v1078
    %v1714 = vunpack.c.l.b16 %v1079
    %v1715 = vunpack.c.h.b16 %v1079
    %v1716 = vunpack.c.l.b16 %v1080
    %v1717 = vunpack.c.h.b16 %v1080
    %v1718 = vunpack.c.l.b16 %v1081
    %v1719 = vunpack.c.h.b16 %v1081
    %v1720 = vunpack.c.l.b16 %v1082
    %v1721 = vunpack.c.h.b16 %v1082
    %v1722 = vunpack.c.l.b16 %v1083
    %v1723 = vunpack.c.h.b16 %v1083
    %v1724 = vunpack.c.l.b16 %v1084
    %v1725 = vunpack.c.h.b16 %v1084
    %v1726 = vunpack.c.l.b16 %v1085
    %v1727 = vunpack.c.h.b16 %v1085
    %v1728 = vunpack.c.l.b16 %v1086
    %v1729 = vunpack.c.h.b16 %v1086
    %v1730 = vunpack.c.l.b16 %v1087
    %v1731 = vunpack.c.h.b16 %v1087
    %v1732 = vunpack.c.l.b16 %v1088
    %v1733 = vunpack.c.h.b16 %v1088
    %v1734 = vunpack.c.l.b16 %v1089
    %v1735 = vunpack.c.h.b16 %v1089
    %v1736 = vunpack.c.l.b16 %v1090
    %v1737 = vunpack.c.h.b16 %v1090
    %v1738 = vunpack.c.l.b16 %v1091
    %v1739 = vunpack.c.h.b16 %v1091
    %v1740 = vunpack.c.l.b16 %v1092
    %v1741 = vunpack.c.h.b16 %v1092
    %v1742 = vunpack.c.l.b16 %v1093
    %v1743 = vunpack.c.h.b16 %v1093
    %v1744 = vunpack.c.l.b16 %v1094
    %v1745 = vunpack.c.h.b16 %v1094
    %v1746 = vunpack.c.l.b16 %v1095
    %v1747 = vunpack.c.h.b16 %v1095
    %v1748 = vunpack.c.l.b16 %v1096
    %v1749 = vunpack.c.h.b16 %v1096
    %v1750 = vunpack.c.l.b16 %v1097
    %v1751 = vunpack.c.h.b16 %v1097
    %v1752 = vunpack.c.l.b16 %v1098
    %v1753 = vunpack.c.h.b16 %v1098
    %v1754 = vunpack.c.l.b16 %v1099
    %v1755 = vunpack.c.h.b16 %v1099
    %v1756 = vunpack.c.l.b16 %v1100
    %v1757 = vunpack.c.h.b16 %v1100
    %v1758 = vunpack.c.l.b16 %v1101
    %v1759 = vunpack.c.h.b16 %v1101
    %v1760 = vunpack.c.l.b16 %v1102
    %v1761 = vunpack.c.h.b16 %v1102
    %v1762 = vunpack.c.l.b16 %v1103
    %v1763 = vunpack.c.h.b16 %v1103
    %v1764 = vunpack.c.l.b16 %v1104
    %v1765 = vunpack.c.h.b16 %v1104
    %v1766 = vunpack.c.l.b16 %v1105
    %v1767 = vunpack.c.h.b16 %v1105
    %v1768 = vunpack.c.l.b16 %v1106
    %v1769 = vunpack.c.h.b16 %v1106
    %v1770 = vunpack.c.l.b16 %v1107
    %v1771 = vunpack.c.h.b16 %v1107
    %v1772 = vunpack.c.l.b16 %v1108
    %v1773 = vunpack.c.h.b16 %v1108
    %v1774 = vunpack.c.l.b16 %v1109
    %v1775 = vunpack.c.h.b16 %v1109
    %v1776 = vunpack.c.l.b16 %v1110
    %v1777 = vunpack.c.h.b16 %v1110
    %v1778 = vunpack.c.l.b16 %v1111
    %v1779 = vunpack.c.h.b16 %v1111
    %v1780 = vunpack.c.l.b16 %v1112
    %v1781 = vunpack.c.h.b16 %v1112
    %v1782 = vunpack.c.l.b16 %v1113
    %v1783 = vunpack.c.h.b16 %v1113
    %v1784 = vunpack.c.l.b16 %v1114
    %v1785 = vunpack.c.h.b16 %v1114
    %v1786 = vunpack.c.l.b16 %v1115
    %v1787 = vunpack.c.h.b16 %v1115
    %v1788 = vunpack.c.l.b16 %v1116
    %v1789 = vunpack.c.h.b16 %v1116
    %v1790 = vunpack.c.l.b16 %v1117
    %v1791 = vunpack.c.h.b16 %v1117
    %v1792 = vunpack.c.l.b16 %v1118
    %v1793 = vunpack.c.h.b16 %v1118
    %v1794 = vunpack.c.l.b16 %v1119
    %v1795 = vunpack.c.h.b16 %v1119
    %v1796 = vunpack.c.l.b16 %v1120
    %v1797 = vunpack.c.h.b16 %v1120
    %v1798 = vunpack.c.l.b16 %v1121
    %v1799 = vunpack.c.h.b16 %v1121
    %v1800 = vunpack.c.l.b16 %v1122
    %v1801 = vunpack.c.h.b16 %v1122
    %v1802 = vunpack.c.l.b16 %v1123
    %v1803 = vunpack.c.h.b16 %v1123
    %v1804 = vunpack.c.l.b16 %v1124
    %v1805 = vunpack.c.h.b16 %v1124
    %v1806 = vunpack.c.l.b16 %v1125
    %v1807 = vunpack.c.h.b16 %v1125
    %v1808 = vunpack.c.l.b16 %v1126
    %v1809 = vunpack.c.h.b16 %v1126
    %v1810 = vunpack.c.l.b16 %v1127
    %v1811 = vunpack.c.h.b16 %v1127
    %v1812 = vunpack.c.l.b16 %v1128
    %v1813 = vunpack.c.h.b16 %v1128
    %v1814 = vunpack.c.l.b16 %v1129
    %v1815 = vunpack.c.h.b16 %v1129
    %v1816 = vunpack.c.l.b16 %v1130
    %v1817 = vunpack.c.h.b16 %v1130
    %v1818 = vunpack.c.l.b16 %v1131
    %v1819 = vunpack.c.h.b16 %v1131
    %v1820 = vunpack.c.l.b16 %v1132
    %v1821 = vunpack.c.h.b16 %v1132
    %v1822 = vunpack.c.l.b16 %v1133
    %v1823 = vunpack.c.h.b16 %v1133
    %v1824 = vunpack.c.l.b16 %v1134
    %v1825 = vunpack.c.h.b16 %v1134
    %v1826 = vunpack.c.l.b16 %v1135
    %v1827 = vunpack.c.h.b16 %v1135
    %v1828 = vunpack.c.l.b16 %v1136
    %v1829 = vunpack.c.h.b16 %v1136
    %v1830 = vunpack.c.l.b16 %v1137
    %v1831 = vunpack.c.h.b16 %v1137
    %v1832 = vunpack.c.l.b16 %v1138
    %v1833 = vunpack.c.h.b16 %v1138
    %v1834 = vunpack.c.l.b16 %v1139
    %v1835 = vunpack.c.h.b16 %v1139
    %v1836 = vunpack.c.l.b16 %v1140
    %v1837 = vunpack.c.h.b16 %v1140
    %v1838 = vunpack.c.l.b16 %v1141
    %v1839 = vunpack.c.h.b16 %v1141
    %v1840 = vunpack.c.l.b16 %v1142
    %v1841 = vunpack.c.h.b16 %v1142
    %v1842 = vunpack.c.l.b16 %v1143
    %v1843 = vunpack.c.h.b16 %v1143
    %v1844 = vunpack.c.l.b16 %v1144
    %v1845 = vunpack.c.h.b16 %v1144
    %v1846 = vunpack.c.l.b16 %v1145
    %v1847 = vunpack.c.h.b16 %v1145
    %v1848 = vunpack.c.l.b16 %v1146
    %v1849 = vunpack.c.h.b16 %v1146
    %v1850 = vunpack.c.l.b16 %v1147
    %v1851 = vunpack.c.h.b16 %v1147
    %v1852 = vunpack.c.l.b16 %v1148
    %v1853 = vunpack.c.h.b16 %v1148
    %v1854 = vunpack.c.l.b16 %v1149
    %v1855 = vunpack.c.h.b16 %v1149
    %v1856 = vunpack.c.l.b16 %v1150
    %v1857 = vunpack.c.h.b16 %v1150
    %v1858 = vunpack.c.l.b16 %v1151
    %v1859 = vunpack.c.h.b16 %v1151
    %v1860 = vunpack.c.l.b16 %v1152
    %v1861 = vunpack.c.h.b16 %v1152
    %v1862 = vunpack.c.l.b16 %v1153
    %v1863 = vunpack.c.h.b16 %v1153
    %v1864 = vunpack.c.l.b16 %v1154
    %v1865 = vunpack.c.h.b16 %v1154
    %v1866 = vunpack.c.l.b16 %v1155
    %v1867 = vunpack.c.h.b16 %v1155
    %v1868 = vunpack.c.l.b16 %v1156
    %v1869 = vunpack.c.h.b16 %v1156
    %v1870 = vunpack.c.l.b16 %v1157
    %v1871 = vunpack.c.h.b16 %v1157
    %v1872 = vunpack.c.l.b16 %v1158
    %v1873 = vunpack.c.h.b16 %v1158
    %v1874 = vunpack.c.l.b16 %v1159
    %v1875 = vunpack.c.h.b16 %v1159
    %v1876 = vunpack.c.l.b16 %v1160
    %v1877 = vunpack.c.h.b16 %v1160
    %v1878 = vunpack.c.l.b16 %v1161
    %v1879 = vunpack.c.h.b16 %v1161
    %v1880 = vunpack.c.l.b16 %v1162
    %v1881 = vunpack.c.h.b16 %v1162
    %v1882 = vunpack.c.l.b16 %v1163
    %v1883 = vunpack.c.h.b16 %v1163
    %v1884 = vunpack.c.l.b16 %v1164
    %v1885 = vunpack.c.h.b16 %v1164
    %v1886 = vunpack.c.l.b16 %v1165
    %v1887 = vunpack.c.h.b16 %v1165
    %v1888 = vunpack.c.l.b16 %v1166
    %v1889 = vunpack.c.h.b16 %v1166
    %v1890 = vunpack.c.l.b16 %v1167
    %v1891 = vunpack.c.h.b16 %v1167
    %v1892 = vunpack.c.l.b16 %v1168
    %v1893 = vunpack.c.h.b16 %v1168
    %v1894 = vunpack.c.l.b16 %v1169
    %v1895 = vunpack.c.h.b16 %v1169
    %v1896 = vunpack.c.l.b16 %v1170
    %v1897 = vunpack.c.h.b16 %v1170
    %v1898 = vunpack.c.l.b16 %v1171
    %v1899 = vunpack.c.h.b16 %v1171
    %v1900 = vunpack.c.l.b16 %v1172
    %v1901 = vunpack.c.h.b16 %v1172
    %v1902 = vunpack.c.l.b16 %v1173
    %v1903 = vunpack.c.h.b16 %v1173
    %v1904 = vunpack.c.l.b16 %v1174
    %v1905 = vunpack.c.h.b16 %v1174
    %v1906 = vunpack.c.l.b16 %v1175
    %v1907 = vunpack.c.h.b16 %v1175
    %v1908 = vunpack.c.l.b16 %v1176
    %v1909 = vunpack.c.h.b16 %v1176
    %v1910 = vunpack.c.l.b16 %v1177
    %v1911 = vunpack.c.h.b16 %v1177
    %v1912 = vunpack.c.l.b16 %v1178
    %v1913 = vunpack.c.h.b16 %v1178
    %v1914 = vunpack.c.l.b16 %v1179
    %v1915 = vunpack.c.h.b16 %v1179
    %v1916 = vunpack.c.l.b16 %v1180
    %v1917 = vunpack.c.h.b16 %v1180
    %v1918 = vunpack.c.l.b16 %v1181
    %v1919 = vunpack.c.h.b16 %v1181
    %v1920 = vunpack.c.l.b16 %v1182
    %v1921 = vunpack.c.h.b16 %v1182
    %v1922 = vunpack.c.l.b16 %v1183
    %v1923 = vunpack.c.h.b16 %v1183
    %v1924 = vunpack.c.l.b16 %v1184
    %v1925 = vunpack.c.h.b16 %v1184
    %v1926 = vunpack.c.l.b16 %v1185
    %v1927 = vunpack.c.h.b16 %v1185
    %v1928 = vunpack.c.l.b16 %v1186
    %v1929 = vunpack.c.h.b16 %v1186
    %v1930 = vunpack.c.l.b16 %v1187
    %v1931 = vunpack.c.h.b16 %v1187
    %v1932 = vunpack.c.l.b16 %v1188
    %v1933 = vunpack.c.h.b16 %v1188
    %v1934 = vunpack.c.l.b16 %v1189
    %v1935 = vunpack.c.h.b16 %v1189
    %v1936 = vunpack.c.l.b16 %v1190
    %v1937 = vunpack.c.h.b16 %v1190
    %v1938 = vunpack.c.l.b16 %v1191
    %v1939 = vunpack.c.h.b16 %v1191
    %v1940 = vunpack.c.l.b16 %v1192
    %v1941 = vunpack.c.h.b16 %v1192
    %v1942 = vunpack.c.l.b16 %v1193
    %v1943 = vunpack.c.h.b16 %v1193
    %v1944 = vunpack.c.l.b16 %v1194
    %v1945 = vunpack.c.h.b16 %v1194
    %v1946 = vunpack.c.l.b16 %v1195
    %v1947 = vunpack.c.h.b16 %v1195
    %v1948 = vunpack.c.l.b16 %v1196
    %v1949 = vunpack.c.h.b16 %v1196
    %v1950 = vunpack.c.l.b16 %v1197
    %v1951 = vunpack.c.h.b16 %v1197
    %v1952 = vunpack.c.l.b16 %v1198
    %v1953 = vunpack.c.h.b16 %v1198
    %v1954 = vunpack.c.l.b16 %v1199
    %v1955 = vunpack.c.h.b16 %v1199
    %v1956 = vunpack.c.l.b16 %v1200
    %v1957 = vunpack.c.h.b16 %v1200
    %v1958 = vunpack.c.l.b16 %v1201
    %v1959 = vunpack.c.h.b16 %v1201
    %v1960 = vunpack.c.l.b16 %v1202
    %v1961 = vunpack.c.h.b16 %v1202
    %v1962 = vunpack.c.l.b16 %v1203
    %v1963 = vunpack.c.h.b16 %v1203
    %v1964 = vunpack.c.l.b16 %v1204
    %v1965 = vunpack.c.h.b16 %v1204
    %v1966 = vunpack.c.l.b16 %v1205
    %v1967 = vunpack.c.h.b16 %v1205
    %v1968 = vunpack.c.l.b16 %v1206
    %v1969 = vunpack.c.h.b16 %v1206
    %v1970 = vunpack.c.l.b16 %v1207
    %v1971 = vunpack.c.h.b16 %v1207
    %v1972 = vunpack.c.l.b16 %v1208
    %v1973 = vunpack.c.h.b16 %v1208
    %v1974 = vunpack.c.l.b16 %v1209
    %v1975 = vunpack.c.h.b16 %v1209
    %v1976 = vunpack.c.l.b16 %v1210
    %v1977 = vunpack.c.h.b16 %v1210
    %v1978 = vunpack.c.l.b16 %v1211
    %v1979 = vunpack.c.h.b16 %v1211
    %v1980 = vpack.c.b16 %v1476, %v1468
    %v1981 = vpack.c.b16 %v1477, %v1469
    %v1982 = vpack.c.b16 %v1478, %v1470
    %v1983 = vpack.c.b16 %v1479, %v1471
    %v1984 = vpack.c.b16 %v1480, %v1472
    %v1985 = vpack.c.b16 %v1481, %v1473
    %v1986 = vpack.c.b16 %v1482, %v1474
    %v1987 = vpack.c.b16 %v1483, %v1475
    %v1988 = vpack.c.b16 %v1492, %v1484
    %v1989 = vpack.c.b16 %v1493, %v1485
    %v1990 = vpack.c.b16 %v1494, %v1486
    %v1991 = vpack.c.b16 %v1495, %v1487
    %v1992 = vpack.c.b16 %v1496, %v1488
    %v1993 = vpack.c.b16 %v1497, %v1489
    %v1994 = vpack.c.b16 %v1498, %v1490
    %v1995 = vpack.c.b16 %v1499, %v1491
    %v1996 = vpack.c.b16 %v1508, %v1500
    %v1997 = vpack.c.b16 %v1509, %v1501
    %v1998 = vpack.c.b16 %v1510, %v1502
    %v1999 = vpack.c.b16 %v1511, %v1503
    %v2000 = vpack.c.b16 %v1512, %v1504
    %v2001 = vpack.c.b16 %v1513, %v1505
    %v2002 = vpack.c.b16 %v1514, %v1506
    %v2003 = vpack.c.b16 %v1515, %v1507
    %v2004 = vpack.c.b16 %v1524, %v1516
    %v2005 = vpack.c.b16 %v1525, %v1517
    %v2006 = vpack.c.b16 %v1526, %v1518
    %v2007 = vpack.c.b16 %v1527, %v1519
    %v2008 = vpack.c.b16 %v1528, %v1520
    %v2009 = vpack.c.b16 %v1529, %v1521
    %v2010 = vpack.c.b16 %v1530, %v1522
    %v2011 = vpack.c.b16 %v1531, %v1523
    %v2012 = vpack.c.b16 %v1540, %v1532
    %v2013 = vpack.c.b16 %v1541, %v1533
    %v2014 = vpack.c.b16 %v1542, %v1534
    %v2015 = vpack.c.b16 %v1543, %v1535
    %v2016 = vpack.c.b16 %v1544, %v1536
    %v2017 = vpack.c.b16 %v1545, %v1537
    %v2018 = vpack.c.b16 %v1546, %v1538
    %v2019 = vpack.c.b16 %v1547, %v1539
    %v2020 = vpack.c.b16 %v1556, %v1548
    %v2021 = vpack.c.b16 %v1557, %v1549
    %v2022 = vpack.c.b16 %v1558, %v1550
    %v2023 = vpack.c.b16 %v1559, %v1551
    %v2024 = vpack.c.b16 %v1560, %v1552
    %v2025 = vpack.c.b16 %v1561, %v1553
    %v2026 = vpack.c.b16 %v1562, %v1554
    %v2027 = vpack.c.b16 %v1563, %v1555
    %v2028 = vpack.c.b16 %v1572, %v1564
    %v2029 = vpack.c.b16 %v1573, %v1565
    %v2030 = vpack.c.b16 %v1574, %v1566
    %v2031 = vpack.c.b16 %v1575, %v1567
    %v2032 = vpack.c.b16 %v1576, %v1568
    %v2033 = vpack.c.b16 %v1577, %v1569
    %v2034 = vpack.c.b16 %v1578, %v1570
    %v2035 = vpack.c.b16 %v1579, %v1571
    %v2036 = vpack.c.b16 %v1588, %v1580
    %v2037 = vpack.c.b16 %v1589, %v1581
    %v2038 = vpack.c.b16 %v1590, %v1582
    %v2039 = vpack.c.b16 %v1591, %v1583
    %v2040 = vpack.c.b16 %v1592, %v1584
    %v2041 = vpack.c.b16 %v1593, %v1585
    %v2042 = vpack.c.b16 %v1594, %v1586
    %v2043 = vpack.c.b16 %v1595, %v1587
    %v2044 = vpack.c.b16 %v1604, %v1596
    %v2045 = vpack.c.b16 %v1605, %v1597
    %v2046 = vpack.c.b16 %v1606, %v1598
    %v2047 = vpack.c.b16 %v1607, %v1599
    %v2048 = vpack.c.b16 %v1608, %v1600
    %v2049 = vpack.c.b16 %v1609, %v1601
    %v2050 = vpack.c.b16 %v1610, %v1602
    %v2051 = vpack.c.b16 %v1611, %v1603
    %v2052 = vpack.c.b16 %v1620, %v1612
    %v2053 = vpack.c.b16 %v1621, %v1613
    %v2054 = vpack.c.b16 %v1622, %v1614
    %v2055 = vpack.c.b16 %v1623, %v1615
    %v2056 = vpack.c.b16 %v1624, %v1616
    %v2057 = vpack.c.b16 %v1625, %v1617
    %v2058 = vpack.c.b16 %v1626, %v1618
    %v2059 = vpack.c.b16 %v1627, %v1619
    %v2060 = vpack.c.b16 %v1636, %v1628
    %v2061 = vpack.c.b16 %v1637, %v1629
    %v2062 = vpack.c.b16 %v1638, %v1630
    %v2063 = vpack.c.b16 %v1639, %v1631
    %v2064 = vpack.c.b16 %v1640, %v1632
    %v2065 = vpack.c.b16 %v1641, %v1633
    %v2066 = vpack.c.b16 %v1642, %v1634
    %v2067 = vpack.c.b16 %v1643, %v1635
    %v2068 = vpack.c.b16 %v1652, %v1644
    %v2069 = vpack.c.b16 %v1653, %v1645
    %v2070 = vpack.c.b16 %v1654, %v1646
    %v2071 = vpack.c.b16 %v1655, %v1647
    %v2072 = vpack.c.b16 %v1656, %v1648
    %v2073 = vpack.c.b16 %v1657, %v1649
    %v2074 = vpack.c.b16 %v1658, %v1650
    %v2075 = vpack.c.b16 %v1659, %v1651
    %v2076 = vpack.c.b16 %v1668, %v1660
    %v2077 = vpack.c.b16 %v1669, %v1661
    %v2078 = vpack.c.b16 %v1670, %v1662
    %v2079 = vpack.c.b16 %v1671, %v1663
    %v2080 = vpack.c.b16 %v1672, %v1664
    %v2081 = vpack.c.b16 %v1673, %v1665
    %v2082 = vpack.c.b16 %v1674, %v1666
    %v2083 = vpack.c.b16 %v1675, %v1667
    %v2084 = vpack.c.b16 %v1684, %v1676
    %v2085 = vpack.c.b16 %v1685, %v1677
    %v2086 = vpack.c.b16 %v1686, %v1678
    %v2087 = vpack.c.b16 %v1687, %v1679
    %v2088 = vpack.c.b16 %v1688, %v1680
    %v2089 = vpack.c.b16 %v1689, %v1681
    %v2090 = vpack.c.b16 %v1690, %v1682
    %v2091 = vpack.c.b16 %v1691, %v1683
    %v2092 = vpack.c.b16 %v1700, %v1692
    %v2093 = vpack.c.b16 %v1701, %v1693
    %v2094 = vpack.c.b16 %v1702, %v1694
    %v2095 = vpack.c.b16 %v1703, %v1695
    %v2096 = vpack.c.b16 %v1704, %v1696
    %v2097 = vpack.c.b16 %v1705, %v1697
    %v2098 = vpack.c.b16 %v1706, %v1698
    %v2099 = vpack.c.b16 %v1707, %v1699
    %v2100 = vpack.c.b16 %v1716, %v1708
    %v2101 = vpack.c.b16 %v1717, %v1709
    %v2102 = vpack.c.b16 %v1718, %v1710
    %v2103 = vpack.c.b16 %v1719, %v1711
    %v2104 = vpack.c.b16 %v1720, %v1712
    %v2105 = vpack.c.b16 %v1721, %v1713
    %v2106 = vpack.c.b16 %v1722, %v1714
    %v2107 = vpack.c.b16 %v1723, %v1715
    %v2108 = vpack.c.b16 %v1732, %v1724
    %v2109 = vpack.c.b16 %v1733, %v1725
    %v2110 = vpack.c.b16 %v1734, %v1726
    %v2111 = vpack.c.b16 %v1735, %v1727
    %v2112 = vpack.c.b16 %v1736, %v1728
    %v2113 = vpack.c.b16 %v1737, %v1729
    %v2114 = vpack.c.b16 %v1738, %v1730
    %v2115 = vpack.c.b16 %v1739, %v1731
    %v2116 = vpack.c.b16 %v1748, %v1740
    %v2117 = vpack.c.b16 %v1749, %v1741
    %v2118 = vpack.c.b16 %v1750, %v1742
    %v2119 = vpack.c.b16 %v1751, %v1743
    %v2120 = vpack.c.b16 %v1752, %v1744
    %v2121 = vpack.c.b16 %v1753, %v1745
    %v2122 = vpack.c.b16 %v1754, %v1746
    %v2123 = vpack.c.b16 %v1755, %v1747
    %v2124 = vpack.c.b16 %v1764, %v1756
    %v2125 = vpack.c.b16 %v1765, %v1757
    %v2126 = vpack.c.b16 %v1766, %v1758
    %v2127 = vpack.c.b16 %v1767, %v1759
    %v2128 = vpack.c.b16 %v1768, %v1760
    %v2129 = vpack.c.b16 %v1769, %v1761
    %v2130 = vpack.c.b16 %v1770, %v1762
    %v2131 = vpack.c.b16 %v1771, %v1763
    %v2132 = vpack.c.b16 %v1780, %v1772
    %v2133 = vpack.c.b16 %v1781, %v1773
    %v2134 = vpack.c.b16 %v1782, %v1774
    %v2135 = vpack.c.b16 %v1783, %v1775
    %v2136 = vpack.c.b16 %v1784, %v1776
    %v2137 = vpack.c.b16 %v1785, %v1777
    %v2138 = vpack.c.b16 %v1786, %v1778
    %v2139 = vpack.c.b16 %v1787, %v1779
    %v2140 = vpack.c.b16 %v1796, %v1788
    %v2141 = vpack.c.b16 %v1797, %v1789
    %v2142 = vpack.c.b16 %v1798, %v1790
    %v2143 = vpack.c.b16 %v1799, %v1791
    %v2144 = vpack.c.b16 %v1800, %v1792
    %v2145 = vpack.c.b16 %v1801, %v1793
    %v2146 = vpack.c.b16 %v1802, %v1794
    %v2147 = vpack.c.b16 %v1803, %v1795
    %v2148 = vpack.c.b16 %v1812, %v1804
    %v2149 = vpack.c.b16 %v1813, %v1805
    %v2150 = vpack.c.b16 %v1814, %v1806
    %v2151 = vpack.c.b16 %v1815, %v1807
    %v2152 = vpack.c.b16 %v1816, %v1808
    %v2153 = vpack.c.b16 %v1817, %v1809
    %v2154 = vpack.c.b16 %v1818, %v1810
    %v2155 = vpack.c.b16 %v1819, %v1811
    %v2156 = vpack.c.b16 %v1828, %v1820
    %v2157 = vpack.c.b16 %v1829, %v1821
    %v2158 = vpack.c.b16 %v1830, %v1822
    %v2159 = vpack.c.b16 %v1831, %v1823
    %v2160 = vpack.c.b16 %v1832, %v1824
    %v2161 = vpack.c.b16 %v1833, %v1825
    %v2162 = vpack.c.b16 %v1834, %v1826
    %v2163 = vpack.c.b16 %v1835, %v1827
    %v2164 = vpack.c.b16 %v1844, %v1836
    %v2165 = vpack.c.b16 %v1845, %v1837
    %v2166 = vpack.c.b16 %v1846, %v1838
    %v2167 = vpack.c.b16 %v1847, %v1839
    %v2168 = vpack.c.b16 %v1848, %v1840
    %v2169 = vpack.c.b16 %v1849, %v1841
    %v2170 = vpack.c.b16 %v1850, %v1842
    %v2171 = vpack.c.b16 %v1851, %v1843
    %v2172 = vpack.c.b16 %v1860, %v1852
    %v2173 = vpack.c.b16 %v1861, %v1853
    %v2174 = vpack.c.b16 %v1862, %v1854
    %v2175 = vpack.c.b16 %v1863, %v1855
    %v2176 = vpack.c.b16 %v1864, %v1856
    %v2177 = vpack.c.b16 %v1865, %v1857
    %v2178 = vpack.c.b16 %v1866, %v1858
    %v2179 = vpack.c.b16 %v1867, %v1859
    %v2180 = vpack.c.b16 %v1876, %v1868
    %v2181 = vpack.c.b16 %v1877, %v1869
    %v2182 = vpack.c.b16 %v1878, %v1870
    %v2183 = vpack.c.b16 %v1879, %v1871
    %v2184 = vpack.c.b16 %v1880, %v1872
    %v2185 = vpack.c.b16 %v1881, %v1873
    %v2186 = vpack.c.b16 %v1882, %v1874
    %v2187 = vpack.c.b16 %v1883, %v1875
    %v2188 = vpack.c.b16 %v1892, %v1884
    %v2189 = vpack.c.b16 %v1893, %v1885
    %v2190 = vpack.c.b16 %v1894, %v1886
    %v2191 = vpack.c.b16 %v1895, %v1887
    %v2192 = vpack.c.b16 %v1896, %v1888
    %v2193 = vpack.c.b16 %v1897, %v1889
    %v2194 = vpack.c.b16 %v1898, %v1890
    %v2195 = vpack.c.b16 %v1899, %v1891
    %v2196 = vpack.c.b16 %v1908, %v1900
    %v2197 = vpack.c.b16 %v1909, %v1901
    %v2198 = vpack.c.b16 %v1910, %v1902
    %v2199 = vpack.c.b16 %v1911, %v1903
    %v2200 = vpack.c.b16 %v1912, %v1904
    %v2201 = vpack.c.b16 %v1913, %v1905
    %v2202 = vpack.c.b16 %v1914, %v1906
    %v2203 = vpack.c.b16 %v1915, %v1907
    %v2204 = vpack.c.b16 %v1924, %v1916
    %v2205 = vpack.c.b16 %v1925, %v1917
    %v2206 = vpack.c.b16 %v1926, %v1918
    %v2207 = vpack.c.b16 %v1927, %v1919
    %v2208 = vpack.c.b16 %v1928, %v1920
    %v2209 = vpack.c.b16 %v1929, %v1921
    %v2210 = vpack.c.b16 %v1930, %v1922
    %v2211 = vpack.c.b16 %v1931, %v1923
    %v2212 = vpack.c.b16 %v1940, %v1932
    %v2213 = vpack.c.b16 %v1941, %v1933
    %v2214 = vpack.c.b16 %v1942, %v1934
    %v2215 = vpack.c.b16 %v1943, %v1935
    %v2216 = vpack.c.b16 %v1944, %v1936
    %v2217 = vpack.c.b16 %v1945, %v1937
    %v2218 = vpack.c.b16 %v1946, %v1938
    %v2219 = vpack.c.b16 %v1947, %v1939
    %v2220 = vpack.c.b16 %v1956, %v1948
    %v2221 = vpack.c.b16 %v1957, %v1949
    %v2222 = vpack.c.b16 %v1958, %v1950
    %v2223 = vpack.c.b16 %v1959, %v1951
    %v2224 = vpack.c.b16 %v1960, %v1952
    %v2225 = vpack.c.b16 %v1961, %v1953
    %v2226 = vpack.c.b16 %v1962, %v1954
    %v2227 = vpack.c.b16 %v1963, %v1955
    %v2228 = vpack.c.b16 %v1972, %v1964
    %v2229 = vpack.c.b16 %v1973, %v1965
    %v2230 = vpack.c.b16 %v1974, %v1966
    %v2231 = vpack.c.b16 %v1975, %v1967
    %v2232 = vpack.c.b16 %v1976, %v1968
    %v2233 = vpack.c.b16 %v1977, %v1969
    %v2234 = vpack.c.b16 %v1978, %v1970
    %v2235 = vpack.c.b16 %v1979, %v1971
    %2492 = vmatprep.subr.bf16.mxu0 %v2037
    %2493 = vmatpush1.bf16.msra.mxu0 %v2036
    %2494 = vmatprep.subr.bf16.mxu0 %v2029
    %2495 = vmatpush1.bf16.msra.mxu0 %v2028
    %2496 = vmatprep.subr.bf16.mxu0 %v2021
    %2497 = vmatpush1.bf16.msra.mxu0 %v2020
    %2498 = vmatprep.subr.bf16.mxu0 %v2013
    %2499 = vmatpush1.bf16.msra.mxu0 %v2012
    %2500 = vmatprep.subr.bf16.mxu0 %v2005
    %2501 = vmatpush1.bf16.msra.mxu0 %v2004
    %2502 = vmatprep.subr.bf16.mxu0 %v1997
    %2503 = vmatpush1.bf16.msra.mxu0 %v1996
    %2504 = vmatprep.subr.bf16.mxu0 %v1989
    %2505 = vmatpush1.bf16.msra.mxu0 %v1988
    %2506 = vmatprep.subr.bf16.mxu0 %v1981
    %2507 = vmatpush1.bf16.msra.mxu0 %v1980
    %2508 = vmatprep.subr.bf16.mxu0 %v2101
    %2509 = vmatpush2.bf16.msra.mxu0 %v2100
    %2510 = vmatprep.subr.bf16.mxu0 %v2093
    %2511 = vmatpush2.bf16.msra.mxu0 %v2092
    %2512 = vmatprep.subr.bf16.mxu0 %v2085
    %2513 = vmatpush2.bf16.msra.mxu0 %v2084
    %2514 = vmatprep.subr.bf16.mxu0 %v2077
    %2515 = vmatpush2.bf16.msra.mxu0 %v2076
    %2516 = vmatprep.subr.bf16.mxu0 %v2069
    %2517 = vmatpush2.bf16.msra.mxu0 %v2068
    %2518 = vmatprep.subr.bf16.mxu0 %v2061
    %2519 = vmatpush2.bf16.msra.mxu0 %v2060
    %2520 = vmatprep.subr.bf16.mxu0 %v2053
    %2521 = vmatpush2.bf16.msra.mxu0 %v2052
    %2522 = vmatprep.subr.bf16.mxu0 %v2045
    %2523 = vmatpush2.bf16.msra.mxu0 %v2044
    %2524 = vmatprep.mubr.bf16.mxu0 %v953
    %2525 = vmatmul.mubr.bf16.gmra.mxu0 %v952
    %v2526 = vpop.f32.mrf.mxu0
    %v2527 = vadd.f32 0.0, %v2526
    %v2528 = vpop.f32.mrf.mxu0
    %v2529 = vadd.f32 0.0, %v2528
    %v2530 = vpop.f32.mrf.mxu0
    %v2531 = vpop.f32.mrf.mxu0
    %2532 = vdwg.mxu0
    %2533 = vmatprep.subr.bf16.mxu0 %v2165
    %2534 = vmatpush1.bf16.msra.mxu0 %v2164
    %2535 = vmatprep.subr.bf16.mxu0 %v2157
    %2536 = vmatpush1.bf16.msra.mxu0 %v2156
    %2537 = vmatprep.subr.bf16.mxu0 %v2149
    %2538 = vmatpush1.bf16.msra.mxu0 %v2148
    %2539 = vmatprep.subr.bf16.mxu0 %v2141
    %2540 = vmatpush1.bf16.msra.mxu0 %v2140
    %2541 = vmatprep.subr.bf16.mxu0 %v2133
    %2542 = vmatpush1.bf16.msra.mxu0 %v2132
    %2543 = vmatprep.subr.bf16.mxu0 %v2125
    %2544 = vmatpush1.bf16.msra.mxu0 %v2124
    %2545 = vmatprep.subr.bf16.mxu0 %v2117
    %2546 = vmatpush1.bf16.msra.mxu0 %v2116
    %2547 = vmatprep.subr.bf16.mxu0 %v2109
    %2548 = vmatpush1.bf16.msra.mxu0 %v2108
    %2549 = vmatprep.subr.bf16.mxu0 %v2229
    %2550 = vmatpush2.bf16.msra.mxu0 %v2228
    %2551 = vmatprep.subr.bf16.mxu0 %v2221
    %2552 = vmatpush2.bf16.msra.mxu0 %v2220
    %2553 = vmatprep.subr.bf16.mxu0 %v2213
    %2554 = vmatpush2.bf16.msra.mxu0 %v2212
    %2555 = vmatprep.subr.bf16.mxu0 %v2205
    %2556 = vmatpush2.bf16.msra.mxu0 %v2204
    %2557 = vmatprep.subr.bf16.mxu0 %v2197
    %2558 = vmatpush2.bf16.msra.mxu0 %v2196
    %2559 = vmatprep.subr.bf16.mxu0 %v2189
    %2560 = vmatpush2.bf16.msra.mxu0 %v2188
    %2561 = vmatprep.subr.bf16.mxu0 %v2181
    %2562 = vmatpush2.bf16.msra.mxu0 %v2180
    %2563 = vmatprep.subr.bf16.mxu0 %v2173
    %2564 = vmatpush2.bf16.msra.mxu0 %v2172
    %2565 = vmatprep.mubr.bf16.mxu0 %v955
    %2566 = vmatmul.mubr.bf16.gmra.mxu0 %v954
    %v2567 = vpop.f32.mrf.mxu0
    %v2568 = vadd.f32 %v2527, %v2567
    %v2569 = vpop.f32.mrf.mxu0
    %v2570 = vadd.f32 %v2529, %v2569
    %v2571 = vpop.f32.mrf.mxu0
    %v2572 = vpop.f32.mrf.mxu0
    %2573 = vdwg.mxu0
    %2574 = vmatprep.subr.bf16.mxu0 %v2039
    %2575 = vmatpush1.bf16.msra.mxu0 %v2038
    %2576 = vmatprep.subr.bf16.mxu0 %v2031
    %2577 = vmatpush1.bf16.msra.mxu0 %v2030
    %2578 = vmatprep.subr.bf16.mxu0 %v2023
    %2579 = vmatpush1.bf16.msra.mxu0 %v2022
    %2580 = vmatprep.subr.bf16.mxu0 %v2015
    %2581 = vmatpush1.bf16.msra.mxu0 %v2014
    %2582 = vmatprep.subr.bf16.mxu0 %v2007
    %2583 = vmatpush1.bf16.msra.mxu0 %v2006
    %2584 = vmatprep.subr.bf16.mxu0 %v1999
    %2585 = vmatpush1.bf16.msra.mxu0 %v1998
    %2586 = vmatprep.subr.bf16.mxu0 %v1991
    %2587 = vmatpush1.bf16.msra.mxu0 %v1990
    %2588 = vmatprep.subr.bf16.mxu0 %v1983
    %2589 = vmatpush1.bf16.msra.mxu0 %v1982
    %2590 = vmatprep.subr.bf16.mxu0 %v2103
    %2591 = vmatpush2.bf16.msra.mxu0 %v2102
    %2592 = vmatprep.subr.bf16.mxu0 %v2095
    %2593 = vmatpush2.bf16.msra.mxu0 %v2094
    %2594 = vmatprep.subr.bf16.mxu0 %v2087
    %2595 = vmatpush2.bf16.msra.mxu0 %v2086
    %2596 = vmatprep.subr.bf16.mxu0 %v2079
    %2597 = vmatpush2.bf16.msra.mxu0 %v2078
    %2598 = vmatprep.subr.bf16.mxu0 %v2071
    %2599 = vmatpush2.bf16.msra.mxu0 %v2070
    %2600 = vmatprep.subr.bf16.mxu0 %v2063
    %2601 = vmatpush2.bf16.msra.mxu0 %v2062
    %2602 = vmatprep.subr.bf16.mxu0 %v2055
    %2603 = vmatpush2.bf16.msra.mxu0 %v2054
    %2604 = vmatprep.subr.bf16.mxu0 %v2047
    %2605 = vmatpush2.bf16.msra.mxu0 %v2046
    %2606 = vmatprep.mubr.bf16.mxu0 %v953
    %2607 = vmatmul.mubr.bf16.gmra.mxu0 %v952
    %v2608 = vpop.f32.mrf.mxu0
    %v2609 = vadd.f32 0.0, %v2608
    %v2610 = vpop.f32.mrf.mxu0
    %v2611 = vadd.f32 0.0, %v2610
    %v2612 = vpop.f32.mrf.mxu0
    %v2613 = vpop.f32.mrf.mxu0
    %2614 = vdwg.mxu0
    %2615 = vmatprep.subr.bf16.mxu0 %v2167
    %2616 = vmatpush1.bf16.msra.mxu0 %v2166
    %2617 = vmatprep.subr.bf16.mxu0 %v2159
    %2618 = vmatpush1.bf16.msra.mxu0 %v2158
    %2619 = vmatprep.subr.bf16.mxu0 %v2151
    %2620 = vmatpush1.bf16.msra.mxu0 %v2150
    %2621 = vmatprep.subr.bf16.mxu0 %v2143
    %2622 = vmatpush1.bf16.msra.mxu0 %v2142
    %2623 = vmatprep.subr.bf16.mxu0 %v2135
    %2624 = vmatpush1.bf16.msra.mxu0 %v2134
    %2625 = vmatprep.subr.bf16.mxu0 %v2127
    %2626 = vmatpush1.bf16.msra.mxu0 %v2126
    %2627 = vmatprep.subr.bf16.mxu0 %v2119
    %2628 = vmatpush1.bf16.msra.mxu0 %v2118
    %2629 = vmatprep.subr.bf16.mxu0 %v2111
    %2630 = vmatpush1.bf16.msra.mxu0 %v2110
    %2631 = vmatprep.subr.bf16.mxu0 %v2231
    %2632 = vmatpush2.bf16.msra.mxu0 %v2230
    %2633 = vmatprep.subr.bf16.mxu0 %v2223
    %2634 = vmatpush2.bf16.msra.mxu0 %v2222
    %2635 = vmatprep.subr.bf16.mxu0 %v2215
    %2636 = vmatpush2.bf16.msra.mxu0 %v2214
    %2637 = vmatprep.subr.bf16.mxu0 %v2207
    %2638 = vmatpush2.bf16.msra.mxu0 %v2206
    %2639 = vmatprep.subr.bf16.mxu0 %v2199
    %2640 = vmatpush2.bf16.msra.mxu0 %v2198
    %2641 = vmatprep.subr.bf16.mxu0 %v2191
    %2642 = vmatpush2.bf16.msra.mxu0 %v2190
    %2643 = vmatprep.subr.bf16.mxu0 %v2183
    %2644 = vmatpush2.bf16.msra.mxu0 %v2182
    %2645 = vmatprep.subr.bf16.mxu0 %v2175
    %2646 = vmatpush2.bf16.msra.mxu0 %v2174
    %2647 = vmatprep.mubr.bf16.mxu0 %v955
    %2648 = vmatmul.mubr.bf16.gmra.mxu0 %v954
    %v2649 = vpop.f32.mrf.mxu0
    %v2650 = vadd.f32 %v2609, %v2649
    %v2651 = vpop.f32.mrf.mxu0
    %v2652 = vadd.f32 %v2611, %v2651
    %v2653 = vpop.f32.mrf.mxu0
    %v2654 = vpop.f32.mrf.mxu0
    %2655 = vdwg.mxu0
    %2656 = vmatprep.subr.bf16.mxu0 %v2041
    %2657 = vmatpush1.bf16.msra.mxu0 %v2040
    %2658 = vmatprep.subr.bf16.mxu0 %v2033
    %2659 = vmatpush1.bf16.msra.mxu0 %v2032
    %2660 = vmatprep.subr.bf16.mxu0 %v2025
    %2661 = vmatpush1.bf16.msra.mxu0 %v2024
    %2662 = vmatprep.subr.bf16.mxu0 %v2017
    %2663 = vmatpush1.bf16.msra.mxu0 %v2016
    %2664 = vmatprep.subr.bf16.mxu0 %v2009
    %2665 = vmatpush1.bf16.msra.mxu0 %v2008
    %2666 = vmatprep.subr.bf16.mxu0 %v2001
    %2667 = vmatpush1.bf16.msra.mxu0 %v2000
    %2668 = vmatprep.subr.bf16.mxu0 %v1993
    %2669 = vmatpush1.bf16.msra.mxu0 %v1992
    %2670 = vmatprep.subr.bf16.mxu0 %v1985
    %2671 = vmatpush1.bf16.msra.mxu0 %v1984
    %2672 = vmatprep.subr.bf16.mxu0 %v2105
    %2673 = vmatpush2.bf16.msra.mxu0 %v2104
    %2674 = vmatprep.subr.bf16.mxu0 %v2097
    %2675 = vmatpush2.bf16.msra.mxu0 %v2096
    %2676 = vmatprep.subr.bf16.mxu0 %v2089
    %2677 = vmatpush2.bf16.msra.mxu0 %v2088
    %2678 = vmatprep.subr.bf16.mxu0 %v2081
    %2679 = vmatpush2.bf16.msra.mxu0 %v2080
    %2680 = vmatprep.subr.bf16.mxu0 %v2073
    %2681 = vmatpush2.bf16.msra.mxu0 %v2072
    %2682 = vmatprep.subr.bf16.mxu0 %v2065
    %2683 = vmatpush2.bf16.msra.mxu0 %v2064
    %2684 = vmatprep.subr.bf16.mxu0 %v2057
    %2685 = vmatpush2.bf16.msra.mxu0 %v2056
    %2686 = vmatprep.subr.bf16.mxu0 %v2049
    %2687 = vmatpush2.bf16.msra.mxu0 %v2048
    %2688 = vmatprep.mubr.bf16.mxu0 %v953
    %2689 = vmatmul.mubr.bf16.gmra.mxu0 %v952
    %v2690 = vpop.f32.mrf.mxu0
    %v2691 = vadd.f32 0.0, %v2690
    %v2692 = vpop.f32.mrf.mxu0
    %v2693 = vadd.f32 0.0, %v2692
    %v2694 = vpop.f32.mrf.mxu0
    %v2695 = vpop.f32.mrf.mxu0
    %2696 = vdwg.mxu0
    %2697 = vmatprep.subr.bf16.mxu0 %v2169
    %2698 = vmatpush1.bf16.msra.mxu0 %v2168
    %2699 = vmatprep.subr.bf16.mxu0 %v2161
    %2700 = vmatpush1.bf16.msra.mxu0 %v2160
    %2701 = vmatprep.subr.bf16.mxu0 %v2153
    %2702 = vmatpush1.bf16.msra.mxu0 %v2152
    %2703 = vmatprep.subr.bf16.mxu0 %v2145
    %2704 = vmatpush1.bf16.msra.mxu0 %v2144
    %2705 = vmatprep.subr.bf16.mxu0 %v2137
    %2706 = vmatpush1.bf16.msra.mxu0 %v2136
    %2707 = vmatprep.subr.bf16.mxu0 %v2129
    %2708 = vmatpush1.bf16.msra.mxu0 %v2128
    %2709 = vmatprep.subr.bf16.mxu0 %v2121
    %2710 = vmatpush1.bf16.msra.mxu0 %v2120
    %2711 = vmatprep.subr.bf16.mxu0 %v2113
    %2712 = vmatpush1.bf16.msra.mxu0 %v2112
    %2713 = vmatprep.subr.bf16.mxu0 %v2233
    %2714 = vmatpush2.bf16.msra.mxu0 %v2232
    %2715 = vmatprep.subr.bf16.mxu0 %v2225
    %2716 = vmatpush2.bf16.msra.mxu0 %v2224
    %2717 = vmatprep.subr.bf16.mxu0 %v2217
    %2718 = vmatpush2.bf16.msra.mxu0 %v2216
    %2719 = vmatprep.subr.bf16.mxu0 %v2209
    %2720 = vmatpush2.bf16.msra.mxu0 %v2208
    %2721 = vmatprep.subr.bf16.mxu0 %v2201
    %2722 = vmatpush2.bf16.msra.mxu0 %v2200
    %2723 = vmatprep.subr.bf16.mxu0 %v2193
    %2724 = vmatpush2.bf16.msra.mxu0 %v2192
    %2725 = vmatprep.subr.bf16.mxu0 %v2185
    %2726 = vmatpush2.bf16.msra.mxu0 %v2184
    %2727 = vmatprep.subr.bf16.mxu0 %v2177
    %2728 = vmatpush2.bf16.msra.mxu0 %v2176
    %2729 = vmatprep.mubr.bf16.mxu0 %v955
    %2730 = vmatmul.mubr.bf16.gmra.mxu0 %v954
    %v2731 = vpop.f32.mrf.mxu0
    %v2732 = vadd.f32 %v2691, %v2731
    %v2733 = vpop.f32.mrf.mxu0
    %v2734 = vadd.f32 %v2693, %v2733
    %v2735 = vpop.f32.mrf.mxu0
    %v2736 = vpop.f32.mrf.mxu0
    %2737 = vdwg.mxu0
    %2738 = vmatprep.subr.bf16.mxu0 %v2043
    %2739 = vmatpush1.bf16.msra.mxu0 %v2042
    %2740 = vmatprep.subr.bf16.mxu0 %v2035
    %2741 = vmatpush1.bf16.msra.mxu0 %v2034
    %2742 = vmatprep.subr.bf16.mxu0 %v2027
    %2743 = vmatpush1.bf16.msra.mxu0 %v2026
    %2744 = vmatprep.subr.bf16.mxu0 %v2019
    %2745 = vmatpush1.bf16.msra.mxu0 %v2018
    %2746 = vmatprep.subr.bf16.mxu0 %v2011
    %2747 = vmatpush1.bf16.msra.mxu0 %v2010
    %2748 = vmatprep.subr.bf16.mxu0 %v2003
    %2749 = vmatpush1.bf16.msra.mxu0 %v2002
    %2750 = vmatprep.subr.bf16.mxu0 %v1995
    %2751 = vmatpush1.bf16.msra.mxu0 %v1994
    %2752 = vmatprep.subr.bf16.mxu0 %v1987
    %2753 = vmatpush1.bf16.msra.mxu0 %v1986
    %2754 = vmatprep.subr.bf16.mxu0 %v2107
    %2755 = vmatpush2.bf16.msra.mxu0 %v2106
    %2756 = vmatprep.subr.bf16.mxu0 %v2099
    %2757 = vmatpush2.bf16.msra.mxu0 %v2098
    %2758 = vmatprep.subr.bf16.mxu0 %v2091
    %2759 = vmatpush2.bf16.msra.mxu0 %v2090
    %2760 = vmatprep.subr.bf16.mxu0 %v2083
    %2761 = vmatpush2.bf16.msra.mxu0 %v2082
    %2762 = vmatprep.subr.bf16.mxu0 %v2075
    %2763 = vmatpush2.bf16.msra.mxu0 %v2074
    %2764 = vmatprep.subr.bf16.mxu0 %v2067
    %2765 = vmatpush2.bf16.msra.mxu0 %v2066
    %2766 = vmatprep.subr.bf16.mxu0 %v2059
    %2767 = vmatpush2.bf16.msra.mxu0 %v2058
    %2768 = vmatprep.subr.bf16.mxu0 %v2051
    %2769 = vmatpush2.bf16.msra.mxu0 %v2050
    %2770 = vmatprep.mubr.bf16.mxu0 %v953
    %2771 = vmatmul.mubr.bf16.gmra.mxu0 %v952
    %v2772 = vpop.f32.mrf.mxu0
    %v2773 = vadd.f32 0.0, %v2772
    %v2774 = vpop.f32.mrf.mxu0
    %v2775 = vadd.f32 0.0, %v2774
    %v2776 = vpop.f32.mrf.mxu0
    %v2777 = vpop.f32.mrf.mxu0
    %2778 = vdwg.mxu0
    %2779 = vmatprep.subr.bf16.mxu0 %v2171
    %2780 = vmatpush1.bf16.msra.mxu0 %v2170
    %2781 = vmatprep.subr.bf16.mxu0 %v2163
    %2782 = vmatpush1.bf16.msra.mxu0 %v2162
    %2783 = vmatprep.subr.bf16.mxu0 %v2155
    %2784 = vmatpush1.bf16.msra.mxu0 %v2154
    %2785 = vmatprep.subr.bf16.mxu0 %v2147
    %2786 = vmatpush1.bf16.msra.mxu0 %v2146
    %2787 = vmatprep.subr.bf16.mxu0 %v2139
    %2788 = vmatpush1.bf16.msra.mxu0 %v2138
    %2789 = vmatprep.subr.bf16.mxu0 %v2131
    %2790 = vmatpush1.bf16.msra.mxu0 %v2130
    %2791 = vmatprep.subr.bf16.mxu0 %v2123
    %2792 = vmatpush1.bf16.msra.mxu0 %v2122
    %2793 = vmatprep.subr.bf16.mxu0 %v2115
    %2794 = vmatpush1.bf16.msra.mxu0 %v2114
    %2795 = vmatprep.subr.bf16.mxu0 %v2235
    %2796 = vmatpush2.bf16.msra.mxu0 %v2234
    %2797 = vmatprep.subr.bf16.mxu0 %v2227
    %2798 = vmatpush2.bf16.msra.mxu0 %v2226
    %2799 = vmatprep.subr.bf16.mxu0 %v2219
    %2800 = vmatpush2.bf16.msra.mxu0 %v2218
    %2801 = vmatprep.subr.bf16.mxu0 %v2211
    %2802 = vmatpush2.bf16.msra.mxu0 %v2210
    %2803 = vmatprep.subr.bf16.mxu0 %v2203
    %2804 = vmatpush2.bf16.msra.mxu0 %v2202
    %2805 = vmatprep.subr.bf16.mxu0 %v2195
    %2806 = vmatpush2.bf16.msra.mxu0 %v2194
    %2807 = vmatprep.subr.bf16.mxu0 %v2187
    %2808 = vmatpush2.bf16.msra.mxu0 %v2186
    %2809 = vmatprep.subr.bf16.mxu0 %v2179
    %2810 = vmatpush2.bf16.msra.mxu0 %v2178
    %2811 = vmatprep.mubr.bf16.mxu0 %v955
    %2812 = vmatmul.mubr.bf16.gmra.mxu0 %v954
    %v2813 = vpop.f32.mrf.mxu0
    %v2814 = vadd.f32 %v2773, %v2813
    %v2815 = vpop.f32.mrf.mxu0
    %v2816 = vadd.f32 %v2775, %v2815
    %v2817 = vpop.f32.mrf.mxu0
    %v2818 = vpop.f32.mrf.mxu0
    %2819 = vdwg.mxu0
    %v2820 = vrot.slane %v2568, 4
    %v2821 = vadd.f32 %v2568, %v2820
    %v2822 = vrot.slane %v2821, 2
    %v2823 = vadd.f32 %v2821, %v2822
    %v2824 = vrot.slane %v2823, 1
    %v2825 = vadd.f32 %v2823, %v2824
    %v2826 = vrot.slane %v2570, 4
    %v2827 = vadd.f32 %v2570, %v2826
    %v2828 = vrot.slane %v2827, 2
    %v2829 = vadd.f32 %v2827, %v2828
    %v2830 = vrot.slane %v2829, 1
    %v2831 = vadd.f32 %v2829, %v2830
    %v2832 = vrot.slane %v2650, 4
    %v2833 = vadd.f32 %v2650, %v2832
    %v2834 = vrot.slane %v2833, 2
    %v2835 = vadd.f32 %v2833, %v2834
    %v2836 = vrot.slane %v2835, 1
    %v2837 = vadd.f32 %v2835, %v2836
    %v2838 = vrot.slane %v2652, 4
    %v2839 = vadd.f32 %v2652, %v2838
    %v2840 = vrot.slane %v2839, 2
    %v2841 = vadd.f32 %v2839, %v2840
    %v2842 = vrot.slane %v2841, 1
    %v2843 = vadd.f32 %v2841, %v2842
    %v2844 = vrot.slane %v2732, 4
    %v2845 = vadd.f32 %v2732, %v2844
    %v2846 = vrot.slane %v2845, 2
    %v2847 = vadd.f32 %v2845, %v2846
    %v2848 = vrot.slane %v2847, 1
    %v2849 = vadd.f32 %v2847, %v2848
    %v2850 = vrot.slane %v2734, 4
    %v2851 = vadd.f32 %v2734, %v2850
    %v2852 = vrot.slane %v2851, 2
    %v2853 = vadd.f32 %v2851, %v2852
    %v2854 = vrot.slane %v2853, 1
    %v2855 = vadd.f32 %v2853, %v2854
    %v2856 = vrot.slane %v2814, 4
    %v2857 = vadd.f32 %v2814, %v2856
    %v2858 = vrot.slane %v2857, 2
    %v2859 = vadd.f32 %v2857, %v2858
    %v2860 = vrot.slane %v2859, 1
    %v2861 = vadd.f32 %v2859, %v2860
    %v2862 = vrot.slane %v2816, 4
    %v2863 = vadd.f32 %v2816, %v2862
    %v2864 = vrot.slane %v2863, 2
    %v2865 = vadd.f32 %v2863, %v2864
    %v2866 = vrot.slane %v2865, 1
    %v2867 = vadd.f32 %v2865, %v2866
    %v2868 = vmul.f32 %v2825, %v115
    %v2869 = vmul.f32 %v2831, %v115
    %v2870 = vmul.f32 %v2837, %v115
    %v2871 = vmul.f32 %v2843, %v115
    %v2872 = vmul.f32 %v2849, %v115
    %v2873 = vmul.f32 %v2855, %v115
    %v2874 = vmul.f32 %v2861, %v115
    %v2875 = vmul.f32 %v2867, %v115
    %v2876 = vsub.f32 %v2568, %v2868
    %v2877 = vsub.f32 %v2570, %v2869
    %v2878 = vsub.f32 %v2650, %v2870
    %v2879 = vsub.f32 %v2652, %v2871
    %v2880 = vsub.f32 %v2732, %v2872
    %v2881 = vsub.f32 %v2734, %v2873
    %v2882 = vsub.f32 %v2814, %v2874
    %v2883 = vsub.f32 %v2816, %v2875
    %v2884 = vmul.f32 %v2876, %v2876
    %v2885 = vmul.f32 %v2877, %v2877
    %v2886 = vmul.f32 %v2878, %v2878
    %v2887 = vmul.f32 %v2879, %v2879
    %v2888 = vmul.f32 %v2880, %v2880
    %v2889 = vmul.f32 %v2881, %v2881
    %v2890 = vmul.f32 %v2882, %v2882
    %v2891 = vmul.f32 %v2883, %v2883
    %v2892 = vrot.slane %v2884, 4
    %v2893 = vadd.f32 %v2884, %v2892
    %v2894 = vrot.slane %v2893, 2
    %v2895 = vadd.f32 %v2893, %v2894
    %v2896 = vrot.slane %v2895, 1
    %v2897 = vadd.f32 %v2895, %v2896
    %v2898 = vrot.slane %v2885, 4
    %v2899 = vadd.f32 %v2885, %v2898
    %v2900 = vrot.slane %v2899, 2
    %v2901 = vadd.f32 %v2899, %v2900
    %v2902 = vrot.slane %v2901, 1
    %v2903 = vadd.f32 %v2901, %v2902
    %v2904 = vrot.slane %v2886, 4
    %v2905 = vadd.f32 %v2886, %v2904
    %v2906 = vrot.slane %v2905, 2
    %v2907 = vadd.f32 %v2905, %v2906
    %v2908 = vrot.slane %v2907, 1
    %v2909 = vadd.f32 %v2907, %v2908
    %v2910 = vrot.slane %v2887, 4
    %v2911 = vadd.f32 %v2887, %v2910
    %v2912 = vrot.slane %v2911, 2
    %v2913 = vadd.f32 %v2911, %v2912
    %v2914 = vrot.slane %v2913, 1
    %v2915 = vadd.f32 %v2913, %v2914
    %v2916 = vrot.slane %v2888, 4
    %v2917 = vadd.f32 %v2888, %v2916
    %v2918 = vrot.slane %v2917, 2
    %v2919 = vadd.f32 %v2917, %v2918
    %v2920 = vrot.slane %v2919, 1
    %v2921 = vadd.f32 %v2919, %v2920
    %v2922 = vrot.slane %v2889, 4
    %v2923 = vadd.f32 %v2889, %v2922
    %v2924 = vrot.slane %v2923, 2
    %v2925 = vadd.f32 %v2923, %v2924
    %v2926 = vrot.slane %v2925, 1
    %v2927 = vadd.f32 %v2925, %v2926
    %v2928 = vrot.slane %v2890, 4
    %v2929 = vadd.f32 %v2890, %v2928
    %v2930 = vrot.slane %v2929, 2
    %v2931 = vadd.f32 %v2929, %v2930
    %v2932 = vrot.slane %v2931, 1
    %v2933 = vadd.f32 %v2931, %v2932
    %v2934 = vrot.slane %v2891, 4
    %v2935 = vadd.f32 %v2891, %v2934
    %v2936 = vrot.slane %v2935, 2
    %v2937 = vadd.f32 %v2935, %v2936
    %v2938 = vrot.slane %v2937, 1
    %v2939 = vadd.f32 %v2937, %v2938
    %v2940 = vmul.f32 %v2897, %v115
    %v2941 = vmul.f32 %v2903, %v115
    %v2942 = vmul.f32 %v2909, %v115
    %v2943 = vmul.f32 %v2915, %v115
    %v2944 = vmul.f32 %v2921, %v115
    %v2945 = vmul.f32 %v2927, %v115
    %v2946 = vmul.f32 %v2933, %v115
    %v2947 = vmul.f32 %v2939, %v115
    %v2948 = vadd.f32 %v2940, 1e-05
    %v2949 = vadd.f32 %v2941, 1e-05
    %v2950 = vadd.f32 %v2942, 1e-05
    %v2951 = vadd.f32 %v2943, 1e-05
    %v2952 = vadd.f32 %v2944, 1e-05
    %v2953 = vadd.f32 %v2945, 1e-05
    %v2954 = vadd.f32 %v2946, 1e-05
    %v2955 = vadd.f32 %v2947, 1e-05
    %v2956 = vrsqrt.pop %v2948
    %v2957 = vrsqrt.pop %v2949
    %v2958 = vrsqrt.pop %v2950
    %v2959 = vrsqrt.pop %v2951
    %v2960 = vrsqrt.pop %v2952
    %v2961 = vrsqrt.pop %v2953
    %v2962 = vrsqrt.pop %v2954
    %v2963 = vrsqrt.pop %v2955
    %v2964 = vmul.f32 %v2876, %v2956
    %v2965 = vmul.f32 %v2877, %v2957
    %v2966 = vmul.f32 %v2878, %v2958
    %v2967 = vmul.f32 %v2879, %v2959
    %v2968 = vmul.f32 %v2880, %v2960
    %v2969 = vmul.f32 %v2881, %v2961
    %v2970 = vmul.f32 %v2882, %v2962
    %v2971 = vmul.f32 %v2883, %v2963
    %v2972 = vld [vmem:[%s11] sm:$0xff]
    %v2974 = vlaneseq
    %v2975 = vshrl.u32 %v2974, 7
    %v2976 = vsub.s32 0, %v2975
    %v2977 = vrot.slane %v2972, %v2976
    %v2978 = vlaneseq
    %v2979 = vshrl.u32 %v2978, 7
    %v2980 = vsub.s32 1, %v2979
    %v2981 = vrot.slane %v2972, %v2980
    %v2982 = vlaneseq
    %v2983 = vshrl.u32 %v2982, 7
    %v2984 = vsub.s32 2, %v2983
    %v2985 = vrot.slane %v2972, %v2984
    %v2986 = vlaneseq
    %v2987 = vshrl.u32 %v2986, 7
    %v2988 = vsub.s32 3, %v2987
    %v2989 = vrot.slane %v2972, %v2988
    %v2990 = vlaneseq
    %v2991 = vshrl.u32 %v2990, 7
    %v2992 = vsub.s32 4, %v2991
    %v2993 = vrot.slane %v2972, %v2992
    %v2994 = vlaneseq
    %v2995 = vshrl.u32 %v2994, 7
    %v2996 = vsub.s32 5, %v2995
    %v2997 = vrot.slane %v2972, %v2996
    %v2998 = vlaneseq
    %v2999 = vshrl.u32 %v2998, 7
    %v3000 = vsub.s32 6, %v2999
    %v3001 = vrot.slane %v2972, %v3000
    %v3002 = vlaneseq
    %v3003 = vshrl.u32 %v3002, 7
    %v3004 = vsub.s32 7, %v3003
    %v3005 = vrot.slane %v2972, %v3004
    %v3014 = vmul.f32 %v2964, %v2977
    %v3015 = vmul.f32 %v2965, %v2981
    %v3016 = vmul.f32 %v2966, %v2985
    %v3017 = vmul.f32 %v2967, %v2989
    %v3018 = vmul.f32 %v2968, %v2993
    %v3019 = vmul.f32 %v2969, %v2997
    %v3020 = vmul.f32 %v2970, %v3001
    %v3021 = vmul.f32 %v2971, %v3005
    %v3022 = vld [vmem:[%s12] sm:$0xff]
    %v3024 = vlaneseq
    %v3025 = vshrl.u32 %v3024, 7
    %v3026 = vsub.s32 0, %v3025
    %v3027 = vrot.slane %v3022, %v3026
    %v3028 = vlaneseq
    %v3029 = vshrl.u32 %v3028, 7
    %v3030 = vsub.s32 1, %v3029
    %v3031 = vrot.slane %v3022, %v3030
    %v3032 = vlaneseq
    %v3033 = vshrl.u32 %v3032, 7
    %v3034 = vsub.s32 2, %v3033
    %v3035 = vrot.slane %v3022, %v3034
    %v3036 = vlaneseq
    %v3037 = vshrl.u32 %v3036, 7
    %v3038 = vsub.s32 3, %v3037
    %v3039 = vrot.slane %v3022, %v3038
    %v3040 = vlaneseq
    %v3041 = vshrl.u32 %v3040, 7
    %v3042 = vsub.s32 4, %v3041
    %v3043 = vrot.slane %v3022, %v3042
    %v3044 = vlaneseq
    %v3045 = vshrl.u32 %v3044, 7
    %v3046 = vsub.s32 5, %v3045
    %v3047 = vrot.slane %v3022, %v3046
    %v3048 = vlaneseq
    %v3049 = vshrl.u32 %v3048, 7
    %v3050 = vsub.s32 6, %v3049
    %v3051 = vrot.slane %v3022, %v3050
    %v3052 = vlaneseq
    %v3053 = vshrl.u32 %v3052, 7
    %v3054 = vsub.s32 7, %v3053
    %v3055 = vrot.slane %v3022, %v3054
    %v3064 = vadd.f32 %v3014, %v3027
    %v3065 = vadd.f32 %v3015, %v3031
    %v3066 = vadd.f32 %v3016, %v3035
    %v3067 = vadd.f32 %v3017, %v3039
    %v3068 = vadd.f32 %v3018, %v3043
    %v3069 = vadd.f32 %v3019, %v3047
    %v3070 = vadd.f32 %v3020, %v3051
    %v3071 = vadd.f32 %v3021, %v3055
    %v3072 = vmax.f32 %v3064, 0.0
    %v3073 = vmax.f32 %v3065, 0.0
    %v3074 = vmax.f32 %v3066, 0.0
    %v3075 = vmax.f32 %v3067, 0.0
    %v3076 = vmax.f32 %v3068, 0.0
    %v3077 = vmax.f32 %v3069, 0.0
    %v3078 = vmax.f32 %v3070, 0.0
    %v3079 = vmax.f32 %v3071, 0.0
    %v3080 = vpack.c.bf16 %v3072, %v3072
    %v3081 = vpack.c.bf16 %v3073, %v3073
    %v3082 = vpack.c.bf16 %v3074, %v3074
    %v3083 = vpack.c.bf16 %v3075, %v3075
    %v3084 = vpack.c.bf16 %v3076, %v3076
    %v3085 = vpack.c.bf16 %v3077, %v3077
    %v3086 = vpack.c.bf16 %v3078, %v3078
    %v3087 = vpack.c.bf16 %v3079, %v3079
    %v3088 = vld [vmem:[%s13] sm:$0xff]
    %v3089 = vld [vmem:[%s13 + $0x8] sm:$0xff]
    %v3090 = vld [vmem:[%s13 + $0x10] sm:$0xff]
    %v3091 = vld [vmem:[%s13 + $0x18] sm:$0xf]
    %v3092 = vld [vmem:[%s13 + $0x1c] sm:$0xff]
    %v3093 = vld [vmem:[%s13 + $0x24] sm:$0xff]
    %v3094 = vld [vmem:[%s13 + $0x2c] sm:$0xff]
    %v3095 = vld [vmem:[%s13 + $0x34] sm:$0xf]
    %v3096 = vld [vmem:[%s13 + $0x38] sm:$0xff]
    %v3097 = vld [vmem:[%s13 + $0x40] sm:$0xff]
    %v3098 = vld [vmem:[%s13 + $0x48] sm:$0xff]
    %v3099 = vld [vmem:[%s13 + $0x50] sm:$0xf]
    %v3100 = vld [vmem:[%s13 + $0x54] sm:$0xff]
    %v3101 = vld [vmem:[%s13 + $0x5c] sm:$0xff]
    %v3102 = vld [vmem:[%s13 + $0x64] sm:$0xff]
    %v3103 = vld [vmem:[%s13 + $0x6c] sm:$0xf]
    %v3104 = vld [vmem:[%s13 + $0x70] sm:$0xff]
    %v3105 = vld [vmem:[%s13 + $0x78] sm:$0xff]
    %v3106 = vld [vmem:[%s13 + $0x80] sm:$0xff]
    %v3107 = vld [vmem:[%s13 + $0x88] sm:$0xf]
    %v3108 = vld [vmem:[%s13 + $0x8c] sm:$0xff]
    %v3109 = vld [vmem:[%s13 + $0x94] sm:$0xff]
    %v3110 = vld [vmem:[%s13 + $0x9c] sm:$0xff]
    %v3111 = vld [vmem:[%s13 + $0xa4] sm:$0xf]
    %v3112 = vld [vmem:[%s13 + $0xa8] sm:$0xff]
    %v3113 = vld [vmem:[%s13 + $0xb0] sm:$0xff]
    %v3114 = vld [vmem:[%s13 + $0xb8] sm:$0xff]
    %v3115 = vld [vmem:[%s13 + $0xc0] sm:$0xf]
    %v3116 = vld [vmem:[%s13 + $0xc4] sm:$0xff]
    %v3117 = vld [vmem:[%s13 + $0xcc] sm:$0xff]
    %v3118 = vld [vmem:[%s13 + $0xd4] sm:$0xff]
    %v3119 = vld [vmem:[%s13 + $0xdc] sm:$0xf]
    %v3120 = vld [vmem:[%s13 + $0xe0] sm:$0xff]
    %v3121 = vld [vmem:[%s13 + $0xe8] sm:$0xff]
    %v3122 = vld [vmem:[%s13 + $0xf0] sm:$0xff]
    %v3123 = vld [vmem:[%s13 + $0xf8] sm:$0xf]
    %v3124 = vld [vmem:[%s13 + $0xfc] sm:$0xff]
    %v3125 = vld [vmem:[%s13 + $0x104] sm:$0xff]
    %v3126 = vld [vmem:[%s13 + $0x10c] sm:$0xff]
    %v3127 = vld [vmem:[%s13 + $0x114] sm:$0xf]
    %v3128 = vld [vmem:[%s13 + $0x118] sm:$0xff]
    %v3129 = vld [vmem:[%s13 + $0x120] sm:$0xff]
    %v3130 = vld [vmem:[%s13 + $0x128] sm:$0xff]
    %v3131 = vld [vmem:[%s13 + $0x130] sm:$0xf]
    %v3132 = vld [vmem:[%s13 + $0x134] sm:$0xff]
    %v3133 = vld [vmem:[%s13 + $0x13c] sm:$0xff]
    %v3134 = vld [vmem:[%s13 + $0x144] sm:$0xff]
    %v3135 = vld [vmem:[%s13 + $0x14c] sm:$0xf]
    %v3136 = vld [vmem:[%s13 + $0x150] sm:$0xff]
    %v3137 = vld [vmem:[%s13 + $0x158] sm:$0xff]
    %v3138 = vld [vmem:[%s13 + $0x160] sm:$0xff]
    %v3139 = vld [vmem:[%s13 + $0x168] sm:$0xf]
    %v3140 = vld [vmem:[%s13 + $0x16c] sm:$0xff]
    %v3141 = vld [vmem:[%s13 + $0x174] sm:$0xff]
    %v3142 = vld [vmem:[%s13 + $0x17c] sm:$0xff]
    %v3143 = vld [vmem:[%s13 + $0x184] sm:$0xf]
    %v3144 = vld [vmem:[%s13 + $0x188] sm:$0xff]
    %v3145 = vld [vmem:[%s13 + $0x190] sm:$0xff]
    %v3146 = vld [vmem:[%s13 + $0x198] sm:$0xff]
    %v3147 = vld [vmem:[%s13 + $0x1a0] sm:$0xf]
    %v3148 = vld [vmem:[%s13 + $0x1a4] sm:$0xff]
    %v3149 = vld [vmem:[%s13 + $0x1ac] sm:$0xff]
    %v3150 = vld [vmem:[%s13 + $0x1b4] sm:$0xff]
    %v3151 = vld [vmem:[%s13 + $0x1bc] sm:$0xf]
    %v3152 = vld [vmem:[%s13 + $0x1c0] sm:$0xff]
    %v3153 = vld [vmem:[%s13 + $0x1c8] sm:$0xff]
    %v3154 = vld [vmem:[%s13 + $0x1d0] sm:$0xff]
    %v3155 = vld [vmem:[%s13 + $0x1d8] sm:$0xf]
    %v3156 = vld [vmem:[%s13 + $0x1dc] sm:$0xff]
    %v3157 = vld [vmem:[%s13 + $0x1e4] sm:$0xff]
    %v3158 = vld [vmem:[%s13 + $0x1ec] sm:$0xff]
    %v3159 = vld [vmem:[%s13 + $0x1f4] sm:$0xf]
    %v3160 = vld [vmem:[%s13 + $0x1f8] sm:$0xff]
    %v3161 = vld [vmem:[%s13 + $0x200] sm:$0xff]
    %v3162 = vld [vmem:[%s13 + $0x208] sm:$0xff]
    %v3163 = vld [vmem:[%s13 + $0x210] sm:$0xf]
    %v3164 = vld [vmem:[%s13 + $0x214] sm:$0xff]
    %v3165 = vld [vmem:[%s13 + $0x21c] sm:$0xff]
    %v3166 = vld [vmem:[%s13 + $0x224] sm:$0xff]
    %v3167 = vld [vmem:[%s13 + $0x22c] sm:$0xf]
    %v3168 = vld [vmem:[%s13 + $0x230] sm:$0xff]
    %v3169 = vld [vmem:[%s13 + $0x238] sm:$0xff]
    %v3170 = vld [vmem:[%s13 + $0x240] sm:$0xff]
    %v3171 = vld [vmem:[%s13 + $0x248] sm:$0xf]
    %v3172 = vld [vmem:[%s13 + $0x24c] sm:$0xff]
    %v3173 = vld [vmem:[%s13 + $0x254] sm:$0xff]
    %v3174 = vld [vmem:[%s13 + $0x25c] sm:$0xff]
    %v3175 = vld [vmem:[%s13 + $0x264] sm:$0xf]
    %v3176 = vld [vmem:[%s13 + $0x268] sm:$0xff]
    %v3177 = vld [vmem:[%s13 + $0x270] sm:$0xff]
    %v3178 = vld [vmem:[%s13 + $0x278] sm:$0xff]
    %v3179 = vld [vmem:[%s13 + $0x280] sm:$0xf]
    %v3180 = vld [vmem:[%s13 + $0x284] sm:$0xff]
    %v3181 = vld [vmem:[%s13 + $0x28c] sm:$0xff]
    %v3182 = vld [vmem:[%s13 + $0x294] sm:$0xff]
    %v3183 = vld [vmem:[%s13 + $0x29c] sm:$0xf]
    %v3184 = vld [vmem:[%s13 + $0x2a0] sm:$0xff]
    %v3185 = vld [vmem:[%s13 + $0x2a8] sm:$0xff]
    %v3186 = vld [vmem:[%s13 + $0x2b0] sm:$0xff]
    %v3187 = vld [vmem:[%s13 + $0x2b8] sm:$0xf]
    %v3188 = vld [vmem:[%s13 + $0x2bc] sm:$0xff]
    %v3189 = vld [vmem:[%s13 + $0x2c4] sm:$0xff]
    %v3190 = vld [vmem:[%s13 + $0x2cc] sm:$0xff]
    %v3191 = vld [vmem:[%s13 + $0x2d4] sm:$0xf]
    %v3192 = vld [vmem:[%s13 + $0x2d8] sm:$0xff]
    %v3193 = vld [vmem:[%s13 + $0x2e0] sm:$0xff]
    %v3194 = vld [vmem:[%s13 + $0x2e8] sm:$0xff]
    %v3195 = vld [vmem:[%s13 + $0x2f0] sm:$0xf]
    %v3196 = vld [vmem:[%s13 + $0x2f4] sm:$0xff]
    %v3197 = vld [vmem:[%s13 + $0x2fc] sm:$0xff]
    %v3198 = vld [vmem:[%s13 + $0x304] sm:$0xff]
    %v3199 = vld [vmem:[%s13 + $0x30c] sm:$0xf]
    %v3200 = vld [vmem:[%s13 + $0x310] sm:$0xff]
    %v3201 = vld [vmem:[%s13 + $0x318] sm:$0xff]
    %v3202 = vld [vmem:[%s13 + $0x320] sm:$0xff]
    %v3203 = vld [vmem:[%s13 + $0x328] sm:$0xf]
    %v3204 = vld [vmem:[%s13 + $0x32c] sm:$0xff]
    %v3205 = vld [vmem:[%s13 + $0x334] sm:$0xff]
    %v3206 = vld [vmem:[%s13 + $0x33c] sm:$0xff]
    %v3207 = vld [vmem:[%s13 + $0x344] sm:$0xf]
    %v3208 = vld [vmem:[%s13 + $0x348] sm:$0xff]
    %v3209 = vld [vmem:[%s13 + $0x350] sm:$0xff]
    %v3210 = vld [vmem:[%s13 + $0x358] sm:$0xff]
    %v3211 = vld [vmem:[%s13 + $0x360] sm:$0xf]
    %v3212 = vld [vmem:[%s13 + $0x364] sm:$0xff]
    %v3213 = vld [vmem:[%s13 + $0x36c] sm:$0xff]
    %v3214 = vld [vmem:[%s13 + $0x374] sm:$0xff]
    %v3215 = vld [vmem:[%s13 + $0x37c] sm:$0xf]
    %v3216 = vld [vmem:[%s13 + $0x380] sm:$0xff]
    %v3217 = vld [vmem:[%s13 + $0x388] sm:$0xff]
    %v3218 = vld [vmem:[%s13 + $0x390] sm:$0xff]
    %v3219 = vld [vmem:[%s13 + $0x398] sm:$0xf]
    %v3220 = vld [vmem:[%s13 + $0x39c] sm:$0xff]
    %v3221 = vld [vmem:[%s13 + $0x3a4] sm:$0xff]
    %v3222 = vld [vmem:[%s13 + $0x3ac] sm:$0xff]
    %v3223 = vld [vmem:[%s13 + $0x3b4] sm:$0xf]
    %v3224 = vld [vmem:[%s13 + $0x3b8] sm:$0xff]
    %v3225 = vld [vmem:[%s13 + $0x3c0] sm:$0xff]
    %v3226 = vld [vmem:[%s13 + $0x3c8] sm:$0xff]
    %v3227 = vld [vmem:[%s13 + $0x3d0] sm:$0xf]
    %v3228 = vld [vmem:[%s13 + $0x3d4] sm:$0xff]
    %v3229 = vld [vmem:[%s13 + $0x3dc] sm:$0xff]
    %v3230 = vld [vmem:[%s13 + $0x3e4] sm:$0xff]
    %v3231 = vld [vmem:[%s13 + $0x3ec] sm:$0xf]
    %v3232 = vld [vmem:[%s13 + $0x3f0] sm:$0xff]
    %v3233 = vld [vmem:[%s13 + $0x3f8] sm:$0xff]
    %v3234 = vld [vmem:[%s13 + $0x400] sm:$0xff]
    %v3235 = vld [vmem:[%s13 + $0x408] sm:$0xf]
    %v3236 = vld [vmem:[%s13 + $0x40c] sm:$0xff]
    %v3237 = vld [vmem:[%s13 + $0x414] sm:$0xff]
    %v3238 = vld [vmem:[%s13 + $0x41c] sm:$0xff]
    %v3239 = vld [vmem:[%s13 + $0x424] sm:$0xf]
    %v3240 = vld [vmem:[%s13 + $0x428] sm:$0xff]
    %v3241 = vld [vmem:[%s13 + $0x430] sm:$0xff]
    %v3242 = vld [vmem:[%s13 + $0x438] sm:$0xff]
    %v3243 = vld [vmem:[%s13 + $0x440] sm:$0xf]
    %v3244 = vld [vmem:[%s13 + $0x444] sm:$0xff]
    %v3245 = vld [vmem:[%s13 + $0x44c] sm:$0xff]
    %v3246 = vld [vmem:[%s13 + $0x454] sm:$0xff]
    %v3247 = vld [vmem:[%s13 + $0x45c] sm:$0xf]
    %v3248 = vld [vmem:[%s13 + $0x460] sm:$0xff]
    %v3249 = vld [vmem:[%s13 + $0x468] sm:$0xff]
    %v3250 = vld [vmem:[%s13 + $0x470] sm:$0xff]
    %v3251 = vld [vmem:[%s13 + $0x478] sm:$0xf]
    %v3252 = vld [vmem:[%s13 + $0x47c] sm:$0xff]
    %v3253 = vld [vmem:[%s13 + $0x484] sm:$0xff]
    %v3254 = vld [vmem:[%s13 + $0x48c] sm:$0xff]
    %v3255 = vld [vmem:[%s13 + $0x494] sm:$0xf]
    %v3256 = vld [vmem:[%s13 + $0x498] sm:$0xff]
    %v3257 = vld [vmem:[%s13 + $0x4a0] sm:$0xff]
    %v3258 = vld [vmem:[%s13 + $0x4a8] sm:$0xff]
    %v3259 = vld [vmem:[%s13 + $0x4b0] sm:$0xf]
    %v3260 = vld [vmem:[%s13 + $0x4b4] sm:$0xff]
    %v3261 = vld [vmem:[%s13 + $0x4bc] sm:$0xff]
    %v3262 = vld [vmem:[%s13 + $0x4c4] sm:$0xff]
    %v3263 = vld [vmem:[%s13 + $0x4cc] sm:$0xf]
    %v3264 = vld [vmem:[%s13 + $0x4d0] sm:$0xff]
    %v3265 = vld [vmem:[%s13 + $0x4d8] sm:$0xff]
    %v3266 = vld [vmem:[%s13 + $0x4e0] sm:$0xff]
    %v3267 = vld [vmem:[%s13 + $0x4e8] sm:$0xf]
    %v3268 = vld [vmem:[%s13 + $0x4ec] sm:$0xff]
    %v3269 = vld [vmem:[%s13 + $0x4f4] sm:$0xff]
    %v3270 = vld [vmem:[%s13 + $0x4fc] sm:$0xff]
    %v3271 = vld [vmem:[%s13 + $0x504] sm:$0xf]
    %v3272 = vld [vmem:[%s13 + $0x508] sm:$0xff]
    %v3273 = vld [vmem:[%s13 + $0x510] sm:$0xff]
    %v3274 = vld [vmem:[%s13 + $0x518] sm:$0xff]
    %v3275 = vld [vmem:[%s13 + $0x520] sm:$0xf]
    %v3276 = vld [vmem:[%s13 + $0x524] sm:$0xff]
    %v3277 = vld [vmem:[%s13 + $0x52c] sm:$0xff]
    %v3278 = vld [vmem:[%s13 + $0x534] sm:$0xff]
    %v3279 = vld [vmem:[%s13 + $0x53c] sm:$0xf]
    %v3280 = vld [vmem:[%s13 + $0x540] sm:$0xff]
    %v3281 = vld [vmem:[%s13 + $0x548] sm:$0xff]
    %v3282 = vld [vmem:[%s13 + $0x550] sm:$0xff]
    %v3283 = vld [vmem:[%s13 + $0x558] sm:$0xf]
    %v3284 = vld [vmem:[%s13 + $0x55c] sm:$0xff]
    %v3285 = vld [vmem:[%s13 + $0x564] sm:$0xff]
    %v3286 = vld [vmem:[%s13 + $0x56c] sm:$0xff]
    %v3287 = vld [vmem:[%s13 + $0x574] sm:$0xf]
    %v3288 = vld [vmem:[%s13 + $0x578] sm:$0xff]
    %v3289 = vld [vmem:[%s13 + $0x580] sm:$0xff]
    %v3290 = vld [vmem:[%s13 + $0x588] sm:$0xff]
    %v3291 = vld [vmem:[%s13 + $0x590] sm:$0xf]
    %v3292 = vld [vmem:[%s13 + $0x594] sm:$0xff]
    %v3293 = vld [vmem:[%s13 + $0x59c] sm:$0xff]
    %v3294 = vld [vmem:[%s13 + $0x5a4] sm:$0xff]
    %v3295 = vld [vmem:[%s13 + $0x5ac] sm:$0xf]
    %v3296 = vld [vmem:[%s13 + $0x5b0] sm:$0xff]
    %v3297 = vld [vmem:[%s13 + $0x5b8] sm:$0xff]
    %v3298 = vld [vmem:[%s13 + $0x5c0] sm:$0xff]
    %v3299 = vld [vmem:[%s13 + $0x5c8] sm:$0xf]
    %v3300 = vld [vmem:[%s13 + $0x5cc] sm:$0xff]
    %v3301 = vld [vmem:[%s13 + $0x5d4] sm:$0xff]
    %v3302 = vld [vmem:[%s13 + $0x5dc] sm:$0xff]
    %v3303 = vld [vmem:[%s13 + $0x5e4] sm:$0xf]
    %v3304 = vld [vmem:[%s13 + $0x5e8] sm:$0xff]
    %v3305 = vld [vmem:[%s13 + $0x5f0] sm:$0xff]
    %v3306 = vld [vmem:[%s13 + $0x5f8] sm:$0xff]
    %v3307 = vld [vmem:[%s13 + $0x600] sm:$0xf]
    %v3308 = vld [vmem:[%s13 + $0x604] sm:$0xff]
    %v3309 = vld [vmem:[%s13 + $0x60c] sm:$0xff]
    %v3310 = vld [vmem:[%s13 + $0x614] sm:$0xff]
    %v3311 = vld [vmem:[%s13 + $0x61c] sm:$0xf]
    %v3312 = vld [vmem:[%s13 + $0x620] sm:$0xff]
    %v3313 = vld [vmem:[%s13 + $0x628] sm:$0xff]
    %v3314 = vld [vmem:[%s13 + $0x630] sm:$0xff]
    %v3315 = vld [vmem:[%s13 + $0x638] sm:$0xf]
    %v3316 = vld [vmem:[%s13 + $0x63c] sm:$0xff]
    %v3317 = vld [vmem:[%s13 + $0x644] sm:$0xff]
    %v3318 = vld [vmem:[%s13 + $0x64c] sm:$0xff]
    %v3319 = vld [vmem:[%s13 + $0x654] sm:$0xf]
    %v3320 = vld [vmem:[%s13 + $0x658] sm:$0xff]
    %v3321 = vld [vmem:[%s13 + $0x660] sm:$0xff]
    %v3322 = vld [vmem:[%s13 + $0x668] sm:$0xff]
    %v3323 = vld [vmem:[%s13 + $0x670] sm:$0xf]
    %v3324 = vld [vmem:[%s13 + $0x674] sm:$0xff]
    %v3325 = vld [vmem:[%s13 + $0x67c] sm:$0xff]
    %v3326 = vld [vmem:[%s13 + $0x684] sm:$0xff]
    %v3327 = vld [vmem:[%s13 + $0x68c] sm:$0xf]
    %v3328 = vld [vmem:[%s13 + $0x690] sm:$0xff]
    %v3329 = vld [vmem:[%s13 + $0x698] sm:$0xff]
    %v3330 = vld [vmem:[%s13 + $0x6a0] sm:$0xff]
    %v3331 = vld [vmem:[%s13 + $0x6a8] sm:$0xf]
    %v3332 = vld [vmem:[%s13 + $0x6ac] sm:$0xff]
    %v3333 = vld [vmem:[%s13 + $0x6b4] sm:$0xff]
    %v3334 = vld [vmem:[%s13 + $0x6bc] sm:$0xff]
    %v3335 = vld [vmem:[%s13 + $0x6c4] sm:$0xf]
    %v3336 = vld [vmem:[%s13 + $0x6c8] sm:$0xff]
    %v3337 = vld [vmem:[%s13 + $0x6d0] sm:$0xff]
    %v3338 = vld [vmem:[%s13 + $0x6d8] sm:$0xff]
    %v3339 = vld [vmem:[%s13 + $0x6e0] sm:$0xf]
    %v3340 = vld [vmem:[%s13 + $0x6e4] sm:$0xff]
    %v3341 = vld [vmem:[%s13 + $0x6ec] sm:$0xff]
    %v3342 = vld [vmem:[%s13 + $0x6f4] sm:$0xff]
    %v3343 = vld [vmem:[%s13 + $0x6fc] sm:$0xf]
    %v3344 = vld [vmem:[%s13 + $0x700] sm:$0xff]
    %v3345 = vld [vmem:[%s13 + $0x708] sm:$0xff]
    %v3346 = vld [vmem:[%s13 + $0x710] sm:$0xff]
    %v3347 = vld [vmem:[%s13 + $0x718] sm:$0xf]
    %v3348 = vld [vmem:[%s13 + $0x71c] sm:$0xff]
    %v3349 = vld [vmem:[%s13 + $0x724] sm:$0xff]
    %v3350 = vld [vmem:[%s13 + $0x72c] sm:$0xff]
    %v3351 = vld [vmem:[%s13 + $0x734] sm:$0xf]
    %v3352 = vld [vmem:[%s13 + $0x738] sm:$0xff]
    %v3353 = vld [vmem:[%s13 + $0x740] sm:$0xff]
    %v3354 = vld [vmem:[%s13 + $0x748] sm:$0xff]
    %v3355 = vld [vmem:[%s13 + $0x750] sm:$0xf]
    %v3356 = vld [vmem:[%s13 + $0x754] sm:$0xff]
    %v3357 = vld [vmem:[%s13 + $0x75c] sm:$0xff]
    %v3358 = vld [vmem:[%s13 + $0x764] sm:$0xff]
    %v3359 = vld [vmem:[%s13 + $0x76c] sm:$0xf]
    %v3360 = vld [vmem:[%s13 + $0x770] sm:$0xff]
    %v3361 = vld [vmem:[%s13 + $0x778] sm:$0xff]
    %v3362 = vld [vmem:[%s13 + $0x780] sm:$0xff]
    %v3363 = vld [vmem:[%s13 + $0x788] sm:$0xf]
    %v3364 = vld [vmem:[%s13 + $0x78c] sm:$0xff]
    %v3365 = vld [vmem:[%s13 + $0x794] sm:$0xff]
    %v3366 = vld [vmem:[%s13 + $0x79c] sm:$0xff]
    %v3367 = vld [vmem:[%s13 + $0x7a4] sm:$0xf]
    %v3368 = vld [vmem:[%s13 + $0x7a8] sm:$0xff]
    %v3369 = vld [vmem:[%s13 + $0x7b0] sm:$0xff]
    %v3370 = vld [vmem:[%s13 + $0x7b8] sm:$0xff]
    %v3371 = vld [vmem:[%s13 + $0x7c0] sm:$0xf]
    %v3372 = vld [vmem:[%s13 + $0x7c4] sm:$0xff]
    %v3373 = vld [vmem:[%s13 + $0x7cc] sm:$0xff]
    %v3374 = vld [vmem:[%s13 + $0x7d4] sm:$0xff]
    %v3375 = vld [vmem:[%s13 + $0x7dc] sm:$0xf]
    %v3376 = vld [vmem:[%s13 + $0x7e0] sm:$0xff]
    %v3377 = vld [vmem:[%s13 + $0x7e8] sm:$0xff]
    %v3378 = vld [vmem:[%s13 + $0x7f0] sm:$0xff]
    %v3379 = vld [vmem:[%s13 + $0x7f8] sm:$0xf]
    %v3380 = vld [vmem:[%s13 + $0x7fc] sm:$0xff]
    %v3381 = vld [vmem:[%s13 + $0x804] sm:$0xff]
    %v3382 = vld [vmem:[%s13 + $0x80c] sm:$0xff]
    %v3383 = vld [vmem:[%s13 + $0x814] sm:$0xf]
    %v3384 = vld [vmem:[%s13 + $0x818] sm:$0xff]
    %v3385 = vld [vmem:[%s13 + $0x820] sm:$0xff]
    %v3386 = vld [vmem:[%s13 + $0x828] sm:$0xff]
    %v3387 = vld [vmem:[%s13 + $0x830] sm:$0xf]
    %v3388 = vld [vmem:[%s13 + $0x834] sm:$0xff]
    %v3389 = vld [vmem:[%s13 + $0x83c] sm:$0xff]
    %v3390 = vld [vmem:[%s13 + $0x844] sm:$0xff]
    %v3391 = vld [vmem:[%s13 + $0x84c] sm:$0xf]
    %v3392 = vld [vmem:[%s13 + $0x850] sm:$0xff]
    %v3393 = vld [vmem:[%s13 + $0x858] sm:$0xff]
    %v3394 = vld [vmem:[%s13 + $0x860] sm:$0xff]
    %v3395 = vld [vmem:[%s13 + $0x868] sm:$0xf]
    %v3396 = vld [vmem:[%s13 + $0x86c] sm:$0xff]
    %v3397 = vld [vmem:[%s13 + $0x874] sm:$0xff]
    %v3398 = vld [vmem:[%s13 + $0x87c] sm:$0xff]
    %v3399 = vld [vmem:[%s13 + $0x884] sm:$0xf]
    %v3400 = vld [vmem:[%s13 + $0x888] sm:$0xff]
    %v3401 = vld [vmem:[%s13 + $0x890] sm:$0xff]
    %v3402 = vld [vmem:[%s13 + $0x898] sm:$0xff]
    %v3403 = vld [vmem:[%s13 + $0x8a0] sm:$0xf]
    %v3404 = vld [vmem:[%s13 + $0x8a4] sm:$0xff]
    %v3405 = vld [vmem:[%s13 + $0x8ac] sm:$0xff]
    %v3406 = vld [vmem:[%s13 + $0x8b4] sm:$0xff]
    %v3407 = vld [vmem:[%s13 + $0x8bc] sm:$0xf]
    %v3408 = vld [vmem:[%s13 + $0x8c0] sm:$0xff]
    %v3409 = vld [vmem:[%s13 + $0x8c8] sm:$0xff]
    %v3410 = vld [vmem:[%s13 + $0x8d0] sm:$0xff]
    %v3411 = vld [vmem:[%s13 + $0x8d8] sm:$0xf]
    %v3412 = vld [vmem:[%s13 + $0x8dc] sm:$0xff]
    %v3413 = vld [vmem:[%s13 + $0x8e4] sm:$0xff]
    %v3414 = vld [vmem:[%s13 + $0x8ec] sm:$0xff]
    %v3415 = vld [vmem:[%s13 + $0x8f4] sm:$0xf]
    %v3416 = vld [vmem:[%s13 + $0x8f8] sm:$0xff]
    %v3417 = vld [vmem:[%s13 + $0x900] sm:$0xff]
    %v3418 = vld [vmem:[%s13 + $0x908] sm:$0xff]
    %v3419 = vld [vmem:[%s13 + $0x910] sm:$0xf]
    %v3420 = vld [vmem:[%s13 + $0x914] sm:$0xff]
    %v3421 = vld [vmem:[%s13 + $0x91c] sm:$0xff]
    %v3422 = vld [vmem:[%s13 + $0x924] sm:$0xff]
    %v3423 = vld [vmem:[%s13 + $0x92c] sm:$0xf]
    %v3424 = vld [vmem:[%s13 + $0x930] sm:$0xff]
    %v3425 = vld [vmem:[%s13 + $0x938] sm:$0xff]
    %v3426 = vld [vmem:[%s13 + $0x940] sm:$0xff]
    %v3427 = vld [vmem:[%s13 + $0x948] sm:$0xf]
    %v3428 = vld [vmem:[%s13 + $0x94c] sm:$0xff]
    %v3429 = vld [vmem:[%s13 + $0x954] sm:$0xff]
    %v3430 = vld [vmem:[%s13 + $0x95c] sm:$0xff]
    %v3431 = vld [vmem:[%s13 + $0x964] sm:$0xf]
    %v3432 = vld [vmem:[%s13 + $0x968] sm:$0xff]
    %v3433 = vld [vmem:[%s13 + $0x970] sm:$0xff]
    %v3434 = vld [vmem:[%s13 + $0x978] sm:$0xff]
    %v3435 = vld [vmem:[%s13 + $0x980] sm:$0xf]
    %v3436 = vld [vmem:[%s13 + $0x984] sm:$0xff]
    %v3437 = vld [vmem:[%s13 + $0x98c] sm:$0xff]
    %v3438 = vld [vmem:[%s13 + $0x994] sm:$0xff]
    %v3439 = vld [vmem:[%s13 + $0x99c] sm:$0xf]
    %v3440 = vld [vmem:[%s13 + $0x9a0] sm:$0xff]
    %v3441 = vld [vmem:[%s13 + $0x9a8] sm:$0xff]
    %v3442 = vld [vmem:[%s13 + $0x9b0] sm:$0xff]
    %v3443 = vld [vmem:[%s13 + $0x9b8] sm:$0xf]
    %v3444 = vld [vmem:[%s13 + $0x9bc] sm:$0xff]
    %v3445 = vld [vmem:[%s13 + $0x9c4] sm:$0xff]
    %v3446 = vld [vmem:[%s13 + $0x9cc] sm:$0xff]
    %v3447 = vld [vmem:[%s13 + $0x9d4] sm:$0xf]
    %v3448 = vld [vmem:[%s13 + $0x9d8] sm:$0xff]
    %v3449 = vld [vmem:[%s13 + $0x9e0] sm:$0xff]
    %v3450 = vld [vmem:[%s13 + $0x9e8] sm:$0xff]
    %v3451 = vld [vmem:[%s13 + $0x9f0] sm:$0xf]
    %v3452 = vld [vmem:[%s13 + $0x9f4] sm:$0xff]
    %v3453 = vld [vmem:[%s13 + $0x9fc] sm:$0xff]
    %v3454 = vld [vmem:[%s13 + $0xa04] sm:$0xff]
    %v3455 = vld [vmem:[%s13 + $0xa0c] sm:$0xf]
    %v3456 = vld [vmem:[%s13 + $0xa10] sm:$0xff]
    %v3457 = vld [vmem:[%s13 + $0xa18] sm:$0xff]
    %v3458 = vld [vmem:[%s13 + $0xa20] sm:$0xff]
    %v3459 = vld [vmem:[%s13 + $0xa28] sm:$0xf]
    %v3460 = vld [vmem:[%s13 + $0xa2c] sm:$0xff]
    %v3461 = vld [vmem:[%s13 + $0xa34] sm:$0xff]
    %v3462 = vld [vmem:[%s13 + $0xa3c] sm:$0xff]
    %v3463 = vld [vmem:[%s13 + $0xa44] sm:$0xf]
    %v3464 = vld [vmem:[%s13 + $0xa48] sm:$0xff]
    %v3465 = vld [vmem:[%s13 + $0xa50] sm:$0xff]
    %v3466 = vld [vmem:[%s13 + $0xa58] sm:$0xff]
    %v3467 = vld [vmem:[%s13 + $0xa60] sm:$0xf]
    %v3468 = vld [vmem:[%s13 + $0xa64] sm:$0xff]
    %v3469 = vld [vmem:[%s13 + $0xa6c] sm:$0xff]
    %v3470 = vld [vmem:[%s13 + $0xa74] sm:$0xff]
    %v3471 = vld [vmem:[%s13 + $0xa7c] sm:$0xf]
    %v3472 = vld [vmem:[%s13 + $0xa80] sm:$0xff]
    %v3473 = vld [vmem:[%s13 + $0xa88] sm:$0xff]
    %v3474 = vld [vmem:[%s13 + $0xa90] sm:$0xff]
    %v3475 = vld [vmem:[%s13 + $0xa98] sm:$0xf]
    %v3476 = vld [vmem:[%s13 + $0xa9c] sm:$0xff]
    %v3477 = vld [vmem:[%s13 + $0xaa4] sm:$0xff]
    %v3478 = vld [vmem:[%s13 + $0xaac] sm:$0xff]
    %v3479 = vld [vmem:[%s13 + $0xab4] sm:$0xf]
    %v3480 = vld [vmem:[%s13 + $0xab8] sm:$0xff]
    %v3481 = vld [vmem:[%s13 + $0xac0] sm:$0xff]
    %v3482 = vld [vmem:[%s13 + $0xac8] sm:$0xff]
    %v3483 = vld [vmem:[%s13 + $0xad0] sm:$0xf]
    %v3484 = vld [vmem:[%s13 + $0xad4] sm:$0xff]
    %v3485 = vld [vmem:[%s13 + $0xadc] sm:$0xff]
    %v3486 = vld [vmem:[%s13 + $0xae4] sm:$0xff]
    %v3487 = vld [vmem:[%s13 + $0xaec] sm:$0xf]
    %v3488 = vld [vmem:[%s13 + $0xaf0] sm:$0xff]
    %v3489 = vld [vmem:[%s13 + $0xaf8] sm:$0xff]
    %v3490 = vld [vmem:[%s13 + $0xb00] sm:$0xff]
    %v3491 = vld [vmem:[%s13 + $0xb08] sm:$0xf]
    %v3492 = vld [vmem:[%s13 + $0xb0c] sm:$0xff]
    %v3493 = vld [vmem:[%s13 + $0xb14] sm:$0xff]
    %v3494 = vld [vmem:[%s13 + $0xb1c] sm:$0xff]
    %v3495 = vld [vmem:[%s13 + $0xb24] sm:$0xf]
    %v3496 = vld [vmem:[%s13 + $0xb28] sm:$0xff]
    %v3497 = vld [vmem:[%s13 + $0xb30] sm:$0xff]
    %v3498 = vld [vmem:[%s13 + $0xb38] sm:$0xff]
    %v3499 = vld [vmem:[%s13 + $0xb40] sm:$0xf]
    %v3500 = vld [vmem:[%s13 + $0xb44] sm:$0xff]
    %v3501 = vld [vmem:[%s13 + $0xb4c] sm:$0xff]
    %v3502 = vld [vmem:[%s13 + $0xb54] sm:$0xff]
    %v3503 = vld [vmem:[%s13 + $0xb5c] sm:$0xf]
    %v3504 = vld [vmem:[%s13 + $0xb60] sm:$0xff]
    %v3505 = vld [vmem:[%s13 + $0xb68] sm:$0xff]
    %v3506 = vld [vmem:[%s13 + $0xb70] sm:$0xff]
    %v3507 = vld [vmem:[%s13 + $0xb78] sm:$0xf]
    %v3508 = vld [vmem:[%s13 + $0xb7c] sm:$0xff]
    %v3509 = vld [vmem:[%s13 + $0xb84] sm:$0xff]
    %v3510 = vld [vmem:[%s13 + $0xb8c] sm:$0xff]
    %v3511 = vld [vmem:[%s13 + $0xb94] sm:$0xf]
    %v3512 = vld [vmem:[%s13 + $0xb98] sm:$0xff]
    %v3513 = vld [vmem:[%s13 + $0xba0] sm:$0xff]
    %v3514 = vld [vmem:[%s13 + $0xba8] sm:$0xff]
    %v3515 = vld [vmem:[%s13 + $0xbb0] sm:$0xf]
    %v3516 = vld [vmem:[%s13 + $0xbb4] sm:$0xff]
    %v3517 = vld [vmem:[%s13 + $0xbbc] sm:$0xff]
    %v3518 = vld [vmem:[%s13 + $0xbc4] sm:$0xff]
    %v3519 = vld [vmem:[%s13 + $0xbcc] sm:$0xf]
    %v3520 = vld [vmem:[%s13 + $0xbd0] sm:$0xff]
    %v3521 = vld [vmem:[%s13 + $0xbd8] sm:$0xff]
    %v3522 = vld [vmem:[%s13 + $0xbe0] sm:$0xff]
    %v3523 = vld [vmem:[%s13 + $0xbe8] sm:$0xf]
    %v3524 = vld [vmem:[%s13 + $0xbec] sm:$0xff]
    %v3525 = vld [vmem:[%s13 + $0xbf4] sm:$0xff]
    %v3526 = vld [vmem:[%s13 + $0xbfc] sm:$0xff]
    %v3527 = vld [vmem:[%s13 + $0xc04] sm:$0xf]
    %v3528 = vld [vmem:[%s13 + $0xc08] sm:$0xff]
    %v3529 = vld [vmem:[%s13 + $0xc10] sm:$0xff]
    %v3530 = vld [vmem:[%s13 + $0xc18] sm:$0xff]
    %v3531 = vld [vmem:[%s13 + $0xc20] sm:$0xf]
    %v3532 = vld [vmem:[%s13 + $0xc24] sm:$0xff]
    %v3533 = vld [vmem:[%s13 + $0xc2c] sm:$0xff]
    %v3534 = vld [vmem:[%s13 + $0xc34] sm:$0xff]
    %v3535 = vld [vmem:[%s13 + $0xc3c] sm:$0xf]
    %v3536 = vld [vmem:[%s13 + $0xc40] sm:$0xff]
    %v3537 = vld [vmem:[%s13 + $0xc48] sm:$0xff]
    %v3538 = vld [vmem:[%s13 + $0xc50] sm:$0xff]
    %v3539 = vld [vmem:[%s13 + $0xc58] sm:$0xf]
    %v3540 = vld [vmem:[%s13 + $0xc5c] sm:$0xff]
    %v3541 = vld [vmem:[%s13 + $0xc64] sm:$0xff]
    %v3542 = vld [vmem:[%s13 + $0xc6c] sm:$0xff]
    %v3543 = vld [vmem:[%s13 + $0xc74] sm:$0xf]
    %v3544 = vld [vmem:[%s13 + $0xc78] sm:$0xff]
    %v3545 = vld [vmem:[%s13 + $0xc80] sm:$0xff]
    %v3546 = vld [vmem:[%s13 + $0xc88] sm:$0xff]
    %v3547 = vld [vmem:[%s13 + $0xc90] sm:$0xf]
    %v3548 = vld [vmem:[%s13 + $0xc94] sm:$0xff]
    %v3549 = vld [vmem:[%s13 + $0xc9c] sm:$0xff]
    %v3550 = vld [vmem:[%s13 + $0xca4] sm:$0xff]
    %v3551 = vld [vmem:[%s13 + $0xcac] sm:$0xf]
    %v3552 = vld [vmem:[%s13 + $0xcb0] sm:$0xff]
    %v3553 = vld [vmem:[%s13 + $0xcb8] sm:$0xff]
    %v3554 = vld [vmem:[%s13 + $0xcc0] sm:$0xff]
    %v3555 = vld [vmem:[%s13 + $0xcc8] sm:$0xf]
    %v3556 = vld [vmem:[%s13 + $0xccc] sm:$0xff]
    %v3557 = vld [vmem:[%s13 + $0xcd4] sm:$0xff]
    %v3558 = vld [vmem:[%s13 + $0xcdc] sm:$0xff]
    %v3559 = vld [vmem:[%s13 + $0xce4] sm:$0xf]
    %v3560 = vld [vmem:[%s13 + $0xce8] sm:$0xff]
    %v3561 = vld [vmem:[%s13 + $0xcf0] sm:$0xff]
    %v3562 = vld [vmem:[%s13 + $0xcf8] sm:$0xff]
    %v3563 = vld [vmem:[%s13 + $0xd00] sm:$0xf]
    %v3564 = vld [vmem:[%s13 + $0xd04] sm:$0xff]
    %v3565 = vld [vmem:[%s13 + $0xd0c] sm:$0xff]
    %v3566 = vld [vmem:[%s13 + $0xd14] sm:$0xff]
    %v3567 = vld [vmem:[%s13 + $0xd1c] sm:$0xf]
    %v3568 = vld [vmem:[%s13 + $0xd20] sm:$0xff]
    %v3569 = vld [vmem:[%s13 + $0xd28] sm:$0xff]
    %v3570 = vld [vmem:[%s13 + $0xd30] sm:$0xff]
    %v3571 = vld [vmem:[%s13 + $0xd38] sm:$0xf]
    %v3572 = vld [vmem:[%s13 + $0xd3c] sm:$0xff]
    %v3573 = vld [vmem:[%s13 + $0xd44] sm:$0xff]
    %v3574 = vld [vmem:[%s13 + $0xd4c] sm:$0xff]
    %v3575 = vld [vmem:[%s13 + $0xd54] sm:$0xf]
    %v3576 = vld [vmem:[%s13 + $0xd58] sm:$0xff]
    %v3577 = vld [vmem:[%s13 + $0xd60] sm:$0xff]
    %v3578 = vld [vmem:[%s13 + $0xd68] sm:$0xff]
    %v3579 = vld [vmem:[%s13 + $0xd70] sm:$0xf]
    %v3580 = vld [vmem:[%s13 + $0xd74] sm:$0xff]
    %v3581 = vld [vmem:[%s13 + $0xd7c] sm:$0xff]
    %v3582 = vld [vmem:[%s13 + $0xd84] sm:$0xff]
    %v3583 = vld [vmem:[%s13 + $0xd8c] sm:$0xf]
    %v3584 = vld [vmem:[%s13 + $0xd90] sm:$0xff]
    %v3585 = vld [vmem:[%s13 + $0xd98] sm:$0xff]
    %v3586 = vld [vmem:[%s13 + $0xda0] sm:$0xff]
    %v3587 = vld [vmem:[%s13 + $0xda8] sm:$0xf]
    %v3588 = vld [vmem:[%s13 + $0xdac] sm:$0xff]
    %v3589 = vld [vmem:[%s13 + $0xdb4] sm:$0xff]
    %v3590 = vld [vmem:[%s13 + $0xdbc] sm:$0xff]
    %v3591 = vld [vmem:[%s13 + $0xdc4] sm:$0xf]
    %v3592 = vld [vmem:[%s13 + $0xdc8] sm:$0xff]
    %v3593 = vld [vmem:[%s13 + $0xdd0] sm:$0xff]
    %v3594 = vld [vmem:[%s13 + $0xdd8] sm:$0xff]
    %v3595 = vld [vmem:[%s13 + $0xde0] sm:$0xf]
    %v3596 = vld [vmem:[%s13 + $0xde4] sm:$0xff]
    %v3597 = vld [vmem:[%s13 + $0xdec] sm:$0xff]
    %v3598 = vld [vmem:[%s13 + $0xdf4] sm:$0xff]
    %v3599 = vld [vmem:[%s13 + $0xdfc] sm:$0xf]
    %v3600 = vld [vmem:[%s14] sm:$0x7f]
    %v3602 = vlaneseq
    %v3603 = vshrl.u32 %v3602, 7
    %v3604 = vsub.s32 0, %v3603
    %v3605 = vrot.slane %v3600, %v3604
    %v3606 = vlaneseq
    %v3607 = vshrl.u32 %v3606, 7
    %v3608 = vsub.s32 1, %v3607
    %v3609 = vrot.slane %v3600, %v3608
    %v3610 = vlaneseq
    %v3611 = vshrl.u32 %v3610, 7
    %v3612 = vsub.s32 2, %v3611
    %v3613 = vrot.slane %v3600, %v3612
    %v3614 = vlaneseq
    %v3615 = vshrl.u32 %v3614, 7
    %v3616 = vsub.s32 3, %v3615
    %v3617 = vrot.slane %v3600, %v3616
    %v3618 = vlaneseq
    %v3619 = vshrl.u32 %v3618, 7
    %v3620 = vsub.s32 4, %v3619
    %v3621 = vrot.slane %v3600, %v3620
    %v3622 = vlaneseq
    %v3623 = vshrl.u32 %v3622, 7
    %v3624 = vsub.s32 5, %v3623
    %v3625 = vrot.slane %v3600, %v3624
    %v3626 = vlaneseq
    %v3627 = vshrl.u32 %v3626, 7
    %v3628 = vsub.s32 6, %v3627
    %v3629 = vrot.slane %v3600, %v3628
    %v4149 = vunpack.c.l.b16 %v3088
    %v4150 = vunpack.c.h.b16 %v3088
    %v4151 = vunpack.c.l.b16 %v3089
    %v4152 = vunpack.c.h.b16 %v3089
    %v4153 = vunpack.c.l.b16 %v3090
    %v4154 = vunpack.c.h.b16 %v3090
    %v4155 = vunpack.c.l.b16 %v3091
    %v4156 = vunpack.c.l.b16 %v3092
    %v4157 = vunpack.c.h.b16 %v3092
    %v4158 = vunpack.c.l.b16 %v3093
    %v4159 = vunpack.c.h.b16 %v3093
    %v4160 = vunpack.c.l.b16 %v3094
    %v4161 = vunpack.c.h.b16 %v3094
    %v4162 = vunpack.c.l.b16 %v3095
    %v4163 = vunpack.c.l.b16 %v3096
    %v4164 = vunpack.c.h.b16 %v3096
    %v4165 = vunpack.c.l.b16 %v3097
    %v4166 = vunpack.c.h.b16 %v3097
    %v4167 = vunpack.c.l.b16 %v3098
    %v4168 = vunpack.c.h.b16 %v3098
    %v4169 = vunpack.c.l.b16 %v3099
    %v4170 = vunpack.c.l.b16 %v3100
    %v4171 = vunpack.c.h.b16 %v3100
    %v4172 = vunpack.c.l.b16 %v3101
    %v4173 = vunpack.c.h.b16 %v3101
    %v4174 = vunpack.c.l.b16 %v3102
    %v4175 = vunpack.c.h.b16 %v3102
    %v4176 = vunpack.c.l.b16 %v3103
    %v4177 = vunpack.c.l.b16 %v3104
    %v4178 = vunpack.c.h.b16 %v3104
    %v4179 = vunpack.c.l.b16 %v3105
    %v4180 = vunpack.c.h.b16 %v3105
    %v4181 = vunpack.c.l.b16 %v3106
    %v4182 = vunpack.c.h.b16 %v3106
    %v4183 = vunpack.c.l.b16 %v3107
    %v4184 = vunpack.c.l.b16 %v3108
    %v4185 = vunpack.c.h.b16 %v3108
    %v4186 = vunpack.c.l.b16 %v3109
    %v4187 = vunpack.c.h.b16 %v3109
    %v4188 = vunpack.c.l.b16 %v3110
    %v4189 = vunpack.c.h.b16 %v3110
    %v4190 = vunpack.c.l.b16 %v3111
    %v4191 = vunpack.c.l.b16 %v3112
    %v4192 = vunpack.c.h.b16 %v3112
    %v4193 = vunpack.c.l.b16 %v3113
    %v4194 = vunpack.c.h.b16 %v3113
    %v4195 = vunpack.c.l.b16 %v3114
    %v4196 = vunpack.c.h.b16 %v3114
    %v4197 = vunpack.c.l.b16 %v3115
    %v4198 = vunpack.c.l.b16 %v3116
    %v4199 = vunpack.c.h.b16 %v3116
    %v4200 = vunpack.c.l.b16 %v3117
    %v4201 = vunpack.c.h.b16 %v3117
    %v4202 = vunpack.c.l.b16 %v3118
    %v4203 = vunpack.c.h.b16 %v3118
    %v4204 = vunpack.c.l.b16 %v3119
    %v4205 = vunpack.c.l.b16 %v3120
    %v4206 = vunpack.c.h.b16 %v3120
    %v4207 = vunpack.c.l.b16 %v3121
    %v4208 = vunpack.c.h.b16 %v3121
    %v4209 = vunpack.c.l.b16 %v3122
    %v4210 = vunpack.c.h.b16 %v3122
    %v4211 = vunpack.c.l.b16 %v3123
    %v4212 = vunpack.c.l.b16 %v3124
    %v4213 = vunpack.c.h.b16 %v3124
    %v4214 = vunpack.c.l.b16 %v3125
    %v4215 = vunpack.c.h.b16 %v3125
    %v4216 = vunpack.c.l.b16 %v3126
    %v4217 = vunpack.c.h.b16 %v3126
    %v4218 = vunpack.c.l.b16 %v3127
    %v4219 = vunpack.c.l.b16 %v3128
    %v4220 = vunpack.c.h.b16 %v3128
    %v4221 = vunpack.c.l.b16 %v3129
    %v4222 = vunpack.c.h.b16 %v3129
    %v4223 = vunpack.c.l.b16 %v3130
    %v4224 = vunpack.c.h.b16 %v3130
    %v4225 = vunpack.c.l.b16 %v3131
    %v4226 = vunpack.c.l.b16 %v3132
    %v4227 = vunpack.c.h.b16 %v3132
    %v4228 = vunpack.c.l.b16 %v3133
    %v4229 = vunpack.c.h.b16 %v3133
    %v4230 = vunpack.c.l.b16 %v3134
    %v4231 = vunpack.c.h.b16 %v3134
    %v4232 = vunpack.c.l.b16 %v3135
    %v4233 = vunpack.c.l.b16 %v3136
    %v4234 = vunpack.c.h.b16 %v3136
    %v4235 = vunpack.c.l.b16 %v3137
    %v4236 = vunpack.c.h.b16 %v3137
    %v4237 = vunpack.c.l.b16 %v3138
    %v4238 = vunpack.c.h.b16 %v3138
    %v4239 = vunpack.c.l.b16 %v3139
    %v4240 = vunpack.c.l.b16 %v3140
    %v4241 = vunpack.c.h.b16 %v3140
    %v4242 = vunpack.c.l.b16 %v3141
    %v4243 = vunpack.c.h.b16 %v3141
    %v4244 = vunpack.c.l.b16 %v3142
    %v4245 = vunpack.c.h.b16 %v3142
    %v4246 = vunpack.c.l.b16 %v3143
    %v4247 = vunpack.c.l.b16 %v3144
    %v4248 = vunpack.c.h.b16 %v3144
    %v4249 = vunpack.c.l.b16 %v3145
    %v4250 = vunpack.c.h.b16 %v3145
    %v4251 = vunpack.c.l.b16 %v3146
    %v4252 = vunpack.c.h.b16 %v3146
    %v4253 = vunpack.c.l.b16 %v3147
    %v4254 = vunpack.c.l.b16 %v3148
    %v4255 = vunpack.c.h.b16 %v3148
    %v4256 = vunpack.c.l.b16 %v3149
    %v4257 = vunpack.c.h.b16 %v3149
    %v4258 = vunpack.c.l.b16 %v3150
    %v4259 = vunpack.c.h.b16 %v3150
    %v4260 = vunpack.c.l.b16 %v3151
    %v4261 = vunpack.c.l.b16 %v3152
    %v4262 = vunpack.c.h.b16 %v3152
    %v4263 = vunpack.c.l.b16 %v3153
    %v4264 = vunpack.c.h.b16 %v3153
    %v4265 = vunpack.c.l.b16 %v3154
    %v4266 = vunpack.c.h.b16 %v3154
    %v4267 = vunpack.c.l.b16 %v3155
    %v4268 = vunpack.c.l.b16 %v3156
    %v4269 = vunpack.c.h.b16 %v3156
    %v4270 = vunpack.c.l.b16 %v3157
    %v4271 = vunpack.c.h.b16 %v3157
    %v4272 = vunpack.c.l.b16 %v3158
    %v4273 = vunpack.c.h.b16 %v3158
    %v4274 = vunpack.c.l.b16 %v3159
    %v4275 = vunpack.c.l.b16 %v3160
    %v4276 = vunpack.c.h.b16 %v3160
    %v4277 = vunpack.c.l.b16 %v3161
    %v4278 = vunpack.c.h.b16 %v3161
    %v4279 = vunpack.c.l.b16 %v3162
    %v4280 = vunpack.c.h.b16 %v3162
    %v4281 = vunpack.c.l.b16 %v3163
    %v4282 = vunpack.c.l.b16 %v3164
    %v4283 = vunpack.c.h.b16 %v3164
    %v4284 = vunpack.c.l.b16 %v3165
    %v4285 = vunpack.c.h.b16 %v3165
    %v4286 = vunpack.c.l.b16 %v3166
    %v4287 = vunpack.c.h.b16 %v3166
    %v4288 = vunpack.c.l.b16 %v3167
    %v4289 = vunpack.c.l.b16 %v3168
    %v4290 = vunpack.c.h.b16 %v3168
    %v4291 = vunpack.c.l.b16 %v3169
    %v4292 = vunpack.c.h.b16 %v3169
    %v4293 = vunpack.c.l.b16 %v3170
    %v4294 = vunpack.c.h.b16 %v3170
    %v4295 = vunpack.c.l.b16 %v3171
    %v4296 = vunpack.c.l.b16 %v3172
    %v4297 = vunpack.c.h.b16 %v3172
    %v4298 = vunpack.c.l.b16 %v3173
    %v4299 = vunpack.c.h.b16 %v3173
    %v4300 = vunpack.c.l.b16 %v3174
    %v4301 = vunpack.c.h.b16 %v3174
    %v4302 = vunpack.c.l.b16 %v3175
    %v4303 = vunpack.c.l.b16 %v3176
    %v4304 = vunpack.c.h.b16 %v3176
    %v4305 = vunpack.c.l.b16 %v3177
    %v4306 = vunpack.c.h.b16 %v3177
    %v4307 = vunpack.c.l.b16 %v3178
    %v4308 = vunpack.c.h.b16 %v3178
    %v4309 = vunpack.c.l.b16 %v3179
    %v4310 = vunpack.c.l.b16 %v3180
    %v4311 = vunpack.c.h.b16 %v3180
    %v4312 = vunpack.c.l.b16 %v3181
    %v4313 = vunpack.c.h.b16 %v3181
    %v4314 = vunpack.c.l.b16 %v3182
    %v4315 = vunpack.c.h.b16 %v3182
    %v4316 = vunpack.c.l.b16 %v3183
    %v4317 = vunpack.c.l.b16 %v3184
    %v4318 = vunpack.c.h.b16 %v3184
    %v4319 = vunpack.c.l.b16 %v3185
    %v4320 = vunpack.c.h.b16 %v3185
    %v4321 = vunpack.c.l.b16 %v3186
    %v4322 = vunpack.c.h.b16 %v3186
    %v4323 = vunpack.c.l.b16 %v3187
    %v4324 = vunpack.c.l.b16 %v3188
    %v4325 = vunpack.c.h.b16 %v3188
    %v4326 = vunpack.c.l.b16 %v3189
    %v4327 = vunpack.c.h.b16 %v3189
    %v4328 = vunpack.c.l.b16 %v3190
    %v4329 = vunpack.c.h.b16 %v3190
    %v4330 = vunpack.c.l.b16 %v3191
    %v4331 = vunpack.c.l.b16 %v3192
    %v4332 = vunpack.c.h.b16 %v3192
    %v4333 = vunpack.c.l.b16 %v3193
    %v4334 = vunpack.c.h.b16 %v3193
    %v4335 = vunpack.c.l.b16 %v3194
    %v4336 = vunpack.c.h.b16 %v3194
    %v4337 = vunpack.c.l.b16 %v3195
    %v4338 = vunpack.c.l.b16 %v3196
    %v4339 = vunpack.c.h.b16 %v3196
    %v4340 = vunpack.c.l.b16 %v3197
    %v4341 = vunpack.c.h.b16 %v3197
    %v4342 = vunpack.c.l.b16 %v3198
    %v4343 = vunpack.c.h.b16 %v3198
    %v4344 = vunpack.c.l.b16 %v3199
    %v4345 = vunpack.c.l.b16 %v3200
    %v4346 = vunpack.c.h.b16 %v3200
    %v4347 = vunpack.c.l.b16 %v3201
    %v4348 = vunpack.c.h.b16 %v3201
    %v4349 = vunpack.c.l.b16 %v3202
    %v4350 = vunpack.c.h.b16 %v3202
    %v4351 = vunpack.c.l.b16 %v3203
    %v4352 = vunpack.c.l.b16 %v3204
    %v4353 = vunpack.c.h.b16 %v3204
    %v4354 = vunpack.c.l.b16 %v3205
    %v4355 = vunpack.c.h.b16 %v3205
    %v4356 = vunpack.c.l.b16 %v3206
    %v4357 = vunpack.c.h.b16 %v3206
    %v4358 = vunpack.c.l.b16 %v3207
    %v4359 = vunpack.c.l.b16 %v3208
    %v4360 = vunpack.c.h.b16 %v3208
    %v4361 = vunpack.c.l.b16 %v3209
    %v4362 = vunpack.c.h.b16 %v3209
    %v4363 = vunpack.c.l.b16 %v3210
    %v4364 = vunpack.c.h.b16 %v3210
    %v4365 = vunpack.c.l.b16 %v3211
    %v4366 = vunpack.c.l.b16 %v3212
    %v4367 = vunpack.c.h.b16 %v3212
    %v4368 = vunpack.c.l.b16 %v3213
    %v4369 = vunpack.c.h.b16 %v3213
    %v4370 = vunpack.c.l.b16 %v3214
    %v4371 = vunpack.c.h.b16 %v3214
    %v4372 = vunpack.c.l.b16 %v3215
    %v4373 = vunpack.c.l.b16 %v3216
    %v4374 = vunpack.c.h.b16 %v3216
    %v4375 = vunpack.c.l.b16 %v3217
    %v4376 = vunpack.c.h.b16 %v3217
    %v4377 = vunpack.c.l.b16 %v3218
    %v4378 = vunpack.c.h.b16 %v3218
    %v4379 = vunpack.c.l.b16 %v3219
    %v4380 = vunpack.c.l.b16 %v3220
    %v4381 = vunpack.c.h.b16 %v3220
    %v4382 = vunpack.c.l.b16 %v3221
    %v4383 = vunpack.c.h.b16 %v3221
    %v4384 = vunpack.c.l.b16 %v3222
    %v4385 = vunpack.c.h.b16 %v3222
    %v4386 = vunpack.c.l.b16 %v3223
    %v4387 = vunpack.c.l.b16 %v3224
    %v4388 = vunpack.c.h.b16 %v3224
    %v4389 = vunpack.c.l.b16 %v3225
    %v4390 = vunpack.c.h.b16 %v3225
    %v4391 = vunpack.c.l.b16 %v3226
    %v4392 = vunpack.c.h.b16 %v3226
    %v4393 = vunpack.c.l.b16 %v3227
    %v4394 = vunpack.c.l.b16 %v3228
    %v4395 = vunpack.c.h.b16 %v3228
    %v4396 = vunpack.c.l.b16 %v3229
    %v4397 = vunpack.c.h.b16 %v3229
    %v4398 = vunpack.c.l.b16 %v3230
    %v4399 = vunpack.c.h.b16 %v3230
    %v4400 = vunpack.c.l.b16 %v3231
    %v4401 = vunpack.c.l.b16 %v3232
    %v4402 = vunpack.c.h.b16 %v3232
    %v4403 = vunpack.c.l.b16 %v3233
    %v4404 = vunpack.c.h.b16 %v3233
    %v4405 = vunpack.c.l.b16 %v3234
    %v4406 = vunpack.c.h.b16 %v3234
    %v4407 = vunpack.c.l.b16 %v3235
    %v4408 = vunpack.c.l.b16 %v3236
    %v4409 = vunpack.c.h.b16 %v3236
    %v4410 = vunpack.c.l.b16 %v3237
    %v4411 = vunpack.c.h.b16 %v3237
    %v4412 = vunpack.c.l.b16 %v3238
    %v4413 = vunpack.c.h.b16 %v3238
    %v4414 = vunpack.c.l.b16 %v3239
    %v4415 = vunpack.c.l.b16 %v3240
    %v4416 = vunpack.c.h.b16 %v3240
    %v4417 = vunpack.c.l.b16 %v3241
    %v4418 = vunpack.c.h.b16 %v3241
    %v4419 = vunpack.c.l.b16 %v3242
    %v4420 = vunpack.c.h.b16 %v3242
    %v4421 = vunpack.c.l.b16 %v3243
    %v4422 = vunpack.c.l.b16 %v3244
    %v4423 = vunpack.c.h.b16 %v3244
    %v4424 = vunpack.c.l.b16 %v3245
    %v4425 = vunpack.c.h.b16 %v3245
    %v4426 = vunpack.c.l.b16 %v3246
    %v4427 = vunpack.c.h.b16 %v3246
    %v4428 = vunpack.c.l.b16 %v3247
    %v4429 = vunpack.c.l.b16 %v3248
    %v4430 = vunpack.c.h.b16 %v3248
    %v4431 = vunpack.c.l.b16 %v3249
    %v4432 = vunpack.c.h.b16 %v3249
    %v4433 = vunpack.c.l.b16 %v3250
    %v4434 = vunpack.c.h.b16 %v3250
    %v4435 = vunpack.c.l.b16 %v3251
    %v4436 = vunpack.c.l.b16 %v3252
    %v4437 = vunpack.c.h.b16 %v3252
    %v4438 = vunpack.c.l.b16 %v3253
    %v4439 = vunpack.c.h.b16 %v3253
    %v4440 = vunpack.c.l.b16 %v3254
    %v4441 = vunpack.c.h.b16 %v3254
    %v4442 = vunpack.c.l.b16 %v3255
    %v4443 = vunpack.c.l.b16 %v3256
    %v4444 = vunpack.c.h.b16 %v3256
    %v4445 = vunpack.c.l.b16 %v3257
    %v4446 = vunpack.c.h.b16 %v3257
    %v4447 = vunpack.c.l.b16 %v3258
    %v4448 = vunpack.c.h.b16 %v3258
    %v4449 = vunpack.c.l.b16 %v3259
    %v4450 = vunpack.c.l.b16 %v3260
    %v4451 = vunpack.c.h.b16 %v3260
    %v4452 = vunpack.c.l.b16 %v3261
    %v4453 = vunpack.c.h.b16 %v3261
    %v4454 = vunpack.c.l.b16 %v3262
    %v4455 = vunpack.c.h.b16 %v3262
    %v4456 = vunpack.c.l.b16 %v3263
    %v4457 = vunpack.c.l.b16 %v3264
    %v4458 = vunpack.c.h.b16 %v3264
    %v4459 = vunpack.c.l.b16 %v3265
    %v4460 = vunpack.c.h.b16 %v3265
    %v4461 = vunpack.c.l.b16 %v3266
    %v4462 = vunpack.c.h.b16 %v3266
    %v4463 = vunpack.c.l.b16 %v3267
    %v4464 = vunpack.c.l.b16 %v3268
    %v4465 = vunpack.c.h.b16 %v3268
    %v4466 = vunpack.c.l.b16 %v3269
    %v4467 = vunpack.c.h.b16 %v3269
    %v4468 = vunpack.c.l.b16 %v3270
    %v4469 = vunpack.c.h.b16 %v3270
    %v4470 = vunpack.c.l.b16 %v3271
    %v4471 = vunpack.c.l.b16 %v3272
    %v4472 = vunpack.c.h.b16 %v3272
    %v4473 = vunpack.c.l.b16 %v3273
    %v4474 = vunpack.c.h.b16 %v3273
    %v4475 = vunpack.c.l.b16 %v3274
    %v4476 = vunpack.c.h.b16 %v3274
    %v4477 = vunpack.c.l.b16 %v3275
    %v4478 = vunpack.c.l.b16 %v3276
    %v4479 = vunpack.c.h.b16 %v3276
    %v4480 = vunpack.c.l.b16 %v3277
    %v4481 = vunpack.c.h.b16 %v3277
    %v4482 = vunpack.c.l.b16 %v3278
    %v4483 = vunpack.c.h.b16 %v3278
    %v4484 = vunpack.c.l.b16 %v3279
    %v4485 = vunpack.c.l.b16 %v3280
    %v4486 = vunpack.c.h.b16 %v3280
    %v4487 = vunpack.c.l.b16 %v3281
    %v4488 = vunpack.c.h.b16 %v3281
    %v4489 = vunpack.c.l.b16 %v3282
    %v4490 = vunpack.c.h.b16 %v3282
    %v4491 = vunpack.c.l.b16 %v3283
    %v4492 = vunpack.c.l.b16 %v3284
    %v4493 = vunpack.c.h.b16 %v3284
    %v4494 = vunpack.c.l.b16 %v3285
    %v4495 = vunpack.c.h.b16 %v3285
    %v4496 = vunpack.c.l.b16 %v3286
    %v4497 = vunpack.c.h.b16 %v3286
    %v4498 = vunpack.c.l.b16 %v3287
    %v4499 = vunpack.c.l.b16 %v3288
    %v4500 = vunpack.c.h.b16 %v3288
    %v4501 = vunpack.c.l.b16 %v3289
    %v4502 = vunpack.c.h.b16 %v3289
    %v4503 = vunpack.c.l.b16 %v3290
    %v4504 = vunpack.c.h.b16 %v3290
    %v4505 = vunpack.c.l.b16 %v3291
    %v4506 = vunpack.c.l.b16 %v3292
    %v4507 = vunpack.c.h.b16 %v3292
    %v4508 = vunpack.c.l.b16 %v3293
    %v4509 = vunpack.c.h.b16 %v3293
    %v4510 = vunpack.c.l.b16 %v3294
    %v4511 = vunpack.c.h.b16 %v3294
    %v4512 = vunpack.c.l.b16 %v3295
    %v4513 = vunpack.c.l.b16 %v3296
    %v4514 = vunpack.c.h.b16 %v3296
    %v4515 = vunpack.c.l.b16 %v3297
    %v4516 = vunpack.c.h.b16 %v3297
    %v4517 = vunpack.c.l.b16 %v3298
    %v4518 = vunpack.c.h.b16 %v3298
    %v4519 = vunpack.c.l.b16 %v3299
    %v4520 = vunpack.c.l.b16 %v3300
    %v4521 = vunpack.c.h.b16 %v3300
    %v4522 = vunpack.c.l.b16 %v3301
    %v4523 = vunpack.c.h.b16 %v3301
    %v4524 = vunpack.c.l.b16 %v3302
    %v4525 = vunpack.c.h.b16 %v3302
    %v4526 = vunpack.c.l.b16 %v3303
    %v4527 = vunpack.c.l.b16 %v3304
    %v4528 = vunpack.c.h.b16 %v3304
    %v4529 = vunpack.c.l.b16 %v3305
    %v4530 = vunpack.c.h.b16 %v3305
    %v4531 = vunpack.c.l.b16 %v3306
    %v4532 = vunpack.c.h.b16 %v3306
    %v4533 = vunpack.c.l.b16 %v3307
    %v4534 = vunpack.c.l.b16 %v3308
    %v4535 = vunpack.c.h.b16 %v3308
    %v4536 = vunpack.c.l.b16 %v3309
    %v4537 = vunpack.c.h.b16 %v3309
    %v4538 = vunpack.c.l.b16 %v3310
    %v4539 = vunpack.c.h.b16 %v3310
    %v4540 = vunpack.c.l.b16 %v3311
    %v4541 = vunpack.c.l.b16 %v3312
    %v4542 = vunpack.c.h.b16 %v3312
    %v4543 = vunpack.c.l.b16 %v3313
    %v4544 = vunpack.c.h.b16 %v3313
    %v4545 = vunpack.c.l.b16 %v3314
    %v4546 = vunpack.c.h.b16 %v3314
    %v4547 = vunpack.c.l.b16 %v3315
    %v4548 = vunpack.c.l.b16 %v3316
    %v4549 = vunpack.c.h.b16 %v3316
    %v4550 = vunpack.c.l.b16 %v3317
    %v4551 = vunpack.c.h.b16 %v3317
    %v4552 = vunpack.c.l.b16 %v3318
    %v4553 = vunpack.c.h.b16 %v3318
    %v4554 = vunpack.c.l.b16 %v3319
    %v4555 = vunpack.c.l.b16 %v3320
    %v4556 = vunpack.c.h.b16 %v3320
    %v4557 = vunpack.c.l.b16 %v3321
    %v4558 = vunpack.c.h.b16 %v3321
    %v4559 = vunpack.c.l.b16 %v3322
    %v4560 = vunpack.c.h.b16 %v3322
    %v4561 = vunpack.c.l.b16 %v3323
    %v4562 = vunpack.c.l.b16 %v3324
    %v4563 = vunpack.c.h.b16 %v3324
    %v4564 = vunpack.c.l.b16 %v3325
    %v4565 = vunpack.c.h.b16 %v3325
    %v4566 = vunpack.c.l.b16 %v3326
    %v4567 = vunpack.c.h.b16 %v3326
    %v4568 = vunpack.c.l.b16 %v3327
    %v4569 = vunpack.c.l.b16 %v3328
    %v4570 = vunpack.c.h.b16 %v3328
    %v4571 = vunpack.c.l.b16 %v3329
    %v4572 = vunpack.c.h.b16 %v3329
    %v4573 = vunpack.c.l.b16 %v3330
    %v4574 = vunpack.c.h.b16 %v3330
    %v4575 = vunpack.c.l.b16 %v3331
    %v4576 = vunpack.c.l.b16 %v3332
    %v4577 = vunpack.c.h.b16 %v3332
    %v4578 = vunpack.c.l.b16 %v3333
    %v4579 = vunpack.c.h.b16 %v3333
    %v4580 = vunpack.c.l.b16 %v3334
    %v4581 = vunpack.c.h.b16 %v3334
    %v4582 = vunpack.c.l.b16 %v3335
    %v4583 = vunpack.c.l.b16 %v3336
    %v4584 = vunpack.c.h.b16 %v3336
    %v4585 = vunpack.c.l.b16 %v3337
    %v4586 = vunpack.c.h.b16 %v3337
    %v4587 = vunpack.c.l.b16 %v3338
    %v4588 = vunpack.c.h.b16 %v3338
    %v4589 = vunpack.c.l.b16 %v3339
    %v4590 = vunpack.c.l.b16 %v3340
    %v4591 = vunpack.c.h.b16 %v3340
    %v4592 = vunpack.c.l.b16 %v3341
    %v4593 = vunpack.c.h.b16 %v3341
    %v4594 = vunpack.c.l.b16 %v3342
    %v4595 = vunpack.c.h.b16 %v3342
    %v4596 = vunpack.c.l.b16 %v3343
    %v4597 = vunpack.c.l.b16 %v3344
    %v4598 = vunpack.c.h.b16 %v3344
    %v4599 = vunpack.c.l.b16 %v3345
    %v4600 = vunpack.c.h.b16 %v3345
    %v4601 = vunpack.c.l.b16 %v3346
    %v4602 = vunpack.c.h.b16 %v3346
    %v4603 = vunpack.c.l.b16 %v3347
    %v4604 = vunpack.c.l.b16 %v3348
    %v4605 = vunpack.c.h.b16 %v3348
    %v4606 = vunpack.c.l.b16 %v3349
    %v4607 = vunpack.c.h.b16 %v3349
    %v4608 = vunpack.c.l.b16 %v3350
    %v4609 = vunpack.c.h.b16 %v3350
    %v4610 = vunpack.c.l.b16 %v3351
    %v4611 = vunpack.c.l.b16 %v3352
    %v4612 = vunpack.c.h.b16 %v3352
    %v4613 = vunpack.c.l.b16 %v3353
    %v4614 = vunpack.c.h.b16 %v3353
    %v4615 = vunpack.c.l.b16 %v3354
    %v4616 = vunpack.c.h.b16 %v3354
    %v4617 = vunpack.c.l.b16 %v3355
    %v4618 = vunpack.c.l.b16 %v3356
    %v4619 = vunpack.c.h.b16 %v3356
    %v4620 = vunpack.c.l.b16 %v3357
    %v4621 = vunpack.c.h.b16 %v3357
    %v4622 = vunpack.c.l.b16 %v3358
    %v4623 = vunpack.c.h.b16 %v3358
    %v4624 = vunpack.c.l.b16 %v3359
    %v4625 = vunpack.c.l.b16 %v3360
    %v4626 = vunpack.c.h.b16 %v3360
    %v4627 = vunpack.c.l.b16 %v3361
    %v4628 = vunpack.c.h.b16 %v3361
    %v4629 = vunpack.c.l.b16 %v3362
    %v4630 = vunpack.c.h.b16 %v3362
    %v4631 = vunpack.c.l.b16 %v3363
    %v4632 = vunpack.c.l.b16 %v3364
    %v4633 = vunpack.c.h.b16 %v3364
    %v4634 = vunpack.c.l.b16 %v3365
    %v4635 = vunpack.c.h.b16 %v3365
    %v4636 = vunpack.c.l.b16 %v3366
    %v4637 = vunpack.c.h.b16 %v3366
    %v4638 = vunpack.c.l.b16 %v3367
    %v4639 = vunpack.c.l.b16 %v3368
    %v4640 = vunpack.c.h.b16 %v3368
    %v4641 = vunpack.c.l.b16 %v3369
    %v4642 = vunpack.c.h.b16 %v3369
    %v4643 = vunpack.c.l.b16 %v3370
    %v4644 = vunpack.c.h.b16 %v3370
    %v4645 = vunpack.c.l.b16 %v3371
    %v4646 = vunpack.c.l.b16 %v3372
    %v4647 = vunpack.c.h.b16 %v3372
    %v4648 = vunpack.c.l.b16 %v3373
    %v4649 = vunpack.c.h.b16 %v3373
    %v4650 = vunpack.c.l.b16 %v3374
    %v4651 = vunpack.c.h.b16 %v3374
    %v4652 = vunpack.c.l.b16 %v3375
    %v4653 = vunpack.c.l.b16 %v3376
    %v4654 = vunpack.c.h.b16 %v3376
    %v4655 = vunpack.c.l.b16 %v3377
    %v4656 = vunpack.c.h.b16 %v3377
    %v4657 = vunpack.c.l.b16 %v3378
    %v4658 = vunpack.c.h.b16 %v3378
    %v4659 = vunpack.c.l.b16 %v3379
    %v4660 = vunpack.c.l.b16 %v3380
    %v4661 = vunpack.c.h.b16 %v3380
    %v4662 = vunpack.c.l.b16 %v3381
    %v4663 = vunpack.c.h.b16 %v3381
    %v4664 = vunpack.c.l.b16 %v3382
    %v4665 = vunpack.c.h.b16 %v3382
    %v4666 = vunpack.c.l.b16 %v3383
    %v4667 = vunpack.c.l.b16 %v3384
    %v4668 = vunpack.c.h.b16 %v3384
    %v4669 = vunpack.c.l.b16 %v3385
    %v4670 = vunpack.c.h.b16 %v3385
    %v4671 = vunpack.c.l.b16 %v3386
    %v4672 = vunpack.c.h.b16 %v3386
    %v4673 = vunpack.c.l.b16 %v3387
    %v4674 = vunpack.c.l.b16 %v3388
    %v4675 = vunpack.c.h.b16 %v3388
    %v4676 = vunpack.c.l.b16 %v3389
    %v4677 = vunpack.c.h.b16 %v3389
    %v4678 = vunpack.c.l.b16 %v3390
    %v4679 = vunpack.c.h.b16 %v3390
    %v4680 = vunpack.c.l.b16 %v3391
    %v4681 = vunpack.c.l.b16 %v3392
    %v4682 = vunpack.c.h.b16 %v3392
    %v4683 = vunpack.c.l.b16 %v3393
    %v4684 = vunpack.c.h.b16 %v3393
    %v4685 = vunpack.c.l.b16 %v3394
    %v4686 = vunpack.c.h.b16 %v3394
    %v4687 = vunpack.c.l.b16 %v3395
    %v4688 = vunpack.c.l.b16 %v3396
    %v4689 = vunpack.c.h.b16 %v3396
    %v4690 = vunpack.c.l.b16 %v3397
    %v4691 = vunpack.c.h.b16 %v3397
    %v4692 = vunpack.c.l.b16 %v3398
    %v4693 = vunpack.c.h.b16 %v3398
    %v4694 = vunpack.c.l.b16 %v3399
    %v4695 = vunpack.c.l.b16 %v3400
    %v4696 = vunpack.c.h.b16 %v3400
    %v4697 = vunpack.c.l.b16 %v3401
    %v4698 = vunpack.c.h.b16 %v3401
    %v4699 = vunpack.c.l.b16 %v3402
    %v4700 = vunpack.c.h.b16 %v3402
    %v4701 = vunpack.c.l.b16 %v3403
    %v4702 = vunpack.c.l.b16 %v3404
    %v4703 = vunpack.c.h.b16 %v3404
    %v4704 = vunpack.c.l.b16 %v3405
    %v4705 = vunpack.c.h.b16 %v3405
    %v4706 = vunpack.c.l.b16 %v3406
    %v4707 = vunpack.c.h.b16 %v3406
    %v4708 = vunpack.c.l.b16 %v3407
    %v4709 = vunpack.c.l.b16 %v3408
    %v4710 = vunpack.c.h.b16 %v3408
    %v4711 = vunpack.c.l.b16 %v3409
    %v4712 = vunpack.c.h.b16 %v3409
    %v4713 = vunpack.c.l.b16 %v3410
    %v4714 = vunpack.c.h.b16 %v3410
    %v4715 = vunpack.c.l.b16 %v3411
    %v4716 = vunpack.c.l.b16 %v3412
    %v4717 = vunpack.c.h.b16 %v3412
    %v4718 = vunpack.c.l.b16 %v3413
    %v4719 = vunpack.c.h.b16 %v3413
    %v4720 = vunpack.c.l.b16 %v3414
    %v4721 = vunpack.c.h.b16 %v3414
    %v4722 = vunpack.c.l.b16 %v3415
    %v4723 = vunpack.c.l.b16 %v3416
    %v4724 = vunpack.c.h.b16 %v3416
    %v4725 = vunpack.c.l.b16 %v3417
    %v4726 = vunpack.c.h.b16 %v3417
    %v4727 = vunpack.c.l.b16 %v3418
    %v4728 = vunpack.c.h.b16 %v3418
    %v4729 = vunpack.c.l.b16 %v3419
    %v4730 = vunpack.c.l.b16 %v3420
    %v4731 = vunpack.c.h.b16 %v3420
    %v4732 = vunpack.c.l.b16 %v3421
    %v4733 = vunpack.c.h.b16 %v3421
    %v4734 = vunpack.c.l.b16 %v3422
    %v4735 = vunpack.c.h.b16 %v3422
    %v4736 = vunpack.c.l.b16 %v3423
    %v4737 = vunpack.c.l.b16 %v3424
    %v4738 = vunpack.c.h.b16 %v3424
    %v4739 = vunpack.c.l.b16 %v3425
    %v4740 = vunpack.c.h.b16 %v3425
    %v4741 = vunpack.c.l.b16 %v3426
    %v4742 = vunpack.c.h.b16 %v3426
    %v4743 = vunpack.c.l.b16 %v3427
    %v4744 = vunpack.c.l.b16 %v3428
    %v4745 = vunpack.c.h.b16 %v3428
    %v4746 = vunpack.c.l.b16 %v3429
    %v4747 = vunpack.c.h.b16 %v3429
    %v4748 = vunpack.c.l.b16 %v3430
    %v4749 = vunpack.c.h.b16 %v3430
    %v4750 = vunpack.c.l.b16 %v3431
    %v4751 = vunpack.c.l.b16 %v3432
    %v4752 = vunpack.c.h.b16 %v3432
    %v4753 = vunpack.c.l.b16 %v3433
    %v4754 = vunpack.c.h.b16 %v3433
    %v4755 = vunpack.c.l.b16 %v3434
    %v4756 = vunpack.c.h.b16 %v3434
    %v4757 = vunpack.c.l.b16 %v3435
    %v4758 = vunpack.c.l.b16 %v3436
    %v4759 = vunpack.c.h.b16 %v3436
    %v4760 = vunpack.c.l.b16 %v3437
    %v4761 = vunpack.c.h.b16 %v3437
    %v4762 = vunpack.c.l.b16 %v3438
    %v4763 = vunpack.c.h.b16 %v3438
    %v4764 = vunpack.c.l.b16 %v3439
    %v4765 = vunpack.c.l.b16 %v3440
    %v4766 = vunpack.c.h.b16 %v3440
    %v4767 = vunpack.c.l.b16 %v3441
    %v4768 = vunpack.c.h.b16 %v3441
    %v4769 = vunpack.c.l.b16 %v3442
    %v4770 = vunpack.c.h.b16 %v3442
    %v4771 = vunpack.c.l.b16 %v3443
    %v4772 = vunpack.c.l.b16 %v3444
    %v4773 = vunpack.c.h.b16 %v3444
    %v4774 = vunpack.c.l.b16 %v3445
    %v4775 = vunpack.c.h.b16 %v3445
    %v4776 = vunpack.c.l.b16 %v3446
    %v4777 = vunpack.c.h.b16 %v3446
    %v4778 = vunpack.c.l.b16 %v3447
    %v4779 = vunpack.c.l.b16 %v3448
    %v4780 = vunpack.c.h.b16 %v3448
    %v4781 = vunpack.c.l.b16 %v3449
    %v4782 = vunpack.c.h.b16 %v3449
    %v4783 = vunpack.c.l.b16 %v3450
    %v4784 = vunpack.c.h.b16 %v3450
    %v4785 = vunpack.c.l.b16 %v3451
    %v4786 = vunpack.c.l.b16 %v3452
    %v4787 = vunpack.c.h.b16 %v3452
    %v4788 = vunpack.c.l.b16 %v3453
    %v4789 = vunpack.c.h.b16 %v3453
    %v4790 = vunpack.c.l.b16 %v3454
    %v4791 = vunpack.c.h.b16 %v3454
    %v4792 = vunpack.c.l.b16 %v3455
    %v4793 = vunpack.c.l.b16 %v3456
    %v4794 = vunpack.c.h.b16 %v3456
    %v4795 = vunpack.c.l.b16 %v3457
    %v4796 = vunpack.c.h.b16 %v3457
    %v4797 = vunpack.c.l.b16 %v3458
    %v4798 = vunpack.c.h.b16 %v3458
    %v4799 = vunpack.c.l.b16 %v3459
    %v4800 = vunpack.c.l.b16 %v3460
    %v4801 = vunpack.c.h.b16 %v3460
    %v4802 = vunpack.c.l.b16 %v3461
    %v4803 = vunpack.c.h.b16 %v3461
    %v4804 = vunpack.c.l.b16 %v3462
    %v4805 = vunpack.c.h.b16 %v3462
    %v4806 = vunpack.c.l.b16 %v3463
    %v4807 = vunpack.c.l.b16 %v3464
    %v4808 = vunpack.c.h.b16 %v3464
    %v4809 = vunpack.c.l.b16 %v3465
    %v4810 = vunpack.c.h.b16 %v3465
    %v4811 = vunpack.c.l.b16 %v3466
    %v4812 = vunpack.c.h.b16 %v3466
    %v4813 = vunpack.c.l.b16 %v3467
    %v4814 = vunpack.c.l.b16 %v3468
    %v4815 = vunpack.c.h.b16 %v3468
    %v4816 = vunpack.c.l.b16 %v3469
    %v4817 = vunpack.c.h.b16 %v3469
    %v4818 = vunpack.c.l.b16 %v3470
    %v4819 = vunpack.c.h.b16 %v3470
    %v4820 = vunpack.c.l.b16 %v3471
    %v4821 = vunpack.c.l.b16 %v3472
    %v4822 = vunpack.c.h.b16 %v3472
    %v4823 = vunpack.c.l.b16 %v3473
    %v4824 = vunpack.c.h.b16 %v3473
    %v4825 = vunpack.c.l.b16 %v3474
    %v4826 = vunpack.c.h.b16 %v3474
    %v4827 = vunpack.c.l.b16 %v3475
    %v4828 = vunpack.c.l.b16 %v3476
    %v4829 = vunpack.c.h.b16 %v3476
    %v4830 = vunpack.c.l.b16 %v3477
    %v4831 = vunpack.c.h.b16 %v3477
    %v4832 = vunpack.c.l.b16 %v3478
    %v4833 = vunpack.c.h.b16 %v3478
    %v4834 = vunpack.c.l.b16 %v3479
    %v4835 = vunpack.c.l.b16 %v3480
    %v4836 = vunpack.c.h.b16 %v3480
    %v4837 = vunpack.c.l.b16 %v3481
    %v4838 = vunpack.c.h.b16 %v3481
    %v4839 = vunpack.c.l.b16 %v3482
    %v4840 = vunpack.c.h.b16 %v3482
    %v4841 = vunpack.c.l.b16 %v3483
    %v4842 = vunpack.c.l.b16 %v3484
    %v4843 = vunpack.c.h.b16 %v3484
    %v4844 = vunpack.c.l.b16 %v3485
    %v4845 = vunpack.c.h.b16 %v3485
    %v4846 = vunpack.c.l.b16 %v3486
    %v4847 = vunpack.c.h.b16 %v3486
    %v4848 = vunpack.c.l.b16 %v3487
    %v4849 = vunpack.c.l.b16 %v3488
    %v4850 = vunpack.c.h.b16 %v3488
    %v4851 = vunpack.c.l.b16 %v3489
    %v4852 = vunpack.c.h.b16 %v3489
    %v4853 = vunpack.c.l.b16 %v3490
    %v4854 = vunpack.c.h.b16 %v3490
    %v4855 = vunpack.c.l.b16 %v3491
    %v4856 = vunpack.c.l.b16 %v3492
    %v4857 = vunpack.c.h.b16 %v3492
    %v4858 = vunpack.c.l.b16 %v3493
    %v4859 = vunpack.c.h.b16 %v3493
    %v4860 = vunpack.c.l.b16 %v3494
    %v4861 = vunpack.c.h.b16 %v3494
    %v4862 = vunpack.c.l.b16 %v3495
    %v4863 = vunpack.c.l.b16 %v3496
    %v4864 = vunpack.c.h.b16 %v3496
    %v4865 = vunpack.c.l.b16 %v3497
    %v4866 = vunpack.c.h.b16 %v3497
    %v4867 = vunpack.c.l.b16 %v3498
    %v4868 = vunpack.c.h.b16 %v3498
    %v4869 = vunpack.c.l.b16 %v3499
    %v4870 = vunpack.c.l.b16 %v3500
    %v4871 = vunpack.c.h.b16 %v3500
    %v4872 = vunpack.c.l.b16 %v3501
    %v4873 = vunpack.c.h.b16 %v3501
    %v4874 = vunpack.c.l.b16 %v3502
    %v4875 = vunpack.c.h.b16 %v3502
    %v4876 = vunpack.c.l.b16 %v3503
    %v4877 = vunpack.c.l.b16 %v3504
    %v4878 = vunpack.c.h.b16 %v3504
    %v4879 = vunpack.c.l.b16 %v3505
    %v4880 = vunpack.c.h.b16 %v3505
    %v4881 = vunpack.c.l.b16 %v3506
    %v4882 = vunpack.c.h.b16 %v3506
    %v4883 = vunpack.c.l.b16 %v3507
    %v4884 = vunpack.c.l.b16 %v3508
    %v4885 = vunpack.c.h.b16 %v3508
    %v4886 = vunpack.c.l.b16 %v3509
    %v4887 = vunpack.c.h.b16 %v3509
    %v4888 = vunpack.c.l.b16 %v3510
    %v4889 = vunpack.c.h.b16 %v3510
    %v4890 = vunpack.c.l.b16 %v3511
    %v4891 = vunpack.c.l.b16 %v3512
    %v4892 = vunpack.c.h.b16 %v3512
    %v4893 = vunpack.c.l.b16 %v3513
    %v4894 = vunpack.c.h.b16 %v3513
    %v4895 = vunpack.c.l.b16 %v3514
    %v4896 = vunpack.c.h.b16 %v3514
    %v4897 = vunpack.c.l.b16 %v3515
    %v4898 = vunpack.c.l.b16 %v3516
    %v4899 = vunpack.c.h.b16 %v3516
    %v4900 = vunpack.c.l.b16 %v3517
    %v4901 = vunpack.c.h.b16 %v3517
    %v4902 = vunpack.c.l.b16 %v3518
    %v4903 = vunpack.c.h.b16 %v3518
    %v4904 = vunpack.c.l.b16 %v3519
    %v4905 = vunpack.c.l.b16 %v3520
    %v4906 = vunpack.c.h.b16 %v3520
    %v4907 = vunpack.c.l.b16 %v3521
    %v4908 = vunpack.c.h.b16 %v3521
    %v4909 = vunpack.c.l.b16 %v3522
    %v4910 = vunpack.c.h.b16 %v3522
    %v4911 = vunpack.c.l.b16 %v3523
    %v4912 = vunpack.c.l.b16 %v3524
    %v4913 = vunpack.c.h.b16 %v3524
    %v4914 = vunpack.c.l.b16 %v3525
    %v4915 = vunpack.c.h.b16 %v3525
    %v4916 = vunpack.c.l.b16 %v3526
    %v4917 = vunpack.c.h.b16 %v3526
    %v4918 = vunpack.c.l.b16 %v3527
    %v4919 = vunpack.c.l.b16 %v3528
    %v4920 = vunpack.c.h.b16 %v3528
    %v4921 = vunpack.c.l.b16 %v3529
    %v4922 = vunpack.c.h.b16 %v3529
    %v4923 = vunpack.c.l.b16 %v3530
    %v4924 = vunpack.c.h.b16 %v3530
    %v4925 = vunpack.c.l.b16 %v3531
    %v4926 = vunpack.c.l.b16 %v3532
    %v4927 = vunpack.c.h.b16 %v3532
    %v4928 = vunpack.c.l.b16 %v3533
    %v4929 = vunpack.c.h.b16 %v3533
    %v4930 = vunpack.c.l.b16 %v3534
    %v4931 = vunpack.c.h.b16 %v3534
    %v4932 = vunpack.c.l.b16 %v3535
    %v4933 = vunpack.c.l.b16 %v3536
    %v4934 = vunpack.c.h.b16 %v3536
    %v4935 = vunpack.c.l.b16 %v3537
    %v4936 = vunpack.c.h.b16 %v3537
    %v4937 = vunpack.c.l.b16 %v3538
    %v4938 = vunpack.c.h.b16 %v3538
    %v4939 = vunpack.c.l.b16 %v3539
    %v4940 = vunpack.c.l.b16 %v3540
    %v4941 = vunpack.c.h.b16 %v3540
    %v4942 = vunpack.c.l.b16 %v3541
    %v4943 = vunpack.c.h.b16 %v3541
    %v4944 = vunpack.c.l.b16 %v3542
    %v4945 = vunpack.c.h.b16 %v3542
    %v4946 = vunpack.c.l.b16 %v3543
    %v4947 = vunpack.c.l.b16 %v3544
    %v4948 = vunpack.c.h.b16 %v3544
    %v4949 = vunpack.c.l.b16 %v3545
    %v4950 = vunpack.c.h.b16 %v3545
    %v4951 = vunpack.c.l.b16 %v3546
    %v4952 = vunpack.c.h.b16 %v3546
    %v4953 = vunpack.c.l.b16 %v3547
    %v4954 = vunpack.c.l.b16 %v3548
    %v4955 = vunpack.c.h.b16 %v3548
    %v4956 = vunpack.c.l.b16 %v3549
    %v4957 = vunpack.c.h.b16 %v3549
    %v4958 = vunpack.c.l.b16 %v3550
    %v4959 = vunpack.c.h.b16 %v3550
    %v4960 = vunpack.c.l.b16 %v3551
    %v4961 = vunpack.c.l.b16 %v3552
    %v4962 = vunpack.c.h.b16 %v3552
    %v4963 = vunpack.c.l.b16 %v3553
    %v4964 = vunpack.c.h.b16 %v3553
    %v4965 = vunpack.c.l.b16 %v3554
    %v4966 = vunpack.c.h.b16 %v3554
    %v4967 = vunpack.c.l.b16 %v3555
    %v4968 = vunpack.c.l.b16 %v3556
    %v4969 = vunpack.c.h.b16 %v3556
    %v4970 = vunpack.c.l.b16 %v3557
    %v4971 = vunpack.c.h.b16 %v3557
    %v4972 = vunpack.c.l.b16 %v3558
    %v4973 = vunpack.c.h.b16 %v3558
    %v4974 = vunpack.c.l.b16 %v3559
    %v4975 = vunpack.c.l.b16 %v3560
    %v4976 = vunpack.c.h.b16 %v3560
    %v4977 = vunpack.c.l.b16 %v3561
    %v4978 = vunpack.c.h.b16 %v3561
    %v4979 = vunpack.c.l.b16 %v3562
    %v4980 = vunpack.c.h.b16 %v3562
    %v4981 = vunpack.c.l.b16 %v3563
    %v4982 = vunpack.c.l.b16 %v3564
    %v4983 = vunpack.c.h.b16 %v3564
    %v4984 = vunpack.c.l.b16 %v3565
    %v4985 = vunpack.c.h.b16 %v3565
    %v4986 = vunpack.c.l.b16 %v3566
    %v4987 = vunpack.c.h.b16 %v3566
    %v4988 = vunpack.c.l.b16 %v3567
    %v4989 = vunpack.c.l.b16 %v3568
    %v4990 = vunpack.c.h.b16 %v3568
    %v4991 = vunpack.c.l.b16 %v3569
    %v4992 = vunpack.c.h.b16 %v3569
    %v4993 = vunpack.c.l.b16 %v3570
    %v4994 = vunpack.c.h.b16 %v3570
    %v4995 = vunpack.c.l.b16 %v3571
    %v4996 = vunpack.c.l.b16 %v3572
    %v4997 = vunpack.c.h.b16 %v3572
    %v4998 = vunpack.c.l.b16 %v3573
    %v4999 = vunpack.c.h.b16 %v3573
    %v5000 = vunpack.c.l.b16 %v3574
    %v5001 = vunpack.c.h.b16 %v3574
    %v5002 = vunpack.c.l.b16 %v3575
    %v5003 = vunpack.c.l.b16 %v3576
    %v5004 = vunpack.c.h.b16 %v3576
    %v5005 = vunpack.c.l.b16 %v3577
    %v5006 = vunpack.c.h.b16 %v3577
    %v5007 = vunpack.c.l.b16 %v3578
    %v5008 = vunpack.c.h.b16 %v3578
    %v5009 = vunpack.c.l.b16 %v3579
    %v5010 = vunpack.c.l.b16 %v3580
    %v5011 = vunpack.c.h.b16 %v3580
    %v5012 = vunpack.c.l.b16 %v3581
    %v5013 = vunpack.c.h.b16 %v3581
    %v5014 = vunpack.c.l.b16 %v3582
    %v5015 = vunpack.c.h.b16 %v3582
    %v5016 = vunpack.c.l.b16 %v3583
    %v5017 = vunpack.c.l.b16 %v3584
    %v5018 = vunpack.c.h.b16 %v3584
    %v5019 = vunpack.c.l.b16 %v3585
    %v5020 = vunpack.c.h.b16 %v3585
    %v5021 = vunpack.c.l.b16 %v3586
    %v5022 = vunpack.c.h.b16 %v3586
    %v5023 = vunpack.c.l.b16 %v3587
    %v5024 = vunpack.c.l.b16 %v3588
    %v5025 = vunpack.c.h.b16 %v3588
    %v5026 = vunpack.c.l.b16 %v3589
    %v5027 = vunpack.c.h.b16 %v3589
    %v5028 = vunpack.c.l.b16 %v3590
    %v5029 = vunpack.c.h.b16 %v3590
    %v5030 = vunpack.c.l.b16 %v3591
    %v5031 = vunpack.c.l.b16 %v3592
    %v5032 = vunpack.c.h.b16 %v3592
    %v5033 = vunpack.c.l.b16 %v3593
    %v5034 = vunpack.c.h.b16 %v3593
    %v5035 = vunpack.c.l.b16 %v3594
    %v5036 = vunpack.c.h.b16 %v3594
    %v5037 = vunpack.c.l.b16 %v3595
    %v5038 = vunpack.c.l.b16 %v3596
    %v5039 = vunpack.c.h.b16 %v3596
    %v5040 = vunpack.c.l.b16 %v3597
    %v5041 = vunpack.c.h.b16 %v3597
    %v5042 = vunpack.c.l.b16 %v3598
    %v5043 = vunpack.c.h.b16 %v3598
    %v5044 = vunpack.c.l.b16 %v3599
    %v5045 = vpack.c.b16 %v4156, %v4149
    %v5046 = vpack.c.b16 %v4157, %v4150
    %v5047 = vpack.c.b16 %v4158, %v4151
    %v5048 = vpack.c.b16 %v4159, %v4152
    %v5049 = vpack.c.b16 %v4160, %v4153
    %v5050 = vpack.c.b16 %v4161, %v4154
    %v5051 = vpack.c.b16 %v4162, %v4155
    %v5052 = vpack.c.b16 %v4170, %v4163
    %v5053 = vpack.c.b16 %v4171, %v4164
    %v5054 = vpack.c.b16 %v4172, %v4165
    %v5055 = vpack.c.b16 %v4173, %v4166
    %v5056 = vpack.c.b16 %v4174, %v4167
    %v5057 = vpack.c.b16 %v4175, %v4168
    %v5058 = vpack.c.b16 %v4176, %v4169
    %v5059 = vpack.c.b16 %v4184, %v4177
    %v5060 = vpack.c.b16 %v4185, %v4178
    %v5061 = vpack.c.b16 %v4186, %v4179
    %v5062 = vpack.c.b16 %v4187, %v4180
    %v5063 = vpack.c.b16 %v4188, %v4181
    %v5064 = vpack.c.b16 %v4189, %v4182
    %v5065 = vpack.c.b16 %v4190, %v4183
    %v5066 = vpack.c.b16 %v4198, %v4191
    %v5067 = vpack.c.b16 %v4199, %v4192
    %v5068 = vpack.c.b16 %v4200, %v4193
    %v5069 = vpack.c.b16 %v4201, %v4194
    %v5070 = vpack.c.b16 %v4202, %v4195
    %v5071 = vpack.c.b16 %v4203, %v4196
    %v5072 = vpack.c.b16 %v4204, %v4197
    %v5073 = vpack.c.b16 %v4212, %v4205
    %v5074 = vpack.c.b16 %v4213, %v4206
    %v5075 = vpack.c.b16 %v4214, %v4207
    %v5076 = vpack.c.b16 %v4215, %v4208
    %v5077 = vpack.c.b16 %v4216, %v4209
    %v5078 = vpack.c.b16 %v4217, %v4210
    %v5079 = vpack.c.b16 %v4218, %v4211
    %v5080 = vpack.c.b16 %v4226, %v4219
    %v5081 = vpack.c.b16 %v4227, %v4220
    %v5082 = vpack.c.b16 %v4228, %v4221
    %v5083 = vpack.c.b16 %v4229, %v4222
    %v5084 = vpack.c.b16 %v4230, %v4223
    %v5085 = vpack.c.b16 %v4231, %v4224
    %v5086 = vpack.c.b16 %v4232, %v4225
    %v5087 = vpack.c.b16 %v4240, %v4233
    %v5088 = vpack.c.b16 %v4241, %v4234
    %v5089 = vpack.c.b16 %v4242, %v4235
    %v5090 = vpack.c.b16 %v4243, %v4236
    %v5091 = vpack.c.b16 %v4244, %v4237
    %v5092 = vpack.c.b16 %v4245, %v4238
    %v5093 = vpack.c.b16 %v4246, %v4239
    %v5094 = vpack.c.b16 %v4254, %v4247
    %v5095 = vpack.c.b16 %v4255, %v4248
    %v5096 = vpack.c.b16 %v4256, %v4249
    %v5097 = vpack.c.b16 %v4257, %v4250
    %v5098 = vpack.c.b16 %v4258, %v4251
    %v5099 = vpack.c.b16 %v4259, %v4252
    %v5100 = vpack.c.b16 %v4260, %v4253
    %v5101 = vpack.c.b16 %v4268, %v4261
    %v5102 = vpack.c.b16 %v4269, %v4262
    %v5103 = vpack.c.b16 %v4270, %v4263
    %v5104 = vpack.c.b16 %v4271, %v4264
    %v5105 = vpack.c.b16 %v4272, %v4265
    %v5106 = vpack.c.b16 %v4273, %v4266
    %v5107 = vpack.c.b16 %v4274, %v4267
    %v5108 = vpack.c.b16 %v4282, %v4275
    %v5109 = vpack.c.b16 %v4283, %v4276
    %v5110 = vpack.c.b16 %v4284, %v4277
    %v5111 = vpack.c.b16 %v4285, %v4278
    %v5112 = vpack.c.b16 %v4286, %v4279
    %v5113 = vpack.c.b16 %v4287, %v4280
    %v5114 = vpack.c.b16 %v4288, %v4281
    %v5115 = vpack.c.b16 %v4296, %v4289
    %v5116 = vpack.c.b16 %v4297, %v4290
    %v5117 = vpack.c.b16 %v4298, %v4291
    %v5118 = vpack.c.b16 %v4299, %v4292
    %v5119 = vpack.c.b16 %v4300, %v4293
    %v5120 = vpack.c.b16 %v4301, %v4294
    %v5121 = vpack.c.b16 %v4302, %v4295
    %v5122 = vpack.c.b16 %v4310, %v4303
    %v5123 = vpack.c.b16 %v4311, %v4304
    %v5124 = vpack.c.b16 %v4312, %v4305
    %v5125 = vpack.c.b16 %v4313, %v4306
    %v5126 = vpack.c.b16 %v4314, %v4307
    %v5127 = vpack.c.b16 %v4315, %v4308
    %v5128 = vpack.c.b16 %v4316, %v4309
    %v5129 = vpack.c.b16 %v4324, %v4317
    %v5130 = vpack.c.b16 %v4325, %v4318
    %v5131 = vpack.c.b16 %v4326, %v4319
    %v5132 = vpack.c.b16 %v4327, %v4320
    %v5133 = vpack.c.b16 %v4328, %v4321
    %v5134 = vpack.c.b16 %v4329, %v4322
    %v5135 = vpack.c.b16 %v4330, %v4323
    %v5136 = vpack.c.b16 %v4338, %v4331
    %v5137 = vpack.c.b16 %v4339, %v4332
    %v5138 = vpack.c.b16 %v4340, %v4333
    %v5139 = vpack.c.b16 %v4341, %v4334
    %v5140 = vpack.c.b16 %v4342, %v4335
    %v5141 = vpack.c.b16 %v4343, %v4336
    %v5142 = vpack.c.b16 %v4344, %v4337
    %v5143 = vpack.c.b16 %v4352, %v4345
    %v5144 = vpack.c.b16 %v4353, %v4346
    %v5145 = vpack.c.b16 %v4354, %v4347
    %v5146 = vpack.c.b16 %v4355, %v4348
    %v5147 = vpack.c.b16 %v4356, %v4349
    %v5148 = vpack.c.b16 %v4357, %v4350
    %v5149 = vpack.c.b16 %v4358, %v4351
    %v5150 = vpack.c.b16 %v4366, %v4359
    %v5151 = vpack.c.b16 %v4367, %v4360
    %v5152 = vpack.c.b16 %v4368, %v4361
    %v5153 = vpack.c.b16 %v4369, %v4362
    %v5154 = vpack.c.b16 %v4370, %v4363
    %v5155 = vpack.c.b16 %v4371, %v4364
    %v5156 = vpack.c.b16 %v4372, %v4365
    %v5157 = vpack.c.b16 %v4380, %v4373
    %v5158 = vpack.c.b16 %v4381, %v4374
    %v5159 = vpack.c.b16 %v4382, %v4375
    %v5160 = vpack.c.b16 %v4383, %v4376
    %v5161 = vpack.c.b16 %v4384, %v4377
    %v5162 = vpack.c.b16 %v4385, %v4378
    %v5163 = vpack.c.b16 %v4386, %v4379
    %v5164 = vpack.c.b16 %v4394, %v4387
    %v5165 = vpack.c.b16 %v4395, %v4388
    %v5166 = vpack.c.b16 %v4396, %v4389
    %v5167 = vpack.c.b16 %v4397, %v4390
    %v5168 = vpack.c.b16 %v4398, %v4391
    %v5169 = vpack.c.b16 %v4399, %v4392
    %v5170 = vpack.c.b16 %v4400, %v4393
    %v5171 = vpack.c.b16 %v4408, %v4401
    %v5172 = vpack.c.b16 %v4409, %v4402
    %v5173 = vpack.c.b16 %v4410, %v4403
    %v5174 = vpack.c.b16 %v4411, %v4404
    %v5175 = vpack.c.b16 %v4412, %v4405
    %v5176 = vpack.c.b16 %v4413, %v4406
    %v5177 = vpack.c.b16 %v4414, %v4407
    %v5178 = vpack.c.b16 %v4422, %v4415
    %v5179 = vpack.c.b16 %v4423, %v4416
    %v5180 = vpack.c.b16 %v4424, %v4417
    %v5181 = vpack.c.b16 %v4425, %v4418
    %v5182 = vpack.c.b16 %v4426, %v4419
    %v5183 = vpack.c.b16 %v4427, %v4420
    %v5184 = vpack.c.b16 %v4428, %v4421
    %v5185 = vpack.c.b16 %v4436, %v4429
    %v5186 = vpack.c.b16 %v4437, %v4430
    %v5187 = vpack.c.b16 %v4438, %v4431
    %v5188 = vpack.c.b16 %v4439, %v4432
    %v5189 = vpack.c.b16 %v4440, %v4433
    %v5190 = vpack.c.b16 %v4441, %v4434
    %v5191 = vpack.c.b16 %v4442, %v4435
    %v5192 = vpack.c.b16 %v4450, %v4443
    %v5193 = vpack.c.b16 %v4451, %v4444
    %v5194 = vpack.c.b16 %v4452, %v4445
    %v5195 = vpack.c.b16 %v4453, %v4446
    %v5196 = vpack.c.b16 %v4454, %v4447
    %v5197 = vpack.c.b16 %v4455, %v4448
    %v5198 = vpack.c.b16 %v4456, %v4449
    %v5199 = vpack.c.b16 %v4464, %v4457
    %v5200 = vpack.c.b16 %v4465, %v4458
    %v5201 = vpack.c.b16 %v4466, %v4459
    %v5202 = vpack.c.b16 %v4467, %v4460
    %v5203 = vpack.c.b16 %v4468, %v4461
    %v5204 = vpack.c.b16 %v4469, %v4462
    %v5205 = vpack.c.b16 %v4470, %v4463
    %v5206 = vpack.c.b16 %v4478, %v4471
    %v5207 = vpack.c.b16 %v4479, %v4472
    %v5208 = vpack.c.b16 %v4480, %v4473
    %v5209 = vpack.c.b16 %v4481, %v4474
    %v5210 = vpack.c.b16 %v4482, %v4475
    %v5211 = vpack.c.b16 %v4483, %v4476
    %v5212 = vpack.c.b16 %v4484, %v4477
    %v5213 = vpack.c.b16 %v4492, %v4485
    %v5214 = vpack.c.b16 %v4493, %v4486
    %v5215 = vpack.c.b16 %v4494, %v4487
    %v5216 = vpack.c.b16 %v4495, %v4488
    %v5217 = vpack.c.b16 %v4496, %v4489
    %v5218 = vpack.c.b16 %v4497, %v4490
    %v5219 = vpack.c.b16 %v4498, %v4491
    %v5220 = vpack.c.b16 %v4506, %v4499
    %v5221 = vpack.c.b16 %v4507, %v4500
    %v5222 = vpack.c.b16 %v4508, %v4501
    %v5223 = vpack.c.b16 %v4509, %v4502
    %v5224 = vpack.c.b16 %v4510, %v4503
    %v5225 = vpack.c.b16 %v4511, %v4504
    %v5226 = vpack.c.b16 %v4512, %v4505
    %v5227 = vpack.c.b16 %v4520, %v4513
    %v5228 = vpack.c.b16 %v4521, %v4514
    %v5229 = vpack.c.b16 %v4522, %v4515
    %v5230 = vpack.c.b16 %v4523, %v4516
    %v5231 = vpack.c.b16 %v4524, %v4517
    %v5232 = vpack.c.b16 %v4525, %v4518
    %v5233 = vpack.c.b16 %v4526, %v4519
    %v5234 = vpack.c.b16 %v4534, %v4527
    %v5235 = vpack.c.b16 %v4535, %v4528
    %v5236 = vpack.c.b16 %v4536, %v4529
    %v5237 = vpack.c.b16 %v4537, %v4530
    %v5238 = vpack.c.b16 %v4538, %v4531
    %v5239 = vpack.c.b16 %v4539, %v4532
    %v5240 = vpack.c.b16 %v4540, %v4533
    %v5241 = vpack.c.b16 %v4548, %v4541
    %v5242 = vpack.c.b16 %v4549, %v4542
    %v5243 = vpack.c.b16 %v4550, %v4543
    %v5244 = vpack.c.b16 %v4551, %v4544
    %v5245 = vpack.c.b16 %v4552, %v4545
    %v5246 = vpack.c.b16 %v4553, %v4546
    %v5247 = vpack.c.b16 %v4554, %v4547
    %v5248 = vpack.c.b16 %v4562, %v4555
    %v5249 = vpack.c.b16 %v4563, %v4556
    %v5250 = vpack.c.b16 %v4564, %v4557
    %v5251 = vpack.c.b16 %v4565, %v4558
    %v5252 = vpack.c.b16 %v4566, %v4559
    %v5253 = vpack.c.b16 %v4567, %v4560
    %v5254 = vpack.c.b16 %v4568, %v4561
    %v5255 = vpack.c.b16 %v4576, %v4569
    %v5256 = vpack.c.b16 %v4577, %v4570
    %v5257 = vpack.c.b16 %v4578, %v4571
    %v5258 = vpack.c.b16 %v4579, %v4572
    %v5259 = vpack.c.b16 %v4580, %v4573
    %v5260 = vpack.c.b16 %v4581, %v4574
    %v5261 = vpack.c.b16 %v4582, %v4575
    %v5262 = vpack.c.b16 %v4590, %v4583
    %v5263 = vpack.c.b16 %v4591, %v4584
    %v5264 = vpack.c.b16 %v4592, %v4585
    %v5265 = vpack.c.b16 %v4593, %v4586
    %v5266 = vpack.c.b16 %v4594, %v4587
    %v5267 = vpack.c.b16 %v4595, %v4588
    %v5268 = vpack.c.b16 %v4596, %v4589
    %v5269 = vpack.c.b16 %v4604, %v4597
    %v5270 = vpack.c.b16 %v4605, %v4598
    %v5271 = vpack.c.b16 %v4606, %v4599
    %v5272 = vpack.c.b16 %v4607, %v4600
    %v5273 = vpack.c.b16 %v4608, %v4601
    %v5274 = vpack.c.b16 %v4609, %v4602
    %v5275 = vpack.c.b16 %v4610, %v4603
    %v5276 = vpack.c.b16 %v4618, %v4611
    %v5277 = vpack.c.b16 %v4619, %v4612
    %v5278 = vpack.c.b16 %v4620, %v4613
    %v5279 = vpack.c.b16 %v4621, %v4614
    %v5280 = vpack.c.b16 %v4622, %v4615
    %v5281 = vpack.c.b16 %v4623, %v4616
    %v5282 = vpack.c.b16 %v4624, %v4617
    %v5283 = vpack.c.b16 %v4632, %v4625
    %v5284 = vpack.c.b16 %v4633, %v4626
    %v5285 = vpack.c.b16 %v4634, %v4627
    %v5286 = vpack.c.b16 %v4635, %v4628
    %v5287 = vpack.c.b16 %v4636, %v4629
    %v5288 = vpack.c.b16 %v4637, %v4630
    %v5289 = vpack.c.b16 %v4638, %v4631
    %v5290 = vpack.c.b16 %v4646, %v4639
    %v5291 = vpack.c.b16 %v4647, %v4640
    %v5292 = vpack.c.b16 %v4648, %v4641
    %v5293 = vpack.c.b16 %v4649, %v4642
    %v5294 = vpack.c.b16 %v4650, %v4643
    %v5295 = vpack.c.b16 %v4651, %v4644
    %v5296 = vpack.c.b16 %v4652, %v4645
    %v5297 = vpack.c.b16 %v4660, %v4653
    %v5298 = vpack.c.b16 %v4661, %v4654
    %v5299 = vpack.c.b16 %v4662, %v4655
    %v5300 = vpack.c.b16 %v4663, %v4656
    %v5301 = vpack.c.b16 %v4664, %v4657
    %v5302 = vpack.c.b16 %v4665, %v4658
    %v5303 = vpack.c.b16 %v4666, %v4659
    %v5304 = vpack.c.b16 %v4674, %v4667
    %v5305 = vpack.c.b16 %v4675, %v4668
    %v5306 = vpack.c.b16 %v4676, %v4669
    %v5307 = vpack.c.b16 %v4677, %v4670
    %v5308 = vpack.c.b16 %v4678, %v4671
    %v5309 = vpack.c.b16 %v4679, %v4672
    %v5310 = vpack.c.b16 %v4680, %v4673
    %v5311 = vpack.c.b16 %v4688, %v4681
    %v5312 = vpack.c.b16 %v4689, %v4682
    %v5313 = vpack.c.b16 %v4690, %v4683
    %v5314 = vpack.c.b16 %v4691, %v4684
    %v5315 = vpack.c.b16 %v4692, %v4685
    %v5316 = vpack.c.b16 %v4693, %v4686
    %v5317 = vpack.c.b16 %v4694, %v4687
    %v5318 = vpack.c.b16 %v4702, %v4695
    %v5319 = vpack.c.b16 %v4703, %v4696
    %v5320 = vpack.c.b16 %v4704, %v4697
    %v5321 = vpack.c.b16 %v4705, %v4698
    %v5322 = vpack.c.b16 %v4706, %v4699
    %v5323 = vpack.c.b16 %v4707, %v4700
    %v5324 = vpack.c.b16 %v4708, %v4701
    %v5325 = vpack.c.b16 %v4716, %v4709
    %v5326 = vpack.c.b16 %v4717, %v4710
    %v5327 = vpack.c.b16 %v4718, %v4711
    %v5328 = vpack.c.b16 %v4719, %v4712
    %v5329 = vpack.c.b16 %v4720, %v4713
    %v5330 = vpack.c.b16 %v4721, %v4714
    %v5331 = vpack.c.b16 %v4722, %v4715
    %v5332 = vpack.c.b16 %v4730, %v4723
    %v5333 = vpack.c.b16 %v4731, %v4724
    %v5334 = vpack.c.b16 %v4732, %v4725
    %v5335 = vpack.c.b16 %v4733, %v4726
    %v5336 = vpack.c.b16 %v4734, %v4727
    %v5337 = vpack.c.b16 %v4735, %v4728
    %v5338 = vpack.c.b16 %v4736, %v4729
    %v5339 = vpack.c.b16 %v4744, %v4737
    %v5340 = vpack.c.b16 %v4745, %v4738
    %v5341 = vpack.c.b16 %v4746, %v4739
    %v5342 = vpack.c.b16 %v4747, %v4740
    %v5343 = vpack.c.b16 %v4748, %v4741
    %v5344 = vpack.c.b16 %v4749, %v4742
    %v5345 = vpack.c.b16 %v4750, %v4743
    %v5346 = vpack.c.b16 %v4758, %v4751
    %v5347 = vpack.c.b16 %v4759, %v4752
    %v5348 = vpack.c.b16 %v4760, %v4753
    %v5349 = vpack.c.b16 %v4761, %v4754
    %v5350 = vpack.c.b16 %v4762, %v4755
    %v5351 = vpack.c.b16 %v4763, %v4756
    %v5352 = vpack.c.b16 %v4764, %v4757
    %v5353 = vpack.c.b16 %v4772, %v4765
    %v5354 = vpack.c.b16 %v4773, %v4766
    %v5355 = vpack.c.b16 %v4774, %v4767
    %v5356 = vpack.c.b16 %v4775, %v4768
    %v5357 = vpack.c.b16 %v4776, %v4769
    %v5358 = vpack.c.b16 %v4777, %v4770
    %v5359 = vpack.c.b16 %v4778, %v4771
    %v5360 = vpack.c.b16 %v4786, %v4779
    %v5361 = vpack.c.b16 %v4787, %v4780
    %v5362 = vpack.c.b16 %v4788, %v4781
    %v5363 = vpack.c.b16 %v4789, %v4782
    %v5364 = vpack.c.b16 %v4790, %v4783
    %v5365 = vpack.c.b16 %v4791, %v4784
    %v5366 = vpack.c.b16 %v4792, %v4785
    %v5367 = vpack.c.b16 %v4800, %v4793
    %v5368 = vpack.c.b16 %v4801, %v4794
    %v5369 = vpack.c.b16 %v4802, %v4795
    %v5370 = vpack.c.b16 %v4803, %v4796
    %v5371 = vpack.c.b16 %v4804, %v4797
    %v5372 = vpack.c.b16 %v4805, %v4798
    %v5373 = vpack.c.b16 %v4806, %v4799
    %v5374 = vpack.c.b16 %v4814, %v4807
    %v5375 = vpack.c.b16 %v4815, %v4808
    %v5376 = vpack.c.b16 %v4816, %v4809
    %v5377 = vpack.c.b16 %v4817, %v4810
    %v5378 = vpack.c.b16 %v4818, %v4811
    %v5379 = vpack.c.b16 %v4819, %v4812
    %v5380 = vpack.c.b16 %v4820, %v4813
    %v5381 = vpack.c.b16 %v4828, %v4821
    %v5382 = vpack.c.b16 %v4829, %v4822
    %v5383 = vpack.c.b16 %v4830, %v4823
    %v5384 = vpack.c.b16 %v4831, %v4824
    %v5385 = vpack.c.b16 %v4832, %v4825
    %v5386 = vpack.c.b16 %v4833, %v4826
    %v5387 = vpack.c.b16 %v4834, %v4827
    %v5388 = vpack.c.b16 %v4842, %v4835
    %v5389 = vpack.c.b16 %v4843, %v4836
    %v5390 = vpack.c.b16 %v4844, %v4837
    %v5391 = vpack.c.b16 %v4845, %v4838
    %v5392 = vpack.c.b16 %v4846, %v4839
    %v5393 = vpack.c.b16 %v4847, %v4840
    %v5394 = vpack.c.b16 %v4848, %v4841
    %v5395 = vpack.c.b16 %v4856, %v4849
    %v5396 = vpack.c.b16 %v4857, %v4850
    %v5397 = vpack.c.b16 %v4858, %v4851
    %v5398 = vpack.c.b16 %v4859, %v4852
    %v5399 = vpack.c.b16 %v4860, %v4853
    %v5400 = vpack.c.b16 %v4861, %v4854
    %v5401 = vpack.c.b16 %v4862, %v4855
    %v5402 = vpack.c.b16 %v4870, %v4863
    %v5403 = vpack.c.b16 %v4871, %v4864
    %v5404 = vpack.c.b16 %v4872, %v4865
    %v5405 = vpack.c.b16 %v4873, %v4866
    %v5406 = vpack.c.b16 %v4874, %v4867
    %v5407 = vpack.c.b16 %v4875, %v4868
    %v5408 = vpack.c.b16 %v4876, %v4869
    %v5409 = vpack.c.b16 %v4884, %v4877
    %v5410 = vpack.c.b16 %v4885, %v4878
    %v5411 = vpack.c.b16 %v4886, %v4879
    %v5412 = vpack.c.b16 %v4887, %v4880
    %v5413 = vpack.c.b16 %v4888, %v4881
    %v5414 = vpack.c.b16 %v4889, %v4882
    %v5415 = vpack.c.b16 %v4890, %v4883
    %v5416 = vpack.c.b16 %v4898, %v4891
    %v5417 = vpack.c.b16 %v4899, %v4892
    %v5418 = vpack.c.b16 %v4900, %v4893
    %v5419 = vpack.c.b16 %v4901, %v4894
    %v5420 = vpack.c.b16 %v4902, %v4895
    %v5421 = vpack.c.b16 %v4903, %v4896
    %v5422 = vpack.c.b16 %v4904, %v4897
    %v5423 = vpack.c.b16 %v4912, %v4905
    %v5424 = vpack.c.b16 %v4913, %v4906
    %v5425 = vpack.c.b16 %v4914, %v4907
    %v5426 = vpack.c.b16 %v4915, %v4908
    %v5427 = vpack.c.b16 %v4916, %v4909
    %v5428 = vpack.c.b16 %v4917, %v4910
    %v5429 = vpack.c.b16 %v4918, %v4911
    %v5430 = vpack.c.b16 %v4926, %v4919
    %v5431 = vpack.c.b16 %v4927, %v4920
    %v5432 = vpack.c.b16 %v4928, %v4921
    %v5433 = vpack.c.b16 %v4929, %v4922
    %v5434 = vpack.c.b16 %v4930, %v4923
    %v5435 = vpack.c.b16 %v4931, %v4924
    %v5436 = vpack.c.b16 %v4932, %v4925
    %v5437 = vpack.c.b16 %v4940, %v4933
    %v5438 = vpack.c.b16 %v4941, %v4934
    %v5439 = vpack.c.b16 %v4942, %v4935
    %v5440 = vpack.c.b16 %v4943, %v4936
    %v5441 = vpack.c.b16 %v4944, %v4937
    %v5442 = vpack.c.b16 %v4945, %v4938
    %v5443 = vpack.c.b16 %v4946, %v4939
    %v5444 = vpack.c.b16 %v4954, %v4947
    %v5445 = vpack.c.b16 %v4955, %v4948
    %v5446 = vpack.c.b16 %v4956, %v4949
    %v5447 = vpack.c.b16 %v4957, %v4950
    %v5448 = vpack.c.b16 %v4958, %v4951
    %v5449 = vpack.c.b16 %v4959, %v4952
    %v5450 = vpack.c.b16 %v4960, %v4953
    %v5451 = vpack.c.b16 %v4968, %v4961
    %v5452 = vpack.c.b16 %v4969, %v4962
    %v5453 = vpack.c.b16 %v4970, %v4963
    %v5454 = vpack.c.b16 %v4971, %v4964
    %v5455 = vpack.c.b16 %v4972, %v4965
    %v5456 = vpack.c.b16 %v4973, %v4966
    %v5457 = vpack.c.b16 %v4974, %v4967
    %v5458 = vpack.c.b16 %v4982, %v4975
    %v5459 = vpack.c.b16 %v4983, %v4976
    %v5460 = vpack.c.b16 %v4984, %v4977
    %v5461 = vpack.c.b16 %v4985, %v4978
    %v5462 = vpack.c.b16 %v4986, %v4979
    %v5463 = vpack.c.b16 %v4987, %v4980
    %v5464 = vpack.c.b16 %v4988, %v4981
    %v5465 = vpack.c.b16 %v4996, %v4989
    %v5466 = vpack.c.b16 %v4997, %v4990
    %v5467 = vpack.c.b16 %v4998, %v4991
    %v5468 = vpack.c.b16 %v4999, %v4992
    %v5469 = vpack.c.b16 %v5000, %v4993
    %v5470 = vpack.c.b16 %v5001, %v4994
    %v5471 = vpack.c.b16 %v5002, %v4995
    %v5472 = vpack.c.b16 %v5010, %v5003
    %v5473 = vpack.c.b16 %v5011, %v5004
    %v5474 = vpack.c.b16 %v5012, %v5005
    %v5475 = vpack.c.b16 %v5013, %v5006
    %v5476 = vpack.c.b16 %v5014, %v5007
    %v5477 = vpack.c.b16 %v5015, %v5008
    %v5478 = vpack.c.b16 %v5016, %v5009
    %v5479 = vpack.c.b16 %v5024, %v5017
    %v5480 = vpack.c.b16 %v5025, %v5018
    %v5481 = vpack.c.b16 %v5026, %v5019
    %v5482 = vpack.c.b16 %v5027, %v5020
    %v5483 = vpack.c.b16 %v5028, %v5021
    %v5484 = vpack.c.b16 %v5029, %v5022
    %v5485 = vpack.c.b16 %v5030, %v5023
    %v5486 = vpack.c.b16 %v5038, %v5031
    %v5487 = vpack.c.b16 %v5039, %v5032
    %v5488 = vpack.c.b16 %v5040, %v5033
    %v5489 = vpack.c.b16 %v5041, %v5034
    %v5490 = vpack.c.b16 %v5042, %v5035
    %v5491 = vpack.c.b16 %v5043, %v5036
    %v5492 = vpack.c.b16 %v5044, %v5037
    %5941 = vmatprep.subr.bf16.mxu0 %v5095
    %5942 = vmatpush1.bf16.msra.mxu0 %v5094
    %5943 = vmatprep.subr.bf16.mxu0 %v5088
    %5944 = vmatpush1.bf16.msra.mxu0 %v5087
    %5945 = vmatprep.subr.bf16.mxu0 %v5081
    %5946 = vmatpush1.bf16.msra.mxu0 %v5080
    %5947 = vmatprep.subr.bf16.mxu0 %v5074
    %5948 = vmatpush1.bf16.msra.mxu0 %v5073
    %5949 = vmatprep.subr.bf16.mxu0 %v5067
    %5950 = vmatpush1.bf16.msra.mxu0 %v5066
    %5951 = vmatprep.subr.bf16.mxu0 %v5060
    %5952 = vmatpush1.bf16.msra.mxu0 %v5059
    %5953 = vmatprep.subr.bf16.mxu0 %v5053
    %5954 = vmatpush1.bf16.msra.mxu0 %v5052
    %5955 = vmatprep.subr.bf16.mxu0 %v5046
    %5956 = vmatpush1.bf16.msra.mxu0 %v5045
    %5957 = vmatprep.subr.bf16.mxu0 %v5151
    %5958 = vmatpush2.bf16.msra.mxu0 %v5150
    %5959 = vmatprep.subr.bf16.mxu0 %v5144
    %5960 = vmatpush2.bf16.msra.mxu0 %v5143
    %5961 = vmatprep.subr.bf16.mxu0 %v5137
    %5962 = vmatpush2.bf16.msra.mxu0 %v5136
    %5963 = vmatprep.subr.bf16.mxu0 %v5130
    %5964 = vmatpush2.bf16.msra.mxu0 %v5129
    %5965 = vmatprep.subr.bf16.mxu0 %v5123
    %5966 = vmatpush2.bf16.msra.mxu0 %v5122
    %5967 = vmatprep.subr.bf16.mxu0 %v5116
    %5968 = vmatpush2.bf16.msra.mxu0 %v5115
    %5969 = vmatprep.subr.bf16.mxu0 %v5109
    %5970 = vmatpush2.bf16.msra.mxu0 %v5108
    %5971 = vmatprep.subr.bf16.mxu0 %v5102
    %5972 = vmatpush2.bf16.msra.mxu0 %v5101
    %5973 = vmatprep.mubr.bf16.mxu0 %v3081
    %5974 = vmatmul.mubr.bf16.gmra.mxu0 %v3080
    %v5975 = vpop.f32.mrf.mxu0
    %v5976 = vadd.f32 %v3605, %v5975
    %v5977 = vpop.f32.mrf.mxu0
    %v5978 = vadd.f32 %v3609, %v5977
    %v5979 = vpop.f32.mrf.mxu0
    %v5980 = vpop.f32.mrf.mxu0
    %5981 = vdwg.mxu0
    %5982 = vmatprep.subr.bf16.mxu0 %v5207
    %5983 = vmatpush1.bf16.msra.mxu0 %v5206
    %5984 = vmatprep.subr.bf16.mxu0 %v5200
    %5985 = vmatpush1.bf16.msra.mxu0 %v5199
    %5986 = vmatprep.subr.bf16.mxu0 %v5193
    %5987 = vmatpush1.bf16.msra.mxu0 %v5192
    %5988 = vmatprep.subr.bf16.mxu0 %v5186
    %5989 = vmatpush1.bf16.msra.mxu0 %v5185
    %5990 = vmatprep.subr.bf16.mxu0 %v5179
    %5991 = vmatpush1.bf16.msra.mxu0 %v5178
    %5992 = vmatprep.subr.bf16.mxu0 %v5172
    %5993 = vmatpush1.bf16.msra.mxu0 %v5171
    %5994 = vmatprep.subr.bf16.mxu0 %v5165
    %5995 = vmatpush1.bf16.msra.mxu0 %v5164
    %5996 = vmatprep.subr.bf16.mxu0 %v5158
    %5997 = vmatpush1.bf16.msra.mxu0 %v5157
    %5998 = vmatprep.subr.bf16.mxu0 %v5263
    %5999 = vmatpush2.bf16.msra.mxu0 %v5262
    %6000 = vmatprep.subr.bf16.mxu0 %v5256
    %6001 = vmatpush2.bf16.msra.mxu0 %v5255
    %6002 = vmatprep.subr.bf16.mxu0 %v5249
    %6003 = vmatpush2.bf16.msra.mxu0 %v5248
    %6004 = vmatprep.subr.bf16.mxu0 %v5242
    %6005 = vmatpush2.bf16.msra.mxu0 %v5241
    %6006 = vmatprep.subr.bf16.mxu0 %v5235
    %6007 = vmatpush2.bf16.msra.mxu0 %v5234
    %6008 = vmatprep.subr.bf16.mxu0 %v5228
    %6009 = vmatpush2.bf16.msra.mxu0 %v5227
    %6010 = vmatprep.subr.bf16.mxu0 %v5221
    %6011 = vmatpush2.bf16.msra.mxu0 %v5220
    %6012 = vmatprep.subr.bf16.mxu0 %v5214
    %6013 = vmatpush2.bf16.msra.mxu0 %v5213
    %6014 = vmatprep.mubr.bf16.mxu0 %v3083
    %6015 = vmatmul.mubr.bf16.gmra.mxu0 %v3082
    %v6016 = vpop.f32.mrf.mxu0
    %v6017 = vadd.f32 %v5976, %v6016
    %v6018 = vpop.f32.mrf.mxu0
    %v6019 = vadd.f32 %v5978, %v6018
    %v6020 = vpop.f32.mrf.mxu0
    %v6021 = vpop.f32.mrf.mxu0
    %6022 = vdwg.mxu0
    %6023 = vmatprep.subr.bf16.mxu0 %v5319
    %6024 = vmatpush1.bf16.msra.mxu0 %v5318
    %6025 = vmatprep.subr.bf16.mxu0 %v5312
    %6026 = vmatpush1.bf16.msra.mxu0 %v5311
    %6027 = vmatprep.subr.bf16.mxu0 %v5305
    %6028 = vmatpush1.bf16.msra.mxu0 %v5304
    %6029 = vmatprep.subr.bf16.mxu0 %v5298
    %6030 = vmatpush1.bf16.msra.mxu0 %v5297
    %6031 = vmatprep.subr.bf16.mxu0 %v5291
    %6032 = vmatpush1.bf16.msra.mxu0 %v5290
    %6033 = vmatprep.subr.bf16.mxu0 %v5284
    %6034 = vmatpush1.bf16.msra.mxu0 %v5283
    %6035 = vmatprep.subr.bf16.mxu0 %v5277
    %6036 = vmatpush1.bf16.msra.mxu0 %v5276
    %6037 = vmatprep.subr.bf16.mxu0 %v5270
    %6038 = vmatpush1.bf16.msra.mxu0 %v5269
    %6039 = vmatprep.subr.bf16.mxu0 %v5375
    %6040 = vmatpush2.bf16.msra.mxu0 %v5374
    %6041 = vmatprep.subr.bf16.mxu0 %v5368
    %6042 = vmatpush2.bf16.msra.mxu0 %v5367
    %6043 = vmatprep.subr.bf16.mxu0 %v5361
    %6044 = vmatpush2.bf16.msra.mxu0 %v5360
    %6045 = vmatprep.subr.bf16.mxu0 %v5354
    %6046 = vmatpush2.bf16.msra.mxu0 %v5353
    %6047 = vmatprep.subr.bf16.mxu0 %v5347
    %6048 = vmatpush2.bf16.msra.mxu0 %v5346
    %6049 = vmatprep.subr.bf16.mxu0 %v5340
    %6050 = vmatpush2.bf16.msra.mxu0 %v5339
    %6051 = vmatprep.subr.bf16.mxu0 %v5333
    %6052 = vmatpush2.bf16.msra.mxu0 %v5332
    %6053 = vmatprep.subr.bf16.mxu0 %v5326
    %6054 = vmatpush2.bf16.msra.mxu0 %v5325
    %6055 = vmatprep.mubr.bf16.mxu0 %v3085
    %6056 = vmatmul.mubr.bf16.gmra.mxu0 %v3084
    %v6057 = vpop.f32.mrf.mxu0
    %v6058 = vadd.f32 %v6017, %v6057
    %v6059 = vpop.f32.mrf.mxu0
    %v6060 = vadd.f32 %v6019, %v6059
    %v6061 = vpop.f32.mrf.mxu0
    %v6062 = vpop.f32.mrf.mxu0
    %6063 = vdwg.mxu0
    %6064 = vmatprep.subr.bf16.mxu0 %v5431
    %6065 = vmatpush1.bf16.msra.mxu0 %v5430
    %6066 = vmatprep.subr.bf16.mxu0 %v5424
    %6067 = vmatpush1.bf16.msra.mxu0 %v5423
    %6068 = vmatprep.subr.bf16.mxu0 %v5417
    %6069 = vmatpush1.bf16.msra.mxu0 %v5416
    %6070 = vmatprep.subr.bf16.mxu0 %v5410
    %6071 = vmatpush1.bf16.msra.mxu0 %v5409
    %6072 = vmatprep.subr.bf16.mxu0 %v5403
    %6073 = vmatpush1.bf16.msra.mxu0 %v5402
    %6074 = vmatprep.subr.bf16.mxu0 %v5396
    %6075 = vmatpush1.bf16.msra.mxu0 %v5395
    %6076 = vmatprep.subr.bf16.mxu0 %v5389
    %6077 = vmatpush1.bf16.msra.mxu0 %v5388
    %6078 = vmatprep.subr.bf16.mxu0 %v5382
    %6079 = vmatpush1.bf16.msra.mxu0 %v5381
    %6080 = vmatprep.subr.bf16.mxu0 %v5487
    %6081 = vmatpush2.bf16.msra.mxu0 %v5486
    %6082 = vmatprep.subr.bf16.mxu0 %v5480
    %6083 = vmatpush2.bf16.msra.mxu0 %v5479
    %6084 = vmatprep.subr.bf16.mxu0 %v5473
    %6085 = vmatpush2.bf16.msra.mxu0 %v5472
    %6086 = vmatprep.subr.bf16.mxu0 %v5466
    %6087 = vmatpush2.bf16.msra.mxu0 %v5465
    %6088 = vmatprep.subr.bf16.mxu0 %v5459
    %6089 = vmatpush2.bf16.msra.mxu0 %v5458
    %6090 = vmatprep.subr.bf16.mxu0 %v5452
    %6091 = vmatpush2.bf16.msra.mxu0 %v5451
    %6092 = vmatprep.subr.bf16.mxu0 %v5445
    %6093 = vmatpush2.bf16.msra.mxu0 %v5444
    %6094 = vmatprep.subr.bf16.mxu0 %v5438
    %6095 = vmatpush2.bf16.msra.mxu0 %v5437
    %6096 = vmatprep.mubr.bf16.mxu0 %v3087
    %6097 = vmatmul.mubr.bf16.gmra.mxu0 %v3086
    %v6098 = vpop.f32.mrf.mxu0
    %v6099 = vadd.f32 %v6058, %v6098
    %v6100 = vpop.f32.mrf.mxu0
    %v6101 = vadd.f32 %v6060, %v6100
    %v6102 = vpop.f32.mrf.mxu0
    %v6103 = vpop.f32.mrf.mxu0
    %6104 = vdwg.mxu0
    %6105 = vmatprep.subr.bf16.mxu0 %v5097
    %6106 = vmatpush1.bf16.msra.mxu0 %v5096
    %6107 = vmatprep.subr.bf16.mxu0 %v5090
    %6108 = vmatpush1.bf16.msra.mxu0 %v5089
    %6109 = vmatprep.subr.bf16.mxu0 %v5083
    %6110 = vmatpush1.bf16.msra.mxu0 %v5082
    %6111 = vmatprep.subr.bf16.mxu0 %v5076
    %6112 = vmatpush1.bf16.msra.mxu0 %v5075
    %6113 = vmatprep.subr.bf16.mxu0 %v5069
    %6114 = vmatpush1.bf16.msra.mxu0 %v5068
    %6115 = vmatprep.subr.bf16.mxu0 %v5062
    %6116 = vmatpush1.bf16.msra.mxu0 %v5061
    %6117 = vmatprep.subr.bf16.mxu0 %v5055
    %6118 = vmatpush1.bf16.msra.mxu0 %v5054
    %6119 = vmatprep.subr.bf16.mxu0 %v5048
    %6120 = vmatpush1.bf16.msra.mxu0 %v5047
    %6121 = vmatprep.subr.bf16.mxu0 %v5153
    %6122 = vmatpush2.bf16.msra.mxu0 %v5152
    %6123 = vmatprep.subr.bf16.mxu0 %v5146
    %6124 = vmatpush2.bf16.msra.mxu0 %v5145
    %6125 = vmatprep.subr.bf16.mxu0 %v5139
    %6126 = vmatpush2.bf16.msra.mxu0 %v5138
    %6127 = vmatprep.subr.bf16.mxu0 %v5132
    %6128 = vmatpush2.bf16.msra.mxu0 %v5131
    %6129 = vmatprep.subr.bf16.mxu0 %v5125
    %6130 = vmatpush2.bf16.msra.mxu0 %v5124
    %6131 = vmatprep.subr.bf16.mxu0 %v5118
    %6132 = vmatpush2.bf16.msra.mxu0 %v5117
    %6133 = vmatprep.subr.bf16.mxu0 %v5111
    %6134 = vmatpush2.bf16.msra.mxu0 %v5110
    %6135 = vmatprep.subr.bf16.mxu0 %v5104
    %6136 = vmatpush2.bf16.msra.mxu0 %v5103
    %6137 = vmatprep.mubr.bf16.mxu0 %v3081
    %6138 = vmatmul.mubr.bf16.gmra.mxu0 %v3080
    %v6139 = vpop.f32.mrf.mxu0
    %v6140 = vadd.f32 %v3613, %v6139
    %v6141 = vpop.f32.mrf.mxu0
    %v6142 = vadd.f32 %v3617, %v6141
    %v6143 = vpop.f32.mrf.mxu0
    %v6144 = vpop.f32.mrf.mxu0
    %6145 = vdwg.mxu0
    %6146 = vmatprep.subr.bf16.mxu0 %v5209
    %6147 = vmatpush1.bf16.msra.mxu0 %v5208
    %6148 = vmatprep.subr.bf16.mxu0 %v5202
    %6149 = vmatpush1.bf16.msra.mxu0 %v5201
    %6150 = vmatprep.subr.bf16.mxu0 %v5195
    %6151 = vmatpush1.bf16.msra.mxu0 %v5194
    %6152 = vmatprep.subr.bf16.mxu0 %v5188
    %6153 = vmatpush1.bf16.msra.mxu0 %v5187
    %6154 = vmatprep.subr.bf16.mxu0 %v5181
    %6155 = vmatpush1.bf16.msra.mxu0 %v5180
    %6156 = vmatprep.subr.bf16.mxu0 %v5174
    %6157 = vmatpush1.bf16.msra.mxu0 %v5173
    %6158 = vmatprep.subr.bf16.mxu0 %v5167
    %6159 = vmatpush1.bf16.msra.mxu0 %v5166
    %6160 = vmatprep.subr.bf16.mxu0 %v5160
    %6161 = vmatpush1.bf16.msra.mxu0 %v5159
    %6162 = vmatprep.subr.bf16.mxu0 %v5265
    %6163 = vmatpush2.bf16.msra.mxu0 %v5264
    %6164 = vmatprep.subr.bf16.mxu0 %v5258
    %6165 = vmatpush2.bf16.msra.mxu0 %v5257
    %6166 = vmatprep.subr.bf16.mxu0 %v5251
    %6167 = vmatpush2.bf16.msra.mxu0 %v5250
    %6168 = vmatprep.subr.bf16.mxu0 %v5244
    %6169 = vmatpush2.bf16.msra.mxu0 %v5243
    %6170 = vmatprep.subr.bf16.mxu0 %v5237
    %6171 = vmatpush2.bf16.msra.mxu0 %v5236
    %6172 = vmatprep.subr.bf16.mxu0 %v5230
    %6173 = vmatpush2.bf16.msra.mxu0 %v5229
    %6174 = vmatprep.subr.bf16.mxu0 %v5223
    %6175 = vmatpush2.bf16.msra.mxu0 %v5222
    %6176 = vmatprep.subr.bf16.mxu0 %v5216
    %6177 = vmatpush2.bf16.msra.mxu0 %v5215
    %6178 = vmatprep.mubr.bf16.mxu0 %v3083
    %6179 = vmatmul.mubr.bf16.gmra.mxu0 %v3082
    %v6180 = vpop.f32.mrf.mxu0
    %v6181 = vadd.f32 %v6140, %v6180
    %v6182 = vpop.f32.mrf.mxu0
    %v6183 = vadd.f32 %v6142, %v6182
    %v6184 = vpop.f32.mrf.mxu0
    %v6185 = vpop.f32.mrf.mxu0
    %6186 = vdwg.mxu0
    %6187 = vmatprep.subr.bf16.mxu0 %v5321
    %6188 = vmatpush1.bf16.msra.mxu0 %v5320
    %6189 = vmatprep.subr.bf16.mxu0 %v5314
    %6190 = vmatpush1.bf16.msra.mxu0 %v5313
    %6191 = vmatprep.subr.bf16.mxu0 %v5307
    %6192 = vmatpush1.bf16.msra.mxu0 %v5306
    %6193 = vmatprep.subr.bf16.mxu0 %v5300
    %6194 = vmatpush1.bf16.msra.mxu0 %v5299
    %6195 = vmatprep.subr.bf16.mxu0 %v5293
    %6196 = vmatpush1.bf16.msra.mxu0 %v5292
    %6197 = vmatprep.subr.bf16.mxu0 %v5286
    %6198 = vmatpush1.bf16.msra.mxu0 %v5285
    %6199 = vmatprep.subr.bf16.mxu0 %v5279
    %6200 = vmatpush1.bf16.msra.mxu0 %v5278
    %6201 = vmatprep.subr.bf16.mxu0 %v5272
    %6202 = vmatpush1.bf16.msra.mxu0 %v5271
    %6203 = vmatprep.subr.bf16.mxu0 %v5377
    %6204 = vmatpush2.bf16.msra.mxu0 %v5376
    %6205 = vmatprep.subr.bf16.mxu0 %v5370
    %6206 = vmatpush2.bf16.msra.mxu0 %v5369
    %6207 = vmatprep.subr.bf16.mxu0 %v5363
    %6208 = vmatpush2.bf16.msra.mxu0 %v5362
    %6209 = vmatprep.subr.bf16.mxu0 %v5356
    %6210 = vmatpush2.bf16.msra.mxu0 %v5355
    %6211 = vmatprep.subr.bf16.mxu0 %v5349
    %6212 = vmatpush2.bf16.msra.mxu0 %v5348
    %6213 = vmatprep.subr.bf16.mxu0 %v5342
    %6214 = vmatpush2.bf16.msra.mxu0 %v5341
    %6215 = vmatprep.subr.bf16.mxu0 %v5335
    %6216 = vmatpush2.bf16.msra.mxu0 %v5334
    %6217 = vmatprep.subr.bf16.mxu0 %v5328
    %6218 = vmatpush2.bf16.msra.mxu0 %v5327
    %6219 = vmatprep.mubr.bf16.mxu0 %v3085
    %6220 = vmatmul.mubr.bf16.gmra.mxu0 %v3084
    %v6221 = vpop.f32.mrf.mxu0
    %v6222 = vadd.f32 %v6181, %v6221
    %v6223 = vpop.f32.mrf.mxu0
    %v6224 = vadd.f32 %v6183, %v6223
    %v6225 = vpop.f32.mrf.mxu0
    %v6226 = vpop.f32.mrf.mxu0
    %6227 = vdwg.mxu0
    %6228 = vmatprep.subr.bf16.mxu0 %v5433
    %6229 = vmatpush1.bf16.msra.mxu0 %v5432
    %6230 = vmatprep.subr.bf16.mxu0 %v5426
    %6231 = vmatpush1.bf16.msra.mxu0 %v5425
    %6232 = vmatprep.subr.bf16.mxu0 %v5419
    %6233 = vmatpush1.bf16.msra.mxu0 %v5418
    %6234 = vmatprep.subr.bf16.mxu0 %v5412
    %6235 = vmatpush1.bf16.msra.mxu0 %v5411
    %6236 = vmatprep.subr.bf16.mxu0 %v5405
    %6237 = vmatpush1.bf16.msra.mxu0 %v5404
    %6238 = vmatprep.subr.bf16.mxu0 %v5398
    %6239 = vmatpush1.bf16.msra.mxu0 %v5397
    %6240 = vmatprep.subr.bf16.mxu0 %v5391
    %6241 = vmatpush1.bf16.msra.mxu0 %v5390
    %6242 = vmatprep.subr.bf16.mxu0 %v5384
    %6243 = vmatpush1.bf16.msra.mxu0 %v5383
    %6244 = vmatprep.subr.bf16.mxu0 %v5489
    %6245 = vmatpush2.bf16.msra.mxu0 %v5488
    %6246 = vmatprep.subr.bf16.mxu0 %v5482
    %6247 = vmatpush2.bf16.msra.mxu0 %v5481
    %6248 = vmatprep.subr.bf16.mxu0 %v5475
    %6249 = vmatpush2.bf16.msra.mxu0 %v5474
    %6250 = vmatprep.subr.bf16.mxu0 %v5468
    %6251 = vmatpush2.bf16.msra.mxu0 %v5467
    %6252 = vmatprep.subr.bf16.mxu0 %v5461
    %6253 = vmatpush2.bf16.msra.mxu0 %v5460
    %6254 = vmatprep.subr.bf16.mxu0 %v5454
    %6255 = vmatpush2.bf16.msra.mxu0 %v5453
    %6256 = vmatprep.subr.bf16.mxu0 %v5447
    %6257 = vmatpush2.bf16.msra.mxu0 %v5446
    %6258 = vmatprep.subr.bf16.mxu0 %v5440
    %6259 = vmatpush2.bf16.msra.mxu0 %v5439
    %6260 = vmatprep.mubr.bf16.mxu0 %v3087
    %6261 = vmatmul.mubr.bf16.gmra.mxu0 %v3086
    %v6262 = vpop.f32.mrf.mxu0
    %v6263 = vadd.f32 %v6222, %v6262
    %v6264 = vpop.f32.mrf.mxu0
    %v6265 = vadd.f32 %v6224, %v6264
    %v6266 = vpop.f32.mrf.mxu0
    %v6267 = vpop.f32.mrf.mxu0
    %6268 = vdwg.mxu0
    %6269 = vmatprep.subr.bf16.mxu0 %v5099
    %6270 = vmatpush1.bf16.msra.mxu0 %v5098
    %6271 = vmatprep.subr.bf16.mxu0 %v5092
    %6272 = vmatpush1.bf16.msra.mxu0 %v5091
    %6273 = vmatprep.subr.bf16.mxu0 %v5085
    %6274 = vmatpush1.bf16.msra.mxu0 %v5084
    %6275 = vmatprep.subr.bf16.mxu0 %v5078
    %6276 = vmatpush1.bf16.msra.mxu0 %v5077
    %6277 = vmatprep.subr.bf16.mxu0 %v5071
    %6278 = vmatpush1.bf16.msra.mxu0 %v5070
    %6279 = vmatprep.subr.bf16.mxu0 %v5064
    %6280 = vmatpush1.bf16.msra.mxu0 %v5063
    %6281 = vmatprep.subr.bf16.mxu0 %v5057
    %6282 = vmatpush1.bf16.msra.mxu0 %v5056
    %6283 = vmatprep.subr.bf16.mxu0 %v5050
    %6284 = vmatpush1.bf16.msra.mxu0 %v5049
    %6285 = vmatprep.subr.bf16.mxu0 %v5155
    %6286 = vmatpush2.bf16.msra.mxu0 %v5154
    %6287 = vmatprep.subr.bf16.mxu0 %v5148
    %6288 = vmatpush2.bf16.msra.mxu0 %v5147
    %6289 = vmatprep.subr.bf16.mxu0 %v5141
    %6290 = vmatpush2.bf16.msra.mxu0 %v5140
    %6291 = vmatprep.subr.bf16.mxu0 %v5134
    %6292 = vmatpush2.bf16.msra.mxu0 %v5133
    %6293 = vmatprep.subr.bf16.mxu0 %v5127
    %6294 = vmatpush2.bf16.msra.mxu0 %v5126
    %6295 = vmatprep.subr.bf16.mxu0 %v5120
    %6296 = vmatpush2.bf16.msra.mxu0 %v5119
    %6297 = vmatprep.subr.bf16.mxu0 %v5113
    %6298 = vmatpush2.bf16.msra.mxu0 %v5112
    %6299 = vmatprep.subr.bf16.mxu0 %v5106
    %6300 = vmatpush2.bf16.msra.mxu0 %v5105
    %6301 = vmatprep.mubr.bf16.mxu0 %v3081
    %6302 = vmatmul.mubr.bf16.gmra.mxu0 %v3080
    %v6303 = vpop.f32.mrf.mxu0
    %v6304 = vadd.f32 %v3621, %v6303
    %v6305 = vpop.f32.mrf.mxu0
    %v6306 = vadd.f32 %v3625, %v6305
    %v6307 = vpop.f32.mrf.mxu0
    %v6308 = vpop.f32.mrf.mxu0
    %6309 = vdwg.mxu0
    %6310 = vmatprep.subr.bf16.mxu0 %v5211
    %6311 = vmatpush1.bf16.msra.mxu0 %v5210
    %6312 = vmatprep.subr.bf16.mxu0 %v5204
    %6313 = vmatpush1.bf16.msra.mxu0 %v5203
    %6314 = vmatprep.subr.bf16.mxu0 %v5197
    %6315 = vmatpush1.bf16.msra.mxu0 %v5196
    %6316 = vmatprep.subr.bf16.mxu0 %v5190
    %6317 = vmatpush1.bf16.msra.mxu0 %v5189
    %6318 = vmatprep.subr.bf16.mxu0 %v5183
    %6319 = vmatpush1.bf16.msra.mxu0 %v5182
    %6320 = vmatprep.subr.bf16.mxu0 %v5176
    %6321 = vmatpush1.bf16.msra.mxu0 %v5175
    %6322 = vmatprep.subr.bf16.mxu0 %v5169
    %6323 = vmatpush1.bf16.msra.mxu0 %v5168
    %6324 = vmatprep.subr.bf16.mxu0 %v5162
    %6325 = vmatpush1.bf16.msra.mxu0 %v5161
    %6326 = vmatprep.subr.bf16.mxu0 %v5267
    %6327 = vmatpush2.bf16.msra.mxu0 %v5266
    %6328 = vmatprep.subr.bf16.mxu0 %v5260
    %6329 = vmatpush2.bf16.msra.mxu0 %v5259
    %6330 = vmatprep.subr.bf16.mxu0 %v5253
    %6331 = vmatpush2.bf16.msra.mxu0 %v5252
    %6332 = vmatprep.subr.bf16.mxu0 %v5246
    %6333 = vmatpush2.bf16.msra.mxu0 %v5245
    %6334 = vmatprep.subr.bf16.mxu0 %v5239
    %6335 = vmatpush2.bf16.msra.mxu0 %v5238
    %6336 = vmatprep.subr.bf16.mxu0 %v5232
    %6337 = vmatpush2.bf16.msra.mxu0 %v5231
    %6338 = vmatprep.subr.bf16.mxu0 %v5225
    %6339 = vmatpush2.bf16.msra.mxu0 %v5224
    %6340 = vmatprep.subr.bf16.mxu0 %v5218
    %6341 = vmatpush2.bf16.msra.mxu0 %v5217
    %6342 = vmatprep.mubr.bf16.mxu0 %v3083
    %6343 = vmatmul.mubr.bf16.gmra.mxu0 %v3082
    %v6344 = vpop.f32.mrf.mxu0
    %v6345 = vadd.f32 %v6304, %v6344
    %v6346 = vpop.f32.mrf.mxu0
    %v6347 = vadd.f32 %v6306, %v6346
    %v6348 = vpop.f32.mrf.mxu0
    %v6349 = vpop.f32.mrf.mxu0
    %6350 = vdwg.mxu0
    %6351 = vmatprep.subr.bf16.mxu0 %v5323
    %6352 = vmatpush1.bf16.msra.mxu0 %v5322
    %6353 = vmatprep.subr.bf16.mxu0 %v5316
    %6354 = vmatpush1.bf16.msra.mxu0 %v5315
    %6355 = vmatprep.subr.bf16.mxu0 %v5309
    %6356 = vmatpush1.bf16.msra.mxu0 %v5308
    %6357 = vmatprep.subr.bf16.mxu0 %v5302
    %6358 = vmatpush1.bf16.msra.mxu0 %v5301
    %6359 = vmatprep.subr.bf16.mxu0 %v5295
    %6360 = vmatpush1.bf16.msra.mxu0 %v5294
    %6361 = vmatprep.subr.bf16.mxu0 %v5288
    %6362 = vmatpush1.bf16.msra.mxu0 %v5287
    %6363 = vmatprep.subr.bf16.mxu0 %v5281
    %6364 = vmatpush1.bf16.msra.mxu0 %v5280
    %6365 = vmatprep.subr.bf16.mxu0 %v5274
    %6366 = vmatpush1.bf16.msra.mxu0 %v5273
    %6367 = vmatprep.subr.bf16.mxu0 %v5379
    %6368 = vmatpush2.bf16.msra.mxu0 %v5378
    %6369 = vmatprep.subr.bf16.mxu0 %v5372
    %6370 = vmatpush2.bf16.msra.mxu0 %v5371
    %6371 = vmatprep.subr.bf16.mxu0 %v5365
    %6372 = vmatpush2.bf16.msra.mxu0 %v5364
    %6373 = vmatprep.subr.bf16.mxu0 %v5358
    %6374 = vmatpush2.bf16.msra.mxu0 %v5357
    %6375 = vmatprep.subr.bf16.mxu0 %v5351
    %6376 = vmatpush2.bf16.msra.mxu0 %v5350
    %6377 = vmatprep.subr.bf16.mxu0 %v5344
    %6378 = vmatpush2.bf16.msra.mxu0 %v5343
    %6379 = vmatprep.subr.bf16.mxu0 %v5337
    %6380 = vmatpush2.bf16.msra.mxu0 %v5336
    %6381 = vmatprep.subr.bf16.mxu0 %v5330
    %6382 = vmatpush2.bf16.msra.mxu0 %v5329
    %6383 = vmatprep.mubr.bf16.mxu0 %v3085
    %6384 = vmatmul.mubr.bf16.gmra.mxu0 %v3084
    %v6385 = vpop.f32.mrf.mxu0
    %v6386 = vadd.f32 %v6345, %v6385
    %v6387 = vpop.f32.mrf.mxu0
    %v6388 = vadd.f32 %v6347, %v6387
    %v6389 = vpop.f32.mrf.mxu0
    %v6390 = vpop.f32.mrf.mxu0
    %6391 = vdwg.mxu0
    %6392 = vmatprep.subr.bf16.mxu0 %v5435
    %6393 = vmatpush1.bf16.msra.mxu0 %v5434
    %6394 = vmatprep.subr.bf16.mxu0 %v5428
    %6395 = vmatpush1.bf16.msra.mxu0 %v5427
    %6396 = vmatprep.subr.bf16.mxu0 %v5421
    %6397 = vmatpush1.bf16.msra.mxu0 %v5420
    %6398 = vmatprep.subr.bf16.mxu0 %v5414
    %6399 = vmatpush1.bf16.msra.mxu0 %v5413
    %6400 = vmatprep.subr.bf16.mxu0 %v5407
    %6401 = vmatpush1.bf16.msra.mxu0 %v5406
    %6402 = vmatprep.subr.bf16.mxu0 %v5400
    %6403 = vmatpush1.bf16.msra.mxu0 %v5399
    %6404 = vmatprep.subr.bf16.mxu0 %v5393
    %6405 = vmatpush1.bf16.msra.mxu0 %v5392
    %6406 = vmatprep.subr.bf16.mxu0 %v5386
    %6407 = vmatpush1.bf16.msra.mxu0 %v5385
    %6408 = vmatprep.subr.bf16.mxu0 %v5491
    %6409 = vmatpush2.bf16.msra.mxu0 %v5490
    %6410 = vmatprep.subr.bf16.mxu0 %v5484
    %6411 = vmatpush2.bf16.msra.mxu0 %v5483
    %6412 = vmatprep.subr.bf16.mxu0 %v5477
    %6413 = vmatpush2.bf16.msra.mxu0 %v5476
    %6414 = vmatprep.subr.bf16.mxu0 %v5470
    %6415 = vmatpush2.bf16.msra.mxu0 %v5469
    %6416 = vmatprep.subr.bf16.mxu0 %v5463
    %6417 = vmatpush2.bf16.msra.mxu0 %v5462
    %6418 = vmatprep.subr.bf16.mxu0 %v5456
    %6419 = vmatpush2.bf16.msra.mxu0 %v5455
    %6420 = vmatprep.subr.bf16.mxu0 %v5449
    %6421 = vmatpush2.bf16.msra.mxu0 %v5448
    %6422 = vmatprep.subr.bf16.mxu0 %v5442
    %6423 = vmatpush2.bf16.msra.mxu0 %v5441
    %6424 = vmatprep.mubr.bf16.mxu0 %v3087
    %6425 = vmatmul.mubr.bf16.gmra.mxu0 %v3086
    %v6426 = vpop.f32.mrf.mxu0
    %v6427 = vadd.f32 %v6386, %v6426
    %v6428 = vpop.f32.mrf.mxu0
    %v6429 = vadd.f32 %v6388, %v6428
    %v6430 = vpop.f32.mrf.mxu0
    %v6431 = vpop.f32.mrf.mxu0
    %6432 = vdwg.mxu0
    %6433 = vmatprep.subr.bf16.mxu0 0
    %6434 = vmatpush1.bf16.msra.mxu0 %v5100
    %6435 = vmatprep.subr.bf16.mxu0 0
    %6436 = vmatpush1.bf16.msra.mxu0 %v5093
    %6437 = vmatprep.subr.bf16.mxu0 0
    %6438 = vmatpush1.bf16.msra.mxu0 %v5086
    %6439 = vmatprep.subr.bf16.mxu0 0
    %6440 = vmatpush1.bf16.msra.mxu0 %v5079
    %6441 = vmatprep.subr.bf16.mxu0 0
    %6442 = vmatpush1.bf16.msra.mxu0 %v5072
    %6443 = vmatprep.subr.bf16.mxu0 0
    %6444 = vmatpush1.bf16.msra.mxu0 %v5065
    %6445 = vmatprep.subr.bf16.mxu0 0
    %6446 = vmatpush1.bf16.msra.mxu0 %v5058
    %6447 = vmatprep.subr.bf16.mxu0 0
    %6448 = vmatpush1.bf16.msra.mxu0 %v5051
    %6449 = vmatprep.subr.bf16.mxu0 0
    %6450 = vmatpush2.bf16.msra.mxu0 %v5156
    %6451 = vmatprep.subr.bf16.mxu0 0
    %6452 = vmatpush2.bf16.msra.mxu0 %v5149
    %6453 = vmatprep.subr.bf16.mxu0 0
    %6454 = vmatpush2.bf16.msra.mxu0 %v5142
    %6455 = vmatprep.subr.bf16.mxu0 0
    %6456 = vmatpush2.bf16.msra.mxu0 %v5135
    %6457 = vmatprep.subr.bf16.mxu0 0
    %6458 = vmatpush2.bf16.msra.mxu0 %v5128
    %6459 = vmatprep.subr.bf16.mxu0 0
    %6460 = vmatpush2.bf16.msra.mxu0 %v5121
    %6461 = vmatprep.subr.bf16.mxu0 0
    %6462 = vmatpush2.bf16.msra.mxu0 %v5114
    %6463 = vmatprep.subr.bf16.mxu0 0
    %6464 = vmatpush2.bf16.msra.mxu0 %v5107
    %6465 = vmatprep.mubr.bf16.mxu0 %v3081
    %6466 = vmatmul.mubr.bf16.gmra.mxu0 %v3080
    %v6467 = vpop.f32.mrf.mxu0
    %v6468 = vadd.f32 %v3629, %v6467
    %v6469 = vpop.f32.mrf.mxu0
    %v6470 = vpop.f32.mrf.mxu0
    %v6471 = vpop.f32.mrf.mxu0
    %6472 = vdwg.mxu0
    %6473 = vmatprep.subr.bf16.mxu0 0
    %6474 = vmatpush1.bf16.msra.mxu0 %v5212
    %6475 = vmatprep.subr.bf16.mxu0 0
    %6476 = vmatpush1.bf16.msra.mxu0 %v5205
    %6477 = vmatprep.subr.bf16.mxu0 0
    %6478 = vmatpush1.bf16.msra.mxu0 %v5198
    %6479 = vmatprep.subr.bf16.mxu0 0
    %6480 = vmatpush1.bf16.msra.mxu0 %v5191
    %6481 = vmatprep.subr.bf16.mxu0 0
    %6482 = vmatpush1.bf16.msra.mxu0 %v5184
    %6483 = vmatprep.subr.bf16.mxu0 0
    %6484 = vmatpush1.bf16.msra.mxu0 %v5177
    %6485 = vmatprep.subr.bf16.mxu0 0
    %6486 = vmatpush1.bf16.msra.mxu0 %v5170
    %6487 = vmatprep.subr.bf16.mxu0 0
    %6488 = vmatpush1.bf16.msra.mxu0 %v5163
    %6489 = vmatprep.subr.bf16.mxu0 0
    %6490 = vmatpush2.bf16.msra.mxu0 %v5268
    %6491 = vmatprep.subr.bf16.mxu0 0
    %6492 = vmatpush2.bf16.msra.mxu0 %v5261
    %6493 = vmatprep.subr.bf16.mxu0 0
    %6494 = vmatpush2.bf16.msra.mxu0 %v5254
    %6495 = vmatprep.subr.bf16.mxu0 0
    %6496 = vmatpush2.bf16.msra.mxu0 %v5247
    %6497 = vmatprep.subr.bf16.mxu0 0
    %6498 = vmatpush2.bf16.msra.mxu0 %v5240
    %6499 = vmatprep.subr.bf16.mxu0 0
    %6500 = vmatpush2.bf16.msra.mxu0 %v5233
    %6501 = vmatprep.subr.bf16.mxu0 0
    %6502 = vmatpush2.bf16.msra.mxu0 %v5226
    %6503 = vmatprep.subr.bf16.mxu0 0
    %6504 = vmatpush2.bf16.msra.mxu0 %v5219
    %6505 = vmatprep.mubr.bf16.mxu0 %v3083
    %6506 = vmatmul.mubr.bf16.gmra.mxu0 %v3082
    %v6507 = vpop.f32.mrf.mxu0
    %v6508 = vadd.f32 %v6468, %v6507
    %v6509 = vpop.f32.mrf.mxu0
    %v6510 = vpop.f32.mrf.mxu0
    %v6511 = vpop.f32.mrf.mxu0
    %6512 = vdwg.mxu0
    %6513 = vmatprep.subr.bf16.mxu0 0
    %6514 = vmatpush1.bf16.msra.mxu0 %v5324
    %6515 = vmatprep.subr.bf16.mxu0 0
    %6516 = vmatpush1.bf16.msra.mxu0 %v5317
    %6517 = vmatprep.subr.bf16.mxu0 0
    %6518 = vmatpush1.bf16.msra.mxu0 %v5310
    %6519 = vmatprep.subr.bf16.mxu0 0
    %6520 = vmatpush1.bf16.msra.mxu0 %v5303
    %6521 = vmatprep.subr.bf16.mxu0 0
    %6522 = vmatpush1.bf16.msra.mxu0 %v5296
    %6523 = vmatprep.subr.bf16.mxu0 0
    %6524 = vmatpush1.bf16.msra.mxu0 %v5289
    %6525 = vmatprep.subr.bf16.mxu0 0
    %6526 = vmatpush1.bf16.msra.mxu0 %v5282
    %6527 = vmatprep.subr.bf16.mxu0 0
    %6528 = vmatpush1.bf16.msra.mxu0 %v5275
    %6529 = vmatprep.subr.bf16.mxu0 0
    %6530 = vmatpush2.bf16.msra.mxu0 %v5380
    %6531 = vmatprep.subr.bf16.mxu0 0
    %6532 = vmatpush2.bf16.msra.mxu0 %v5373
    %6533 = vmatprep.subr.bf16.mxu0 0
    %6534 = vmatpush2.bf16.msra.mxu0 %v5366
    %6535 = vmatprep.subr.bf16.mxu0 0
    %6536 = vmatpush2.bf16.msra.mxu0 %v5359
    %6537 = vmatprep.subr.bf16.mxu0 0
    %6538 = vmatpush2.bf16.msra.mxu0 %v5352
    %6539 = vmatprep.subr.bf16.mxu0 0
    %6540 = vmatpush2.bf16.msra.mxu0 %v5345
    %6541 = vmatprep.subr.bf16.mxu0 0
    %6542 = vmatpush2.bf16.msra.mxu0 %v5338
    %6543 = vmatprep.subr.bf16.mxu0 0
    %6544 = vmatpush2.bf16.msra.mxu0 %v5331
    %6545 = vmatprep.mubr.bf16.mxu0 %v3085
    %6546 = vmatmul.mubr.bf16.gmra.mxu0 %v3084
    %v6547 = vpop.f32.mrf.mxu0
    %v6548 = vadd.f32 %v6508, %v6547
    %v6549 = vpop.f32.mrf.mxu0
    %v6550 = vpop.f32.mrf.mxu0
    %v6551 = vpop.f32.mrf.mxu0
    %6552 = vdwg.mxu0
    %6553 = vmatprep.subr.bf16.mxu0 0
    %6554 = vmatpush1.bf16.msra.mxu0 %v5436
    %6555 = vmatprep.subr.bf16.mxu0 0
    %6556 = vmatpush1.bf16.msra.mxu0 %v5429
    %6557 = vmatprep.subr.bf16.mxu0 0
    %6558 = vmatpush1.bf16.msra.mxu0 %v5422
    %6559 = vmatprep.subr.bf16.mxu0 0
    %6560 = vmatpush1.bf16.msra.mxu0 %v5415
    %6561 = vmatprep.subr.bf16.mxu0 0
    %6562 = vmatpush1.bf16.msra.mxu0 %v5408
    %6563 = vmatprep.subr.bf16.mxu0 0
    %6564 = vmatpush1.bf16.msra.mxu0 %v5401
    %6565 = vmatprep.subr.bf16.mxu0 0
    %6566 = vmatpush1.bf16.msra.mxu0 %v5394
    %6567 = vmatprep.subr.bf16.mxu0 0
    %6568 = vmatpush1.bf16.msra.mxu0 %v5387
    %6569 = vmatprep.subr.bf16.mxu0 0
    %6570 = vmatpush2.bf16.msra.mxu0 %v5492
    %6571 = vmatprep.subr.bf16.mxu0 0
    %6572 = vmatpush2.bf16.msra.mxu0 %v5485
    %6573 = vmatprep.subr.bf16.mxu0 0
    %6574 = vmatpush2.bf16.msra.mxu0 %v5478
    %6575 = vmatprep.subr.bf16.mxu0 0
    %6576 = vmatpush2.bf16.msra.mxu0 %v5471
    %6577 = vmatprep.subr.bf16.mxu0 0
    %6578 = vmatpush2.bf16.msra.mxu0 %v5464
    %6579 = vmatprep.subr.bf16.mxu0 0
    %6580 = vmatpush2.bf16.msra.mxu0 %v5457
    %6581 = vmatprep.subr.bf16.mxu0 0
    %6582 = vmatpush2.bf16.msra.mxu0 %v5450
    %6583 = vmatprep.subr.bf16.mxu0 0
    %6584 = vmatpush2.bf16.msra.mxu0 %v5443
    %6585 = vmatprep.mubr.bf16.mxu0 %v3087
    %6586 = vmatmul.mubr.bf16.gmra.mxu0 %v3086
    %v6587 = vpop.f32.mrf.mxu0
    %v6588 = vadd.f32 %v6548, %v6587
    %v6589 = vpop.f32.mrf.mxu0
    %v6590 = vpop.f32.mrf.mxu0
    %v6591 = vpop.f32.mrf.mxu0
    %6592 = vdwg.mxu0
    %v6593 = vsub.f32 0.0, %v6099
    %v6594 = vsub.f32 0.0, %v6101
    %v6595 = vsub.f32 0.0, %v6263
    %v6596 = vsub.f32 0.0, %v6265
    %v6597 = vsub.f32 0.0, %v6427
    %v6598 = vsub.f32 0.0, %v6429
    %v6599 = vsub.f32 0.0, %v6588
    %v6600 = vmul.f32 %v6593, 1.442695
    %v6601 = vpow.pop %v6600
    %v6602 = vmul.f32 %v6594, 1.442695
    %v6603 = vpow.pop %v6602
    %v6604 = vmul.f32 %v6595, 1.442695
    %v6605 = vpow.pop %v6604
    %v6606 = vmul.f32 %v6596, 1.442695
    %v6607 = vpow.pop %v6606
    %v6608 = vmul.f32 %v6597, 1.442695
    %v6609 = vpow.pop %v6608
    %v6610 = vmul.f32 %v6598, 1.442695
    %v6611 = vpow.pop %v6610
    %v6612 = vmul.f32 %v6599, 1.442695
    %v6613 = vpow.pop %v6612
    %v6614 = vadd.f32 %v6601, 1.0
    %v6615 = vadd.f32 %v6603, 1.0
    %v6616 = vadd.f32 %v6605, 1.0
    %v6617 = vadd.f32 %v6607, 1.0
    %v6618 = vadd.f32 %v6609, 1.0
    %v6619 = vadd.f32 %v6611, 1.0
    %v6620 = vadd.f32 %v6613, 1.0
    %v6621 = vrcp.pop %v6614
    %v6622 = vrcp.pop %v6615
    %v6623 = vrcp.pop %v6616
    %v6624 = vrcp.pop %v6617
    %v6625 = vrcp.pop %v6618
    %v6626 = vrcp.pop %v6619
    %v6627 = vrcp.pop %v6620
    %6628 = vst [vmem:[#allocation2] sm:$0xff] %v6621
    %6629 = vst [vmem:[#allocation2 + $0x8] sm:$0xff] %v6622
    %6630 = vst [vmem:[#allocation2 + $0x10] sm:$0xff] %v6623
    %6631 = vst [vmem:[#allocation2 + $0x18] sm:$0xff] %v6624
    %6632 = vst [vmem:[#allocation2 + $0x20] sm:$0xff] %v6625
    %6633 = vst [vmem:[#allocation2 + $0x28] sm:$0xff] %v6626
    %vm6634 = vcmask 130048
    %6635 = vst.msk [vmem:[#allocation2 + $0x30] sm:$0xff] %vm6634, %v6627
    // Predicated region
    $region62: #{generator_forward_pallas.1} parent=1 // pred_check
      _
    $region63: #{generator_forward_pallas.1} parent=1 // pred_check_branch
      %6637 = sbr.rel (0) target = $region65
    $region64: #{generator_forward_pallas.1} parent=1 // pred_region
      %s6639 = ssub.s32 896, 896
      %6640 = vsyncadd [#allocation3], %s6639
      %s6642 = sshll.u32 [#allocation2], 4
      %s6643 = int_to_ptr.vmem [resolvable:$true] %s6642
      %6645 = dma.vmem_to_hbm [thread:$0]  %s6643, 896, %s15, [#allocation3]
    $region65: #{generator_forward_pallas.1} parent=1 // pred_fallthru
      _
    // Predicated region
    $region66: #{generator_forward_pallas.1} parent=1 // pred_check
      _
    $region67: #{generator_forward_pallas.1} parent=1 // pred_check_branch
      %6647 = sbr.rel (0) target = $region69
    $region68: #{generator_forward_pallas.1} parent=1 // pred_region
      %6648 = dma.done [#allocation3], 896
    $region69: #{generator_forward_pallas.1} parent=1 // pred_fallthru
      _
    %6649 = vsyncpa [#allocation3], 1

</llo_original>
